<compile_context>
chip_gen: v7x
topology: tpu7x:2x2x1
jax: 0.10.0
libtpu: 0.0.40
codegen_flags: <defaults>
</compile_context>

<pallas_src>
import functools

import jax
import jax.numpy as jnp
import numpy as np
from jax.experimental import pallas as pl
from jax.experimental.pallas import tpu as pltpu

BN_EPS = 1e-5


# ---------------------------------------------------------------------------
# Fused Pallas kernel: conv3x3+BN+ReLU -> conv3x3+BN+ReLU, all in VMEM
# ---------------------------------------------------------------------------
def _conv_block_kernel(x_ref, m_ref, w1_ref, b1_ref, w2_ref, b2_ref, o_ref, *, W):
    # x_ref : (Cin, N)          activations, N = B*H*W on the lane (minor) axis
    # m_ref : (9, N)  f32       1.0 where the tap's source pixel is in-image, else 0.0
    # w*_ref: (9, Cout, C)      per-tap weight matrices, BN scale already folded in
    # b*_ref: (Cout, 1)         folded BN shift (conv bias + running stats + beta)
    # o_ref : (Cout, N)
    N = x_ref.shape[-1]
    masks = m_ref[...]                                            # (9, N)
    shifts = [(dy - 1) * W + (dx - 1) for dy in range(3) for dx in range(3)]

    def conv3x3_bn_relu(a, w_ref, b_ref):
        # a: (C, N) f32 -> (Cout, N) f32
        w = w_ref[...]                                            # (9, Cout, C)
        # Center tap (dy = dx = 1): no shift, mask is all ones.
        acc = jnp.dot(w[4], a, preferred_element_type=jnp.float32)
        for k, s in enumerate(shifts):
            if k == 4:
                continue
            # tap[:, l] = a[:, l + s] with zeros outside the image: one XLU lane
            # rotation + boundary mask (mask also kills cross-image / wrap lanes).
            tap = pltpu.roll(a, shift=(-s) % N, axis=1) * masks[k:k + 1, :]
            acc = acc + jnp.dot(w[k], tap, preferred_element_type=jnp.float32)
        return jnp.maximum(acc + b_ref[...], 0.0)                 # folded BN shift + ReLU

    h = conv3x3_bn_relu(x_ref[...].astype(jnp.float32), w1_ref, b1_ref)
    out = conv3x3_bn_relu(h, w2_ref, b2_ref)
    o_ref[...] = out.astype(o_ref.dtype)


# ---------------------------------------------------------------------------
# Wrapper: parameter prep (BN fold into weights, per-tap layout) + pallas_call
# ---------------------------------------------------------------------------
def _make_tap_masks(B, H, W):
    # (9, B*H*W) f32: 1.0 where tap (dy, dx)'s source pixel lies inside the image.
    n = np.arange(H * W)
    y, x = n // W, n % W
    rows = []
    for dy in range(3):
        for dx in range(3):
            m = ((y + dy - 1 >= 0) & (y + dy - 1 < H) &
                 (x + dx - 1 >= 0) & (x + dx - 1 < W))
            rows.append(np.tile(m, B))
    return jnp.asarray(np.stack(rows).astype(np.float32))


def _prep_conv(p):
    # OIHW weights -> (9, Cout, Cin) per-tap matrices with BN scale folded in,
    # plus the folded BN/bias shift (Cout, 1).
    cout, cin = p["w"].shape[:2]
    scale = p["gamma"] / jnp.sqrt(p["var"] + BN_EPS)              # (Cout,)
    shift = (p["b"] - p["mean"]) * scale + p["beta"]              # (Cout,)
    w = p["w"] * scale[:, None, None, None]                       # fold BN scale
    w_taps = jnp.transpose(w, (2, 3, 0, 1)).reshape(9, cout, cin)  # k = dy*3 + dx
    return w_taps, shift.reshape(cout, 1)


@jax.jit
def conv_block_forward(x_nchw, params):
    B, Cin, H, W = x_nchw.shape
    Cout = params["conv1"]["w"].shape[0]
    N = B * H * W                            # batch folded into the lane axis

    # NCHW -> (Cin, B*H*W): channel-major, spatial+batch lane-dense.
    x_flat = jnp.transpose(x_nchw, (1, 0, 2, 3)).reshape(Cin, N)
    masks = _make_tap_masks(B, H, W)
    w1, b1 = _prep_conv(params["conv1"])
    w2, b2 = _prep_conv(params["conv2"])

    kernel = functools.partial(_conv_block_kernel, W=W)
    out_flat = pl.pallas_call(
        kernel,
        out_shape=jax.ShapeDtypeStruct((Cout, N), x_nchw.dtype),
        grid=(1,),                           # whole block fused in one step (tiny payload)
        in_specs=[
            pl.BlockSpec((Cin, N), lambda i: (0, 0)),
            pl.BlockSpec((9, N), lambda i: (0, 0)),
            pl.BlockSpec((9, Cout, Cin), lambda i: (0, 0, 0)),
            pl.BlockSpec((Cout, 1), lambda i: (0, 0)),
            pl.BlockSpec((9, Cout, Cout), lambda i: (0, 0, 0)),
            pl.BlockSpec((Cout, 1), lambda i: (0, 0)),
        ],
        out_specs=pl.BlockSpec((Cout, N), lambda i: (0, 0)),
    )(x_flat, masks, w1, b1, w2, b2)

    return jnp.transpose(out_flat.reshape(Cout, B, H, W), (1, 0, 2, 3))


# ---------------------------------------------------------------------------
# Parameters + pure-JAX reference (mirrors the PyTorch forward in NCHW)
# ---------------------------------------------------------------------------
def init_params(key, ch_in, ch_out):
    ks = jax.random.split(key, 12)

    def conv_w(k, cout, cin):
        fan_in = cin * 9
        return jax.random.normal(k, (cout, cin, 3, 3), jnp.float32) / np.sqrt(fan_in)

    def bn(k0, k1, k2, k3, c):
        return dict(
            gamma=1.0 + 0.1 * jax.random.normal(k0, (c,), jnp.float32),
            beta=0.1 * jax.random.normal(k1, (c,), jnp.float32),
            mean=0.1 * jax.random.normal(k2, (c,), jnp.float32),
            var=0.5 + jnp.abs(jax.random.normal(k3, (c,), jnp.float32)),
        )

    return {
        "conv1": dict(w=conv_w(ks[0], ch_out, ch_in),
                      b=0.1 * jax.random.normal(ks[1], (ch_out,), jnp.float32),
                      **bn(ks[2], ks[3], ks[4], ks[5], ch_out)),
        "conv2": dict(w=conv_w(ks[6], ch_out, ch_out),
                      b=0.1 * jax.random.normal(ks[7], (ch_out,), jnp.float32),
                      **bn(ks[8], ks[9], ks[10], ks[11], ch_out)),
    }


def _ref_conv_bn_relu(x, p):
    y = jax.lax.conv_general_dilated(
        x, p["w"], (1, 1), [(1, 1), (1, 1)],
        dimension_numbers=("NCHW", "OIHW", "NCHW"),
        precision=jax.lax.Precision.HIGHEST)
    y = y + p["b"][None, :, None, None]
    inv = (p["gamma"] / jnp.sqrt(p["var"] + BN_EPS))[None, :, None, None]
    y = (y - p["mean"][None, :, None, None]) * inv + p["beta"][None, :, None, None]
    return jnp.maximum(y, 0.0)


def conv_block_reference(x, params):
    return _ref_conv_bn_relu(_ref_conv_bn_relu(x, params["conv1"]), params["conv2"])


if __name__ == "__main__":
    key = jax.random.PRNGKey(0)
    kp, kx = jax.random.split(key)

    ch_in, ch_out = 4, 8
    B, H, W = 2, 16, 16

    params = init_params(kp, ch_in, ch_out)
    x = jax.random.normal(kx, (B, ch_in, H, W), jnp.float32)

    out = jax.block_until_ready(conv_block_forward(x, params))
    assert out.shape == (B, ch_out, H, W)

    ref = conv_block_reference(x, params)
    np.testing.assert_allclose(np.asarray(out), np.asarray(ref), rtol=2e-2, atol=2e-2)

    print("KERNEL_OK")
</pallas_src>

<mosaic_0001>
module attributes {stable_mosaic.version = 11 : i64} {
  func.func @_conv_block_kernel(%arg0: i32, %arg1: memref<4x512xf32, #tpu.memory_space<vmem>>, %arg2: memref<9x512xf32, #tpu.memory_space<vmem>>, %arg3: memref<9x8x4xf32, #tpu.memory_space<vmem>>, %arg4: memref<8x1xf32, #tpu.memory_space<vmem>>, %arg5: memref<9x8x8xf32, #tpu.memory_space<vmem>>, %arg6: memref<8x1xf32, #tpu.memory_space<vmem>>, %arg7: memref<8x512xf32, #tpu.memory_space<vmem>>) attributes {dimension_semantics = [#tpu.dimension_semantics<arbitrary>], iteration_bounds = array<i64: 1>, scalar_prefetch = 0 : i64, scratch_operands = 0 : i64, tpu.core_type = #tpu.core_type<tc>, window_params = [{pipeline_mode = #tpu.pipeline_mode<synchronous>, transform_indices = @transform_0, window_bounds = array<i64: 4, 512>}, {pipeline_mode = #tpu.pipeline_mode<synchronous>, transform_indices = @transform_1, window_bounds = array<i64: 9, 512>}, {pipeline_mode = #tpu.pipeline_mode<synchronous>, transform_indices = @transform_2, window_bounds = array<i64: 9, 8, 4>}, {pipeline_mode = #tpu.pipeline_mode<synchronous>, transform_indices = @transform_3, window_bounds = array<i64: 8, 1>}, {pipeline_mode = #tpu.pipeline_mode<synchronous>, transform_indices = @transform_4, window_bounds = array<i64: 9, 8, 8>}, {pipeline_mode = #tpu.pipeline_mode<synchronous>, transform_indices = @transform_5, window_bounds = array<i64: 8, 1>}, {pipeline_mode = #tpu.pipeline_mode<synchronous>, transform_indices = @transform_6, window_bounds = array<i64: 8, 512>}]} {
    %c0 = arith.constant 0 : index
    %c0_0 = arith.constant 0 : index
    %0 = vector.load %arg2[%c0, %c0_0] : memref<9x512xf32, #tpu.memory_space<vmem>>, vector<9x512xf32>
    %c0_1 = arith.constant 0 : index
    %c0_2 = arith.constant 0 : index
    %1 = vector.load %arg1[%c0_1, %c0_2] : memref<4x512xf32, #tpu.memory_space<vmem>>, vector<4x512xf32>
    %c0_3 = arith.constant 0 : index
    %c0_4 = arith.constant 0 : index
    %c0_5 = arith.constant 0 : index
    %2 = vector.load %arg3[%c0_3, %c0_4, %c0_5] : memref<9x8x4xf32, #tpu.memory_space<vmem>>, vector<9x8x4xf32>
    %3 = vector.extract_strided_slice %2 {offsets = [4, 0, 0], sizes = [1, 8, 4], strides = [1, 1, 1]} : vector<9x8x4xf32> to vector<1x8x4xf32>
    %4 = vector.shape_cast %3 : vector<1x8x4xf32> to vector<8x4xf32>
    %cst = arith.constant dense<0.000000e+00> : vector<8x512xf32>
    %5 = tpu.matmul %4, %1, %cst {dimension_numbers = #tpu.dot_dimension_numbers<[1], [0], [0], [1], [0, 0, 1, 1], [], []>} : vector<8x4xf32>, vector<4x512xf32>, vector<8x512xf32> -> vector<8x512xf32>
    %c17_i32 = arith.constant 17 : i32
    %6 = tpu.dynamic_rotate %1 by %c17_i32 dim 1 : vector<4x512xf32>, i32 -> vector<4x512xf32>
    %7 = vector.extract_strided_slice %0 {offsets = [0, 0], sizes = [1, 512], strides = [1, 1]} : vector<9x512xf32> to vector<1x512xf32>
    %8 = vector.broadcast %7 : vector<1x512xf32> to vector<4x512xf32>
    %9 = arith.mulf %6, %8 : vector<4x512xf32>
    %10 = vector.extract_strided_slice %2 {offsets = [0, 0, 0], sizes = [1, 8, 4], strides = [1, 1, 1]} : vector<9x8x4xf32> to vector<1x8x4xf32>
    %11 = vector.shape_cast %10 : vector<1x8x4xf32> to vector<8x4xf32>
    %cst_6 = arith.constant dense<0.000000e+00> : vector<8x512xf32>
    %12 = tpu.matmul %11, %9, %cst_6 {dimension_numbers = #tpu.dot_dimension_numbers<[1], [0], [0], [1], [0, 0, 1, 1], [], []>} : vector<8x4xf32>, vector<4x512xf32>, vector<8x512xf32> -> vector<8x512xf32>
    %13 = arith.addf %5, %12 : vector<8x512xf32>
    %c16_i32 = arith.constant 16 : i32
    %14 = tpu.dynamic_rotate %1 by %c16_i32 dim 1 : vector<4x512xf32>, i32 -> vector<4x512xf32>
    %15 = vector.extract_strided_slice %0 {offsets = [1, 0], sizes = [1, 512], strides = [1, 1]} : vector<9x512xf32> to vector<1x512xf32>
    %16 = vector.broadcast %15 : vector<1x512xf32> to vector<4x512xf32>
    %17 = arith.mulf %14, %16 : vector<4x512xf32>
    %18 = vector.extract_strided_slice %2 {offsets = [1, 0, 0], sizes = [1, 8, 4], strides = [1, 1, 1]} : vector<9x8x4xf32> to vector<1x8x4xf32>
    %19 = vector.shape_cast %18 : vector<1x8x4xf32> to vector<8x4xf32>
    %cst_7 = arith.constant dense<0.000000e+00> : vector<8x512xf32>
    %20 = tpu.matmul %19, %17, %cst_7 {dimension_numbers = #tpu.dot_dimension_numbers<[1], [0], [0], [1], [0, 0, 1, 1], [], []>} : vector<8x4xf32>, vector<4x512xf32>, vector<8x512xf32> -> vector<8x512xf32>
    %21 = arith.addf %13, %20 : vector<8x512xf32>
    %c15_i32 = arith.constant 15 : i32
    %22 = tpu.dynamic_rotate %1 by %c15_i32 dim 1 : vector<4x512xf32>, i32 -> vector<4x512xf32>
    %23 = vector.extract_strided_slice %0 {offsets = [2, 0], sizes = [1, 512], strides = [1, 1]} : vector<9x512xf32> to vector<1x512xf32>
    %24 = vector.broadcast %23 : vector<1x512xf32> to vector<4x512xf32>
    %25 = arith.mulf %22, %24 : vector<4x512xf32>
    %26 = vector.extract_strided_slice %2 {offsets = [2, 0, 0], sizes = [1, 8, 4], strides = [1, 1, 1]} : vector<9x8x4xf32> to vector<1x8x4xf32>
    %27 = vector.shape_cast %26 : vector<1x8x4xf32> to vector<8x4xf32>
    %cst_8 = arith.constant dense<0.000000e+00> : vector<8x512xf32>
    %28 = tpu.matmul %27, %25, %cst_8 {dimension_numbers = #tpu.dot_dimension_numbers<[1], [0], [0], [1], [0, 0, 1, 1], [], []>} : vector<8x4xf32>, vector<4x512xf32>, vector<8x512xf32> -> vector<8x512xf32>
    %29 = arith.addf %21, %28 : vector<8x512xf32>
    %c1_i32 = arith.constant 1 : i32
    %30 = tpu.dynamic_rotate %1 by %c1_i32 dim 1 : vector<4x512xf32>, i32 -> vector<4x512xf32>
    %31 = vector.extract_strided_slice %0 {offsets = [3, 0], sizes = [1, 512], strides = [1, 1]} : vector<9x512xf32> to vector<1x512xf32>
    %32 = vector.broadcast %31 : vector<1x512xf32> to vector<4x512xf32>
    %33 = arith.mulf %30, %32 : vector<4x512xf32>
    %34 = vector.extract_strided_slice %2 {offsets = [3, 0, 0], sizes = [1, 8, 4], strides = [1, 1, 1]} : vector<9x8x4xf32> to vector<1x8x4xf32>
    %35 = vector.shape_cast %34 : vector<1x8x4xf32> to vector<8x4xf32>
    %cst_9 = arith.constant dense<0.000000e+00> : vector<8x512xf32>
    %36 = tpu.matmul %35, %33, %cst_9 {dimension_numbers = #tpu.dot_dimension_numbers<[1], [0], [0], [1], [0, 0, 1, 1], [], []>} : vector<8x4xf32>, vector<4x512xf32>, vector<8x512xf32> -> vector<8x512xf32>
    %37 = arith.addf %29, %36 : vector<8x512xf32>
    %c511_i32 = arith.constant 511 : i32
    %38 = tpu.dynamic_rotate %1 by %c511_i32 dim 1 : vector<4x512xf32>, i32 -> vector<4x512xf32>
    %39 = vector.extract_strided_slice %0 {offsets = [5, 0], sizes = [1, 512], strides = [1, 1]} : vector<9x512xf32> to vector<1x512xf32>
    %40 = vector.broadcast %39 : vector<1x512xf32> to vector<4x512xf32>
    %41 = arith.mulf %38, %40 : vector<4x512xf32>
    %42 = vector.extract_strided_slice %2 {offsets = [5, 0, 0], sizes = [1, 8, 4], strides = [1, 1, 1]} : vector<9x8x4xf32> to vector<1x8x4xf32>
    %43 = vector.shape_cast %42 : vector<1x8x4xf32> to vector<8x4xf32>
    %cst_10 = arith.constant dense<0.000000e+00> : vector<8x512xf32>
    %44 = tpu.matmul %43, %41, %cst_10 {dimension_numbers = #tpu.dot_dimension_numbers<[1], [0], [0], [1], [0, 0, 1, 1], [], []>} : vector<8x4xf32>, vector<4x512xf32>, vector<8x512xf32> -> vector<8x512xf32>
    %45 = arith.addf %37, %44 : vector<8x512xf32>
    %c497_i32 = arith.constant 497 : i32
    %46 = tpu.dynamic_rotate %1 by %c497_i32 dim 1 : vector<4x512xf32>, i32 -> vector<4x512xf32>
    %47 = vector.extract_strided_slice %0 {offsets = [6, 0], sizes = [1, 512], strides = [1, 1]} : vector<9x512xf32> to vector<1x512xf32>
    %48 = vector.broadcast %47 : vector<1x512xf32> to vector<4x512xf32>
    %49 = arith.mulf %46, %48 : vector<4x512xf32>
    %50 = vector.extract_strided_slice %2 {offsets = [6, 0, 0], sizes = [1, 8, 4], strides = [1, 1, 1]} : vector<9x8x4xf32> to vector<1x8x4xf32>
    %51 = vector.shape_cast %50 : vector<1x8x4xf32> to vector<8x4xf32>
    %cst_11 = arith.constant dense<0.000000e+00> : vector<8x512xf32>
    %52 = tpu.matmul %51, %49, %cst_11 {dimension_numbers = #tpu.dot_dimension_numbers<[1], [0], [0], [1], [0, 0, 1, 1], [], []>} : vector<8x4xf32>, vector<4x512xf32>, vector<8x512xf32> -> vector<8x512xf32>
    %53 = arith.addf %45, %52 : vector<8x512xf32>
    %c496_i32 = arith.constant 496 : i32
    %54 = tpu.dynamic_rotate %1 by %c496_i32 dim 1 : vector<4x512xf32>, i32 -> vector<4x512xf32>
    %55 = vector.extract_strided_slice %0 {offsets = [7, 0], sizes = [1, 512], strides = [1, 1]} : vector<9x512xf32> to vector<1x512xf32>
    %56 = vector.broadcast %55 : vector<1x512xf32> to vector<4x512xf32>
    %57 = arith.mulf %54, %56 : vector<4x512xf32>
    %58 = vector.extract_strided_slice %2 {offsets = [7, 0, 0], sizes = [1, 8, 4], strides = [1, 1, 1]} : vector<9x8x4xf32> to vector<1x8x4xf32>
    %59 = vector.shape_cast %58 : vector<1x8x4xf32> to vector<8x4xf32>
    %cst_12 = arith.constant dense<0.000000e+00> : vector<8x512xf32>
    %60 = tpu.matmul %59, %57, %cst_12 {dimension_numbers = #tpu.dot_dimension_numbers<[1], [0], [0], [1], [0, 0, 1, 1], [], []>} : vector<8x4xf32>, vector<4x512xf32>, vector<8x512xf32> -> vector<8x512xf32>
    %61 = arith.addf %53, %60 : vector<8x512xf32>
    %c495_i32 = arith.constant 495 : i32
    %62 = tpu.dynamic_rotate %1 by %c495_i32 dim 1 : vector<4x512xf32>, i32 -> vector<4x512xf32>
    %63 = vector.extract_strided_slice %0 {offsets = [8, 0], sizes = [1, 512], strides = [1, 1]} : vector<9x512xf32> to vector<1x512xf32>
    %64 = vector.broadcast %63 : vector<1x512xf32> to vector<4x512xf32>
    %65 = arith.mulf %62, %64 : vector<4x512xf32>
    %66 = vector.extract_strided_slice %2 {offsets = [8, 0, 0], sizes = [1, 8, 4], strides = [1, 1, 1]} : vector<9x8x4xf32> to vector<1x8x4xf32>
    %67 = vector.shape_cast %66 : vector<1x8x4xf32> to vector<8x4xf32>
    %cst_13 = arith.constant dense<0.000000e+00> : vector<8x512xf32>
    %68 = tpu.matmul %67, %65, %cst_13 {dimension_numbers = #tpu.dot_dimension_numbers<[1], [0], [0], [1], [0, 0, 1, 1], [], []>} : vector<8x4xf32>, vector<4x512xf32>, vector<8x512xf32> -> vector<8x512xf32>
    %69 = arith.addf %61, %68 : vector<8x512xf32>
    %c0_14 = arith.constant 0 : index
    %c0_15 = arith.constant 0 : index
    %70 = vector.load %arg4[%c0_14, %c0_15] : memref<8x1xf32, #tpu.memory_space<vmem>>, vector<8x1xf32>
    %71 = vector.broadcast %70 : vector<8x1xf32> to vector<8x512xf32>
    %72 = arith.addf %69, %71 : vector<8x512xf32>
    %cst_16 = arith.constant 0.000000e+00 : f32
    %73 = vector.broadcast %cst_16 : f32 to vector<8x512xf32>
    %74 = arith.maximumf %72, %73 : vector<8x512xf32>
    %c0_17 = arith.constant 0 : index
    %c0_18 = arith.constant 0 : index
    %c0_19 = arith.constant 0 : index
    %75 = vector.load %arg5[%c0_17, %c0_18, %c0_19] : memref<9x8x8xf32, #tpu.memory_space<vmem>>, vector<9x8x8xf32>
    %76 = vector.extract_strided_slice %75 {offsets = [4, 0, 0], sizes = [1, 8, 8], strides = [1, 1, 1]} : vector<9x8x8xf32> to vector<1x8x8xf32>
    %77 = vector.shape_cast %76 : vector<1x8x8xf32> to vector<8x8xf32>
    %cst_20 = arith.constant dense<0.000000e+00> : vector<8x512xf32>
    %78 = tpu.matmul %77, %74, %cst_20 {dimension_numbers = #tpu.dot_dimension_numbers<[1], [0], [0], [1], [0, 0, 1, 1], [], []>} : vector<8x8xf32>, vector<8x512xf32>, vector<8x512xf32> -> vector<8x512xf32>
    %c17_i32_21 = arith.constant 17 : i32
    %79 = tpu.dynamic_rotate %74 by %c17_i32_21 dim 1 : vector<8x512xf32>, i32 -> vector<8x512xf32>
    %80 = vector.extract_strided_slice %0 {offsets = [0, 0], sizes = [1, 512], strides = [1, 1]} : vector<9x512xf32> to vector<1x512xf32>
    %81 = vector.broadcast %80 : vector<1x512xf32> to vector<8x512xf32>
    %82 = arith.mulf %79, %81 : vector<8x512xf32>
    %83 = vector.extract_strided_slice %75 {offsets = [0, 0, 0], sizes = [1, 8, 8], strides = [1, 1, 1]} : vector<9x8x8xf32> to vector<1x8x8xf32>
    %84 = vector.shape_cast %83 : vector<1x8x8xf32> to vector<8x8xf32>
    %cst_22 = arith.constant dense<0.000000e+00> : vector<8x512xf32>
    %85 = tpu.matmul %84, %82, %cst_22 {dimension_numbers = #tpu.dot_dimension_numbers<[1], [0], [0], [1], [0, 0, 1, 1], [], []>} : vector<8x8xf32>, vector<8x512xf32>, vector<8x512xf32> -> vector<8x512xf32>
    %86 = arith.addf %78, %85 : vector<8x512xf32>
    %c16_i32_23 = arith.constant 16 : i32
    %87 = tpu.dynamic_rotate %74 by %c16_i32_23 dim 1 : vector<8x512xf32>, i32 -> vector<8x512xf32>
    %88 = vector.extract_strided_slice %0 {offsets = [1, 0], sizes = [1, 512], strides = [1, 1]} : vector<9x512xf32> to vector<1x512xf32>
    %89 = vector.broadcast %88 : vector<1x512xf32> to vector<8x512xf32>
    %90 = arith.mulf %87, %89 : vector<8x512xf32>
    %91 = vector.extract_strided_slice %75 {offsets = [1, 0, 0], sizes = [1, 8, 8], strides = [1, 1, 1]} : vector<9x8x8xf32> to vector<1x8x8xf32>
    %92 = vector.shape_cast %91 : vector<1x8x8xf32> to vector<8x8xf32>
    %cst_24 = arith.constant dense<0.000000e+00> : vector<8x512xf32>
    %93 = tpu.matmul %92, %90, %cst_24 {dimension_numbers = #tpu.dot_dimension_numbers<[1], [0], [0], [1], [0, 0, 1, 1], [], []>} : vector<8x8xf32>, vector<8x512xf32>, vector<8x512xf32> -> vector<8x512xf32>
    %94 = arith.addf %86, %93 : vector<8x512xf32>
    %c15_i32_25 = arith.constant 15 : i32
    %95 = tpu.dynamic_rotate %74 by %c15_i32_25 dim 1 : vector<8x512xf32>, i32 -> vector<8x512xf32>
    %96 = vector.extract_strided_slice %0 {offsets = [2, 0], sizes = [1, 512], strides = [1, 1]} : vector<9x512xf32> to vector<1x512xf32>
    %97 = vector.broadcast %96 : vector<1x512xf32> to vector<8x512xf32>
    %98 = arith.mulf %95, %97 : vector<8x512xf32>
    %99 = vector.extract_strided_slice %75 {offsets = [2, 0, 0], sizes = [1, 8, 8], strides = [1, 1, 1]} : vector<9x8x8xf32> to vector<1x8x8xf32>
    %100 = vector.shape_cast %99 : vector<1x8x8xf32> to vector<8x8xf32>
    %cst_26 = arith.constant dense<0.000000e+00> : vector<8x512xf32>
    %101 = tpu.matmul %100, %98, %cst_26 {dimension_numbers = #tpu.dot_dimension_numbers<[1], [0], [0], [1], [0, 0, 1, 1], [], []>} : vector<8x8xf32>, vector<8x512xf32>, vector<8x512xf32> -> vector<8x512xf32>
    %102 = arith.addf %94, %101 : vector<8x512xf32>
    %c1_i32_27 = arith.constant 1 : i32
    %103 = tpu.dynamic_rotate %74 by %c1_i32_27 dim 1 : vector<8x512xf32>, i32 -> vector<8x512xf32>
    %104 = vector.extract_strided_slice %0 {offsets = [3, 0], sizes = [1, 512], strides = [1, 1]} : vector<9x512xf32> to vector<1x512xf32>
    %105 = vector.broadcast %104 : vector<1x512xf32> to vector<8x512xf32>
    %106 = arith.mulf %103, %105 : vector<8x512xf32>
    %107 = vector.extract_strided_slice %75 {offsets = [3, 0, 0], sizes = [1, 8, 8], strides = [1, 1, 1]} : vector<9x8x8xf32> to vector<1x8x8xf32>
    %108 = vector.shape_cast %107 : vector<1x8x8xf32> to vector<8x8xf32>
    %cst_28 = arith.constant dense<0.000000e+00> : vector<8x512xf32>
    %109 = tpu.matmul %108, %106, %cst_28 {dimension_numbers = #tpu.dot_dimension_numbers<[1], [0], [0], [1], [0, 0, 1, 1], [], []>} : vector<8x8xf32>, vector<8x512xf32>, vector<8x512xf32> -> vector<8x512xf32>
    %110 = arith.addf %102, %109 : vector<8x512xf32>
    %c511_i32_29 = arith.constant 511 : i32
    %111 = tpu.dynamic_rotate %74 by %c511_i32_29 dim 1 : vector<8x512xf32>, i32 -> vector<8x512xf32>
    %112 = vector.extract_strided_slice %0 {offsets = [5, 0], sizes = [1, 512], strides = [1, 1]} : vector<9x512xf32> to vector<1x512xf32>
    %113 = vector.broadcast %112 : vector<1x512xf32> to vector<8x512xf32>
    %114 = arith.mulf %111, %113 : vector<8x512xf32>
    %115 = vector.extract_strided_slice %75 {offsets = [5, 0, 0], sizes = [1, 8, 8], strides = [1, 1, 1]} : vector<9x8x8xf32> to vector<1x8x8xf32>
    %116 = vector.shape_cast %115 : vector<1x8x8xf32> to vector<8x8xf32>
    %cst_30 = arith.constant dense<0.000000e+00> : vector<8x512xf32>
    %117 = tpu.matmul %116, %114, %cst_30 {dimension_numbers = #tpu.dot_dimension_numbers<[1], [0], [0], [1], [0, 0, 1, 1], [], []>} : vector<8x8xf32>, vector<8x512xf32>, vector<8x512xf32> -> vector<8x512xf32>
    %118 = arith.addf %110, %117 : vector<8x512xf32>
    %c497_i32_31 = arith.constant 497 : i32
    %119 = tpu.dynamic_rotate %74 by %c497_i32_31 dim 1 : vector<8x512xf32>, i32 -> vector<8x512xf32>
    %120 = vector.extract_strided_slice %0 {offsets = [6, 0], sizes = [1, 512], strides = [1, 1]} : vector<9x512xf32> to vector<1x512xf32>
    %121 = vector.broadcast %120 : vector<1x512xf32> to vector<8x512xf32>
    %122 = arith.mulf %119, %121 : vector<8x512xf32>
    %123 = vector.extract_strided_slice %75 {offsets = [6, 0, 0], sizes = [1, 8, 8], strides = [1, 1, 1]} : vector<9x8x8xf32> to vector<1x8x8xf32>
    %124 = vector.shape_cast %123 : vector<1x8x8xf32> to vector<8x8xf32>
    %cst_32 = arith.constant dense<0.000000e+00> : vector<8x512xf32>
    %125 = tpu.matmul %124, %122, %cst_32 {dimension_numbers = #tpu.dot_dimension_numbers<[1], [0], [0], [1], [0, 0, 1, 1], [], []>} : vector<8x8xf32>, vector<8x512xf32>, vector<8x512xf32> -> vector<8x512xf32>
    %126 = arith.addf %118, %125 : vector<8x512xf32>
    %c496_i32_33 = arith.constant 496 : i32
    %127 = tpu.dynamic_rotate %74 by %c496_i32_33 dim 1 : vector<8x512xf32>, i32 -> vector<8x512xf32>
    %128 = vector.extract_strided_slice %0 {offsets = [7, 0], sizes = [1, 512], strides = [1, 1]} : vector<9x512xf32> to vector<1x512xf32>
    %129 = vector.broadcast %128 : vector<1x512xf32> to vector<8x512xf32>
    %130 = arith.mulf %127, %129 : vector<8x512xf32>
    %131 = vector.extract_strided_slice %75 {offsets = [7, 0, 0], sizes = [1, 8, 8], strides = [1, 1, 1]} : vector<9x8x8xf32> to vector<1x8x8xf32>
    %132 = vector.shape_cast %131 : vector<1x8x8xf32> to vector<8x8xf32>
    %cst_34 = arith.constant dense<0.000000e+00> : vector<8x512xf32>
    %133 = tpu.matmul %132, %130, %cst_34 {dimension_numbers = #tpu.dot_dimension_numbers<[1], [0], [0], [1], [0, 0, 1, 1], [], []>} : vector<8x8xf32>, vector<8x512xf32>, vector<8x512xf32> -> vector<8x512xf32>
    %134 = arith.addf %126, %133 : vector<8x512xf32>
    %c495_i32_35 = arith.constant 495 : i32
    %135 = tpu.dynamic_rotate %74 by %c495_i32_35 dim 1 : vector<8x512xf32>, i32 -> vector<8x512xf32>
    %136 = vector.extract_strided_slice %0 {offsets = [8, 0], sizes = [1, 512], strides = [1, 1]} : vector<9x512xf32> to vector<1x512xf32>
    %137 = vector.broadcast %136 : vector<1x512xf32> to vector<8x512xf32>
    %138 = arith.mulf %135, %137 : vector<8x512xf32>
    %139 = vector.extract_strided_slice %75 {offsets = [8, 0, 0], sizes = [1, 8, 8], strides = [1, 1, 1]} : vector<9x8x8xf32> to vector<1x8x8xf32>
    %140 = vector.shape_cast %139 : vector<1x8x8xf32> to vector<8x8xf32>
    %cst_36 = arith.constant dense<0.000000e+00> : vector<8x512xf32>
    %141 = tpu.matmul %140, %138, %cst_36 {dimension_numbers = #tpu.dot_dimension_numbers<[1], [0], [0], [1], [0, 0, 1, 1], [], []>} : vector<8x8xf32>, vector<8x512xf32>, vector<8x512xf32> -> vector<8x512xf32>
    %142 = arith.addf %134, %141 : vector<8x512xf32>
    %c0_37 = arith.constant 0 : index
    %c0_38 = arith.constant 0 : index
    %143 = vector.load %arg6[%c0_37, %c0_38] : memref<8x1xf32, #tpu.memory_space<vmem>>, vector<8x1xf32>
    %144 = vector.broadcast %143 : vector<8x1xf32> to vector<8x512xf32>
    %145 = arith.addf %142, %144 : vector<8x512xf32>
    %cst_39 = arith.constant 0.000000e+00 : f32
    %146 = vector.broadcast %cst_39 : f32 to vector<8x512xf32>
    %147 = arith.maximumf %145, %146 : vector<8x512xf32>
    %c0_40 = arith.constant 0 : index
    %c0_41 = arith.constant 0 : index
    %148 = vector.load %arg7[%c0_40, %c0_41] : memref<8x512xf32, #tpu.memory_space<vmem>>, vector<8x512xf32>
    tpu.vector_store %arg7[%c0_40, %c0_41], %147 {strides = array<i32>} : memref<8x512xf32, #tpu.memory_space<vmem>>, vector<8x512xf32>,
    return
  }
  func.func @transform_0(%arg0: i32) -> (i32, i32) {
    %c0_i32 = arith.constant 0 : i32
    %c0_i32_0 = arith.constant 0 : i32
    %c0_i32_1 = arith.constant 0 : i32
    return %c0_i32, %c0_i32_0 : i32, i32
  }
  func.func @transform_1(%arg0: i32) -> (i32, i32) {
    %c0_i32 = arith.constant 0 : i32
    %c0_i32_0 = arith.constant 0 : i32
    %c0_i32_1 = arith.constant 0 : i32
    return %c0_i32, %c0_i32_0 : i32, i32
  }
  func.func @transform_2(%arg0: i32) -> (i32, i32, i32) {
    %c0_i32 = arith.constant 0 : i32
    %c0_i32_0 = arith.constant 0 : i32
    %c0_i32_1 = arith.constant 0 : i32
    %c0_i32_2 = arith.constant 0 : i32
    return %c0_i32, %c0_i32_0, %c0_i32_1 : i32, i32, i32
  }
  func.func @transform_3(%arg0: i32) -> (i32, i32) {
    %c0_i32 = arith.constant 0 : i32
    %c0_i32_0 = arith.constant 0 : i32
    %c0_i32_1 = arith.constant 0 : i32
    return %c0_i32, %c0_i32_0 : i32, i32
  }
  func.func @transform_4(%arg0: i32) -> (i32, i32, i32) {
    %c0_i32 = arith.constant 0 : i32
    %c0_i32_0 = arith.constant 0 : i32
    %c0_i32_1 = arith.constant 0 : i32
    %c0_i32_2 = arith.constant 0 : i32
    return %c0_i32, %c0_i32_0, %c0_i32_1 : i32, i32, i32
  }
  func.func @transform_5(%arg0: i32) -> (i32, i32) {
    %c0_i32 = arith.constant 0 : i32
    %c0_i32_0 = arith.constant 0 : i32
    %c0_i32_1 = arith.constant 0 : i32
    return %c0_i32, %c0_i32_0 : i32, i32
  }
  func.func @transform_6(%arg0: i32) -> (i32, i32) {
    %c0_i32 = arith.constant 0 : i32
    %c0_i32_0 = arith.constant 0 : i32
    %c0_i32_1 = arith.constant 0 : i32
    return %c0_i32, %c0_i32_0 : i32, i32
  }
}

</mosaic_0001>

<llo_original>
// kernel: conv_block_forward.1
$region0: #{conv_block_forward.1}
  #allocation0 [shape = 'u32[]', space=smem, size = 0x4, offset = 0x4, fixed_abs, tag = 'smem constant byte address 0x4 - core index']
  #allocation1 [shape = 'u32[144,128]{1,0:T(1,128)}', space=vmem, size = 0x12000, scoped, tag = 'internal scratch']
  %s0 = inlined_call_operand.vmem [shape: f32[4,512], index: 0, kind: input, shape index: {}]
  %s1 = inlined_call_operand.vmem [shape: f32[9,512], index: 1, kind: input, shape index: {}]
  %s2 = inlined_call_operand.vmem [shape: f32[9,8,4], index: 2, kind: input, shape index: {}]
  %s3 = inlined_call_operand.vmem [shape: f32[8,1], index: 3, kind: input, shape index: {}]
  %s4 = inlined_call_operand.vmem [shape: f32[9,8,8], index: 4, kind: input, shape index: {}]
  %s5 = inlined_call_operand.vmem [shape: f32[8,1], index: 5, kind: input, shape index: {}]
  %s6 = inlined_call_operand.vmem [shape: f32[8,512], index: 6, kind: output, shape index: {}]
  %s7 = sld [smem:[#allocation0]]
  $region34: #{conv_block_forward.1} parent=0
    _
  %s9 = ssub.s32 1, %s7
  %s10 = scalar_select 0, %s9, %s7
  // Predicated region
  $region2: #{conv_block_forward.1} parent=0 // pred_check
    _
  $region3: #{conv_block_forward.1} parent=0 // pred_check_branch
    %12 = sbr.rel (0) target = $region5
  $region4: #{conv_block_forward.1} parent=0 // pred_region
    _
  $region5: #{conv_block_forward.1} parent=0 // pred_fallthru
    _
  // Predicated region
  $region6: #{conv_block_forward.1} parent=0 // pred_check
    _
  $region7: #{conv_block_forward.1} parent=0 // pred_check_branch
    %14 = sbr.rel (0) target = $region9
  $region8: #{conv_block_forward.1} parent=0 // pred_region
    _
  $region9: #{conv_block_forward.1} parent=0 // pred_fallthru
    _
  // Predicated region
  $region10: #{conv_block_forward.1} parent=0 // pred_check
    _
  $region11: #{conv_block_forward.1} parent=0 // pred_check_branch
    %16 = sbr.rel (0) target = $region13
  $region12: #{conv_block_forward.1} parent=0 // pred_region
    _
  $region13: #{conv_block_forward.1} parent=0 // pred_fallthru
    _
  // Predicated region
  $region14: #{conv_block_forward.1} parent=0 // pred_check
    _
  $region15: #{conv_block_forward.1} parent=0 // pred_check_branch
    %18 = sbr.rel (0) target = $region17
  $region16: #{conv_block_forward.1} parent=0 // pred_region
    _
  $region17: #{conv_block_forward.1} parent=0 // pred_fallthru
    _
  // Predicated region
  $region18: #{conv_block_forward.1} parent=0 // pred_check
    _
  $region19: #{conv_block_forward.1} parent=0 // pred_check_branch
    %20 = sbr.rel (0) target = $region21
  $region20: #{conv_block_forward.1} parent=0 // pred_region
    _
  $region21: #{conv_block_forward.1} parent=0 // pred_fallthru
    _
  // Predicated region
  $region22: #{conv_block_forward.1} parent=0 // pred_check
    _
  $region23: #{conv_block_forward.1} parent=0 // pred_check_branch
    %22 = sbr.rel (0) target = $region25
  $region24: #{conv_block_forward.1} parent=0 // pred_region
    _
  $region25: #{conv_block_forward.1} parent=0 // pred_fallthru
    _
  %v23 = vld [vmem:[%s1] sm:$0xff]
  %v24 = vld [vmem:[%s1 + $0x8] sm:$0xff]
  %v25 = vld [vmem:[%s1 + $0x10] sm:$0xff]
  %v26 = vld [vmem:[%s1 + $0x18] sm:$0xff]
  %v27 = vld [vmem:[%s1 + $0x20] sm:$0x1]
  %v28 = vld [vmem:[%s1 + $0x28] sm:$0x1]
  %v29 = vld [vmem:[%s1 + $0x30] sm:$0x1]
  %v30 = vld [vmem:[%s1 + $0x38] sm:$0x1]
  %v31 = vld [vmem:[%s0] sm:$0xff]
  %v32 = vld [vmem:[%s0 + $0x8] sm:$0xff]
  %v33 = vld [vmem:[%s2] sm:$0xff]
  %v34 = vld [vmem:[%s2 + $0x8] sm:$0xff]
  %v35 = vld [vmem:[%s2 + $0x10] sm:$0xff]
  %v36 = vld [vmem:[%s2 + $0x18] sm:$0xff]
  %v37 = vld [vmem:[%s2 + $0x20] sm:$0xff]
  %v38 = vld [vmem:[%s2 + $0x28] sm:$0xff]
  %v39 = vld [vmem:[%s2 + $0x30] sm:$0xff]
  %v40 = vld [vmem:[%s2 + $0x38] sm:$0xff]
  %v41 = vld [vmem:[%s2 + $0x40] sm:$0xff]
  %v44 = vcombine.high %v31, %v31
  %v45 = vcombine.high %v32, %v32
  %48 = vrot.lane.b32.xlu0 %v31, 17
  %v49 = vpop.permute.xlu0 %48
  %50 = vrot.lane.b32.xlu0 %v44, 17
  %v51 = vpop.permute.xlu0 %50
  %52 = vrot.lane.b32.xlu0 %v32, 17
  %v53 = vpop.permute.xlu0 %52
  %54 = vrot.lane.b32.xlu0 %v45, 17
  %v55 = vpop.permute.xlu0 %54
  %v56 = vlaneseq
  %v57 = vand.u32 %v56, 127
  %vm58 = vcmp.lt.s32.totalorder %v57, 17
  %v59 = vsel %vm58, %v53, %v55
  %v60 = vsel %vm58, %v51, %v53
  %v61 = vsel %vm58, %v49, %v51
  %v62 = vsel %vm58, %v55, %v49
  %v63 = vlaneseq
  %v64 = vshrl.u32 %v63, 7
  %v65 = vsub.s32 0, %v64
  %v66 = vrot.slane %v23, %v65
  %v67 = vlaneseq
  %v68 = vshrl.u32 %v67, 7
  %v69 = vsub.s32 0, %v68
  %v70 = vrot.slane %v24, %v69
  %v71 = vlaneseq
  %v72 = vshrl.u32 %v71, 7
  %v73 = vsub.s32 0, %v72
  %v74 = vrot.slane %v25, %v73
  %v75 = vlaneseq
  %v76 = vshrl.u32 %v75, 7
  %v77 = vsub.s32 0, %v76
  %v78 = vrot.slane %v26, %v77
  %v79 = vmul.f32 %v62, %v66
  %v80 = vmul.f32 %v61, %v70
  %v81 = vmul.f32 %v60, %v74
  %v82 = vmul.f32 %v59, %v78
  %vm83 = vcmask 31744
  %v85 = vsel %vm83, %v33, 0
  %vm87 = vcmask 1043456
  %v89 = vsel %vm87, %v79, 0
  %v92 = vsel %vm87, %v80, 0
  %v95 = vsel %vm87, %v81, 0
  %v98 = vsel %vm87, %v82, 0
  %100 = vmatprep.subr.mxu0 %v92
  %101 = vmatpush1.msra.mxu0 %v89
  %102 = vmatprep.subr.mxu0 0.0
  %103 = vmatpush1.msra.mxu0 0.0
  %104 = vmatprep.subr.mxu0 0.0
  %105 = vmatpush1.msra.mxu0 0.0
  %106 = vmatprep.subr.mxu0 0.0
  %107 = vmatpush1.msra.mxu0 0.0
  %108 = vmatprep.subr.mxu0 0.0
  %109 = vmatpush1.msra.mxu0 0.0
  %110 = vmatprep.subr.mxu0 0.0
  %111 = vmatpush1.msra.mxu0 0.0
  %112 = vmatprep.subr.mxu0 0.0
  %113 = vmatpush1.msra.mxu0 0.0
  %114 = vmatprep.subr.mxu0 0.0
  %115 = vmatpush1.msra.mxu0 0.0
  %116 = vmatprep.subr.mxu0 0.0
  %117 = vmatpush1.msra.mxu0 0.0
  %118 = vmatprep.subr.mxu0 0.0
  %119 = vmatpush1.msra.mxu0 0.0
  %120 = vmatprep.subr.mxu0 0.0
  %121 = vmatpush1.msra.mxu0 0.0
  %122 = vmatprep.subr.mxu0 0.0
  %123 = vmatpush1.msra.mxu0 0.0
  %124 = vmatprep.subr.mxu0 0.0
  %125 = vmatpush1.msra.mxu0 0.0
  %126 = vmatprep.subr.mxu0 0.0
  %127 = vmatpush1.msra.mxu0 0.0
  %128 = vmatprep.subr.mxu0 0.0
  %129 = vmatpush1.msra.mxu0 0.0
  %130 = vmatprep.subr.mxu0 0.0
  %131 = vmatpush1.msra.mxu0 0.0
  %132 = vmatprep.subr.mxu0 0.0
  %133 = vmatpush1.msra.mxu0 0.0
  %134 = vmatprep.subr.mxu0 0.0
  %135 = vmatpush1.msra.mxu0 0.0
  %136 = vmatprep.subr.mxu0 0.0
  %137 = vmatpush1.msra.mxu0 0.0
  %138 = vmatprep.subr.mxu0 0.0
  %139 = vmatpush1.msra.mxu0 0.0
  %140 = vmatprep.subr.mxu0 0.0
  %141 = vmatpush1.msra.mxu0 0.0
  %142 = vmatprep.subr.mxu0 0.0
  %143 = vmatpush1.msra.mxu0 0.0
  %144 = vmatprep.subr.mxu0 0.0
  %145 = vmatpush1.msra.mxu0 0.0
  %146 = vmatprep.subr.mxu0 0.0
  %147 = vmatpush1.msra.mxu0 0.0
  %148 = vmatprep.subr.mxu0 0.0
  %149 = vmatpush1.msra.mxu0 0.0
  %150 = vmatprep.subr.mxu0 0.0
  %151 = vmatpush1.msra.mxu0 0.0
  %152 = vmatprep.subr.mxu0 0.0
  %153 = vmatpush1.msra.mxu0 0.0
  %154 = vmatprep.subr.mxu0 0.0
  %155 = vmatpush1.msra.mxu0 0.0
  %156 = vmatprep.subr.mxu0 0.0
  %157 = vmatpush1.msra.mxu0 0.0
  %158 = vmatprep.subr.mxu0 0.0
  %159 = vmatpush1.msra.mxu0 0.0
  %160 = vmatprep.subr.mxu0 0.0
  %161 = vmatpush1.msra.mxu0 0.0
  %162 = vmatprep.subr.mxu0 0.0
  %163 = vmatpush1.msra.mxu0 0.0
  %164 = vmatprep.mubr.f32.mxu0 0.0
  %165 = vmatmul.mubr.f32.gmra.mrb[0].mxu0 %v85
  %v166 = vpop.f32.mrb[0].mxu0
  %v167 = vadd.f32 0.0, %v166
  %v168 = vpop.f32.mrb[0].mxu0
  %v169 = vadd.f32 0.0, %v168
  %170 = vdwg.mxu0
  %171 = vmatprep.subr.mxu0 %v98
  %172 = vmatpush1.msra.mxu0 %v95
  %173 = vmatprep.subr.mxu0 0.0
  %174 = vmatpush1.msra.mxu0 0.0
  %175 = vmatprep.subr.mxu0 0.0
  %176 = vmatpush1.msra.mxu0 0.0
  %177 = vmatprep.subr.mxu0 0.0
  %178 = vmatpush1.msra.mxu0 0.0
  %179 = vmatprep.subr.mxu0 0.0
  %180 = vmatpush1.msra.mxu0 0.0
  %181 = vmatprep.subr.mxu0 0.0
  %182 = vmatpush1.msra.mxu0 0.0
  %183 = vmatprep.subr.mxu0 0.0
  %184 = vmatpush1.msra.mxu0 0.0
  %185 = vmatprep.subr.mxu0 0.0
  %186 = vmatpush1.msra.mxu0 0.0
  %187 = vmatprep.subr.mxu0 0.0
  %188 = vmatpush1.msra.mxu0 0.0
  %189 = vmatprep.subr.mxu0 0.0
  %190 = vmatpush1.msra.mxu0 0.0
  %191 = vmatprep.subr.mxu0 0.0
  %192 = vmatpush1.msra.mxu0 0.0
  %193 = vmatprep.subr.mxu0 0.0
  %194 = vmatpush1.msra.mxu0 0.0
  %195 = vmatprep.subr.mxu0 0.0
  %196 = vmatpush1.msra.mxu0 0.0
  %197 = vmatprep.subr.mxu0 0.0
  %198 = vmatpush1.msra.mxu0 0.0
  %199 = vmatprep.subr.mxu0 0.0
  %200 = vmatpush1.msra.mxu0 0.0
  %201 = vmatprep.subr.mxu0 0.0
  %202 = vmatpush1.msra.mxu0 0.0
  %203 = vmatprep.subr.mxu0 0.0
  %204 = vmatpush1.msra.mxu0 0.0
  %205 = vmatprep.subr.mxu0 0.0
  %206 = vmatpush1.msra.mxu0 0.0
  %207 = vmatprep.subr.mxu0 0.0
  %208 = vmatpush1.msra.mxu0 0.0
  %209 = vmatprep.subr.mxu0 0.0
  %210 = vmatpush1.msra.mxu0 0.0
  %211 = vmatprep.subr.mxu0 0.0
  %212 = vmatpush1.msra.mxu0 0.0
  %213 = vmatprep.subr.mxu0 0.0
  %214 = vmatpush1.msra.mxu0 0.0
  %215 = vmatprep.subr.mxu0 0.0
  %216 = vmatpush1.msra.mxu0 0.0
  %217 = vmatprep.subr.mxu0 0.0
  %218 = vmatpush1.msra.mxu0 0.0
  %219 = vmatprep.subr.mxu0 0.0
  %220 = vmatpush1.msra.mxu0 0.0
  %221 = vmatprep.subr.mxu0 0.0
  %222 = vmatpush1.msra.mxu0 0.0
  %223 = vmatprep.subr.mxu0 0.0
  %224 = vmatpush1.msra.mxu0 0.0
  %225 = vmatprep.subr.mxu0 0.0
  %226 = vmatpush1.msra.mxu0 0.0
  %227 = vmatprep.subr.mxu0 0.0
  %228 = vmatpush1.msra.mxu0 0.0
  %229 = vmatprep.subr.mxu0 0.0
  %230 = vmatpush1.msra.mxu0 0.0
  %231 = vmatprep.subr.mxu0 0.0
  %232 = vmatpush1.msra.mxu0 0.0
  %233 = vmatprep.subr.mxu0 0.0
  %234 = vmatpush1.msra.mxu0 0.0
  %235 = vmatprep.mubr.f32.mxu0 0.0
  %236 = vmatmul.mubr.f32.gmra.mrb[0].mxu0 %v85
  %v237 = vpop.f32.mrb[0].mxu0
  %v238 = vadd.f32 0.0, %v237
  %v239 = vpop.f32.mrb[0].mxu0
  %v240 = vadd.f32 0.0, %v239
  %241 = vdwg.mxu0
  %v243 = vsel %vm83, %v37, 0
  %v245 = vsel %vm87, %v31, 0
  %v247 = vsel %vm87, %v44, 0
  %v249 = vsel %vm87, %v32, 0
  %v251 = vsel %vm87, %v45, 0
  %253 = vmatprep.subr.mxu0 %v247
  %254 = vmatpush1.msra.mxu0 %v245
  %255 = vmatprep.subr.mxu0 0.0
  %256 = vmatpush1.msra.mxu0 0.0
  %257 = vmatprep.subr.mxu0 0.0
  %258 = vmatpush1.msra.mxu0 0.0
  %259 = vmatprep.subr.mxu0 0.0
  %260 = vmatpush1.msra.mxu0 0.0
  %261 = vmatprep.subr.mxu0 0.0
  %262 = vmatpush1.msra.mxu0 0.0
  %263 = vmatprep.subr.mxu0 0.0
  %264 = vmatpush1.msra.mxu0 0.0
  %265 = vmatprep.subr.mxu0 0.0
  %266 = vmatpush1.msra.mxu0 0.0
  %267 = vmatprep.subr.mxu0 0.0
  %268 = vmatpush1.msra.mxu0 0.0
  %269 = vmatprep.subr.mxu0 0.0
  %270 = vmatpush1.msra.mxu0 0.0
  %271 = vmatprep.subr.mxu0 0.0
  %272 = vmatpush1.msra.mxu0 0.0
  %273 = vmatprep.subr.mxu0 0.0
  %274 = vmatpush1.msra.mxu0 0.0
  %275 = vmatprep.subr.mxu0 0.0
  %276 = vmatpush1.msra.mxu0 0.0
  %277 = vmatprep.subr.mxu0 0.0
  %278 = vmatpush1.msra.mxu0 0.0
  %279 = vmatprep.subr.mxu0 0.0
  %280 = vmatpush1.msra.mxu0 0.0
  %281 = vmatprep.subr.mxu0 0.0
  %282 = vmatpush1.msra.mxu0 0.0
  %283 = vmatprep.subr.mxu0 0.0
  %284 = vmatpush1.msra.mxu0 0.0
  %285 = vmatprep.subr.mxu0 0.0
  %286 = vmatpush1.msra.mxu0 0.0
  %287 = vmatprep.subr.mxu0 0.0
  %288 = vmatpush1.msra.mxu0 0.0
  %289 = vmatprep.subr.mxu0 0.0
  %290 = vmatpush1.msra.mxu0 0.0
  %291 = vmatprep.subr.mxu0 0.0
  %292 = vmatpush1.msra.mxu0 0.0
  %293 = vmatprep.subr.mxu0 0.0
  %294 = vmatpush1.msra.mxu0 0.0
  %295 = vmatprep.subr.mxu0 0.0
  %296 = vmatpush1.msra.mxu0 0.0
  %297 = vmatprep.subr.mxu0 0.0
  %298 = vmatpush1.msra.mxu0 0.0
  %299 = vmatprep.subr.mxu0 0.0
  %300 = vmatpush1.msra.mxu0 0.0
  %301 = vmatprep.subr.mxu0 0.0
  %302 = vmatpush1.msra.mxu0 0.0
  %303 = vmatprep.subr.mxu0 0.0
  %304 = vmatpush1.msra.mxu0 0.0
  %305 = vmatprep.subr.mxu0 0.0
  %306 = vmatpush1.msra.mxu0 0.0
  %307 = vmatprep.subr.mxu0 0.0
  %308 = vmatpush1.msra.mxu0 0.0
  %309 = vmatprep.subr.mxu0 0.0
  %310 = vmatpush1.msra.mxu0 0.0
  %311 = vmatprep.subr.mxu0 0.0
  %312 = vmatpush1.msra.mxu0 0.0
  %313 = vmatprep.subr.mxu0 0.0
  %314 = vmatpush1.msra.mxu0 0.0
  %315 = vmatprep.subr.mxu0 0.0
  %316 = vmatpush1.msra.mxu0 0.0
  %317 = vmatprep.mubr.f32.mxu0 0.0
  %318 = vmatmul.mubr.f32.gmra.mrb[0].mxu0 %v243
  %v319 = vpop.f32.mrb[0].mxu0
  %v320 = vadd.f32 %v167, %v319
  %v321 = vpop.f32.mrb[0].mxu0
  %v322 = vadd.f32 %v169, %v321
  %323 = vdwg.mxu0
  %324 = vmatprep.subr.mxu0 %v251
  %325 = vmatpush1.msra.mxu0 %v249
  %326 = vmatprep.subr.mxu0 0.0
  %327 = vmatpush1.msra.mxu0 0.0
  %328 = vmatprep.subr.mxu0 0.0
  %329 = vmatpush1.msra.mxu0 0.0
  %330 = vmatprep.subr.mxu0 0.0
  %331 = vmatpush1.msra.mxu0 0.0
  %332 = vmatprep.subr.mxu0 0.0
  %333 = vmatpush1.msra.mxu0 0.0
  %334 = vmatprep.subr.mxu0 0.0
  %335 = vmatpush1.msra.mxu0 0.0
  %336 = vmatprep.subr.mxu0 0.0
  %337 = vmatpush1.msra.mxu0 0.0
  %338 = vmatprep.subr.mxu0 0.0
  %339 = vmatpush1.msra.mxu0 0.0
  %340 = vmatprep.subr.mxu0 0.0
  %341 = vmatpush1.msra.mxu0 0.0
  %342 = vmatprep.subr.mxu0 0.0
  %343 = vmatpush1.msra.mxu0 0.0
  %344 = vmatprep.subr.mxu0 0.0
  %345 = vmatpush1.msra.mxu0 0.0
  %346 = vmatprep.subr.mxu0 0.0
  %347 = vmatpush1.msra.mxu0 0.0
  %348 = vmatprep.subr.mxu0 0.0
  %349 = vmatpush1.msra.mxu0 0.0
  %350 = vmatprep.subr.mxu0 0.0
  %351 = vmatpush1.msra.mxu0 0.0
  %352 = vmatprep.subr.mxu0 0.0
  %353 = vmatpush1.msra.mxu0 0.0
  %354 = vmatprep.subr.mxu0 0.0
  %355 = vmatpush1.msra.mxu0 0.0
  %356 = vmatprep.subr.mxu0 0.0
  %357 = vmatpush1.msra.mxu0 0.0
  %358 = vmatprep.subr.mxu0 0.0
  %359 = vmatpush1.msra.mxu0 0.0
  %360 = vmatprep.subr.mxu0 0.0
  %361 = vmatpush1.msra.mxu0 0.0
  %362 = vmatprep.subr.mxu0 0.0
  %363 = vmatpush1.msra.mxu0 0.0
  %364 = vmatprep.subr.mxu0 0.0
  %365 = vmatpush1.msra.mxu0 0.0
  %366 = vmatprep.subr.mxu0 0.0
  %367 = vmatpush1.msra.mxu0 0.0
  %368 = vmatprep.subr.mxu0 0.0
  %369 = vmatpush1.msra.mxu0 0.0
  %370 = vmatprep.subr.mxu0 0.0
  %371 = vmatpush1.msra.mxu0 0.0
  %372 = vmatprep.subr.mxu0 0.0
  %373 = vmatpush1.msra.mxu0 0.0
  %374 = vmatprep.subr.mxu0 0.0
  %375 = vmatpush1.msra.mxu0 0.0
  %376 = vmatprep.subr.mxu0 0.0
  %377 = vmatpush1.msra.mxu0 0.0
  %378 = vmatprep.subr.mxu0 0.0
  %379 = vmatpush1.msra.mxu0 0.0
  %380 = vmatprep.subr.mxu0 0.0
  %381 = vmatpush1.msra.mxu0 0.0
  %382 = vmatprep.subr.mxu0 0.0
  %383 = vmatpush1.msra.mxu0 0.0
  %384 = vmatprep.subr.mxu0 0.0
  %385 = vmatpush1.msra.mxu0 0.0
  %386 = vmatprep.subr.mxu0 0.0
  %387 = vmatpush1.msra.mxu0 0.0
  %388 = vmatprep.mubr.f32.mxu0 0.0
  %389 = vmatmul.mubr.f32.gmra.mrb[0].mxu0 %v243
  %v390 = vpop.f32.mrb[0].mxu0
  %v391 = vadd.f32 %v238, %v390
  %v392 = vpop.f32.mrb[0].mxu0
  %v393 = vadd.f32 %v240, %v392
  %394 = vdwg.mxu0
  %395 = vrot.lane.b32.xlu0 %v31, 16
  %v396 = vpop.permute.xlu0 %395
  %397 = vrot.lane.b32.xlu0 %v44, 16
  %v398 = vpop.permute.xlu0 %397
  %399 = vrot.lane.b32.xlu0 %v32, 16
  %v400 = vpop.permute.xlu0 %399
  %401 = vrot.lane.b32.xlu0 %v45, 16
  %v402 = vpop.permute.xlu0 %401
  %vm403 = vcmp.lt.s32.totalorder %v57, 16
  %v404 = vsel %vm403, %v400, %v402
  %v405 = vsel %vm403, %v398, %v400
  %v406 = vsel %vm403, %v396, %v398
  %v407 = vsel %vm403, %v402, %v396
  %v408 = vlaneseq
  %v409 = vshrl.u32 %v408, 7
  %v410 = vsub.s32 1, %v409
  %v411 = vrot.slane %v23, %v410
  %v412 = vlaneseq
  %v413 = vshrl.u32 %v412, 7
  %v414 = vsub.s32 1, %v413
  %v415 = vrot.slane %v24, %v414
  %v416 = vlaneseq
  %v417 = vshrl.u32 %v416, 7
  %v418 = vsub.s32 1, %v417
  %v419 = vrot.slane %v25, %v418
  %v420 = vlaneseq
  %v421 = vshrl.u32 %v420, 7
  %v422 = vsub.s32 1, %v421
  %v423 = vrot.slane %v26, %v422
  %v424 = vmul.f32 %v407, %v411
  %v425 = vmul.f32 %v406, %v415
  %v426 = vmul.f32 %v405, %v419
  %v427 = vmul.f32 %v404, %v423
  %v429 = vsel %vm83, %v34, 0
  %v432 = vsel %vm87, %v424, 0
  %v435 = vsel %vm87, %v425, 0
  %v438 = vsel %vm87, %v426, 0
  %v441 = vsel %vm87, %v427, 0
  %443 = vmatprep.subr.mxu0 %v435
  %444 = vmatpush1.msra.mxu0 %v432
  %445 = vmatprep.subr.mxu0 0.0
  %446 = vmatpush1.msra.mxu0 0.0
  %447 = vmatprep.subr.mxu0 0.0
  %448 = vmatpush1.msra.mxu0 0.0
  %449 = vmatprep.subr.mxu0 0.0
  %450 = vmatpush1.msra.mxu0 0.0
  %451 = vmatprep.subr.mxu0 0.0
  %452 = vmatpush1.msra.mxu0 0.0
  %453 = vmatprep.subr.mxu0 0.0
  %454 = vmatpush1.msra.mxu0 0.0
  %455 = vmatprep.subr.mxu0 0.0
  %456 = vmatpush1.msra.mxu0 0.0
  %457 = vmatprep.subr.mxu0 0.0
  %458 = vmatpush1.msra.mxu0 0.0
  %459 = vmatprep.subr.mxu0 0.0
  %460 = vmatpush1.msra.mxu0 0.0
  %461 = vmatprep.subr.mxu0 0.0
  %462 = vmatpush1.msra.mxu0 0.0
  %463 = vmatprep.subr.mxu0 0.0
  %464 = vmatpush1.msra.mxu0 0.0
  %465 = vmatprep.subr.mxu0 0.0
  %466 = vmatpush1.msra.mxu0 0.0
  %467 = vmatprep.subr.mxu0 0.0
  %468 = vmatpush1.msra.mxu0 0.0
  %469 = vmatprep.subr.mxu0 0.0
  %470 = vmatpush1.msra.mxu0 0.0
  %471 = vmatprep.subr.mxu0 0.0
  %472 = vmatpush1.msra.mxu0 0.0
  %473 = vmatprep.subr.mxu0 0.0
  %474 = vmatpush1.msra.mxu0 0.0
  %475 = vmatprep.subr.mxu0 0.0
  %476 = vmatpush1.msra.mxu0 0.0
  %477 = vmatprep.subr.mxu0 0.0
  %478 = vmatpush1.msra.mxu0 0.0
  %479 = vmatprep.subr.mxu0 0.0
  %480 = vmatpush1.msra.mxu0 0.0
  %481 = vmatprep.subr.mxu0 0.0
  %482 = vmatpush1.msra.mxu0 0.0
  %483 = vmatprep.subr.mxu0 0.0
  %484 = vmatpush1.msra.mxu0 0.0
  %485 = vmatprep.subr.mxu0 0.0
  %486 = vmatpush1.msra.mxu0 0.0
  %487 = vmatprep.subr.mxu0 0.0
  %488 = vmatpush1.msra.mxu0 0.0
  %489 = vmatprep.subr.mxu0 0.0
  %490 = vmatpush1.msra.mxu0 0.0
  %491 = vmatprep.subr.mxu0 0.0
  %492 = vmatpush1.msra.mxu0 0.0
  %493 = vmatprep.subr.mxu0 0.0
  %494 = vmatpush1.msra.mxu0 0.0
  %495 = vmatprep.subr.mxu0 0.0
  %496 = vmatpush1.msra.mxu0 0.0
  %497 = vmatprep.subr.mxu0 0.0
  %498 = vmatpush1.msra.mxu0 0.0
  %499 = vmatprep.subr.mxu0 0.0
  %500 = vmatpush1.msra.mxu0 0.0
  %501 = vmatprep.subr.mxu0 0.0
  %502 = vmatpush1.msra.mxu0 0.0
  %503 = vmatprep.subr.mxu0 0.0
  %504 = vmatpush1.msra.mxu0 0.0
  %505 = vmatprep.subr.mxu0 0.0
  %506 = vmatpush1.msra.mxu0 0.0
  %507 = vmatprep.mubr.f32.mxu0 0.0
  %508 = vmatmul.mubr.f32.gmra.mrb[0].mxu0 %v429
  %v509 = vpop.f32.mrb[0].mxu0
  %v510 = vadd.f32 0.0, %v509
  %v511 = vpop.f32.mrb[0].mxu0
  %v512 = vadd.f32 0.0, %v511
  %513 = vdwg.mxu0
  %514 = vmatprep.subr.mxu0 %v441
  %515 = vmatpush1.msra.mxu0 %v438
  %516 = vmatprep.subr.mxu0 0.0
  %517 = vmatpush1.msra.mxu0 0.0
  %518 = vmatprep.subr.mxu0 0.0
  %519 = vmatpush1.msra.mxu0 0.0
  %520 = vmatprep.subr.mxu0 0.0
  %521 = vmatpush1.msra.mxu0 0.0
  %522 = vmatprep.subr.mxu0 0.0
  %523 = vmatpush1.msra.mxu0 0.0
  %524 = vmatprep.subr.mxu0 0.0
  %525 = vmatpush1.msra.mxu0 0.0
  %526 = vmatprep.subr.mxu0 0.0
  %527 = vmatpush1.msra.mxu0 0.0
  %528 = vmatprep.subr.mxu0 0.0
  %529 = vmatpush1.msra.mxu0 0.0
  %530 = vmatprep.subr.mxu0 0.0
  %531 = vmatpush1.msra.mxu0 0.0
  %532 = vmatprep.subr.mxu0 0.0
  %533 = vmatpush1.msra.mxu0 0.0
  %534 = vmatprep.subr.mxu0 0.0
  %535 = vmatpush1.msra.mxu0 0.0
  %536 = vmatprep.subr.mxu0 0.0
  %537 = vmatpush1.msra.mxu0 0.0
  %538 = vmatprep.subr.mxu0 0.0
  %539 = vmatpush1.msra.mxu0 0.0
  %540 = vmatprep.subr.mxu0 0.0
  %541 = vmatpush1.msra.mxu0 0.0
  %542 = vmatprep.subr.mxu0 0.0
  %543 = vmatpush1.msra.mxu0 0.0
  %544 = vmatprep.subr.mxu0 0.0
  %545 = vmatpush1.msra.mxu0 0.0
  %546 = vmatprep.subr.mxu0 0.0
  %547 = vmatpush1.msra.mxu0 0.0
  %548 = vmatprep.subr.mxu0 0.0
  %549 = vmatpush1.msra.mxu0 0.0
  %550 = vmatprep.subr.mxu0 0.0
  %551 = vmatpush1.msra.mxu0 0.0
  %552 = vmatprep.subr.mxu0 0.0
  %553 = vmatpush1.msra.mxu0 0.0
  %554 = vmatprep.subr.mxu0 0.0
  %555 = vmatpush1.msra.mxu0 0.0
  %556 = vmatprep.subr.mxu0 0.0
  %557 = vmatpush1.msra.mxu0 0.0
  %558 = vmatprep.subr.mxu0 0.0
  %559 = vmatpush1.msra.mxu0 0.0
  %560 = vmatprep.subr.mxu0 0.0
  %561 = vmatpush1.msra.mxu0 0.0
  %562 = vmatprep.subr.mxu0 0.0
  %563 = vmatpush1.msra.mxu0 0.0
  %564 = vmatprep.subr.mxu0 0.0
  %565 = vmatpush1.msra.mxu0 0.0
  %566 = vmatprep.subr.mxu0 0.0
  %567 = vmatpush1.msra.mxu0 0.0
  %568 = vmatprep.subr.mxu0 0.0
  %569 = vmatpush1.msra.mxu0 0.0
  %570 = vmatprep.subr.mxu0 0.0
  %571 = vmatpush1.msra.mxu0 0.0
  %572 = vmatprep.subr.mxu0 0.0
  %573 = vmatpush1.msra.mxu0 0.0
  %574 = vmatprep.subr.mxu0 0.0
  %575 = vmatpush1.msra.mxu0 0.0
  %576 = vmatprep.subr.mxu0 0.0
  %577 = vmatpush1.msra.mxu0 0.0
  %578 = vmatprep.mubr.f32.mxu0 0.0
  %579 = vmatmul.mubr.f32.gmra.mrb[0].mxu0 %v429
  %v580 = vpop.f32.mrb[0].mxu0
  %v581 = vadd.f32 0.0, %v580
  %v582 = vpop.f32.mrb[0].mxu0
  %v583 = vadd.f32 0.0, %v582
  %584 = vdwg.mxu0
  %v585 = vadd.f32 %v320, %v510
  %v586 = vadd.f32 %v322, %v512
  %v587 = vadd.f32 %v391, %v581
  %v588 = vadd.f32 %v393, %v583
  %589 = vrot.lane.b32.xlu0 %v31, 15
  %v590 = vpop.permute.xlu0 %589
  %591 = vrot.lane.b32.xlu0 %v44, 15
  %v592 = vpop.permute.xlu0 %591
  %593 = vrot.lane.b32.xlu0 %v32, 15
  %v594 = vpop.permute.xlu0 %593
  %595 = vrot.lane.b32.xlu0 %v45, 15
  %v596 = vpop.permute.xlu0 %595
  %vm597 = vcmp.lt.s32.totalorder %v57, 15
  %v598 = vsel %vm597, %v594, %v596
  %v599 = vsel %vm597, %v592, %v594
  %v600 = vsel %vm597, %v590, %v592
  %v601 = vsel %vm597, %v596, %v590
  %v602 = vlaneseq
  %v603 = vshrl.u32 %v602, 7
  %v604 = vsub.s32 2, %v603
  %v605 = vrot.slane %v23, %v604
  %v606 = vlaneseq
  %v607 = vshrl.u32 %v606, 7
  %v608 = vsub.s32 2, %v607
  %v609 = vrot.slane %v24, %v608
  %v610 = vlaneseq
  %v611 = vshrl.u32 %v610, 7
  %v612 = vsub.s32 2, %v611
  %v613 = vrot.slane %v25, %v612
  %v614 = vlaneseq
  %v615 = vshrl.u32 %v614, 7
  %v616 = vsub.s32 2, %v615
  %v617 = vrot.slane %v26, %v616
  %v618 = vmul.f32 %v601, %v605
  %v619 = vmul.f32 %v600, %v609
  %v620 = vmul.f32 %v599, %v613
  %v621 = vmul.f32 %v598, %v617
  %v623 = vsel %vm83, %v35, 0
  %v626 = vsel %vm87, %v618, 0
  %v629 = vsel %vm87, %v619, 0
  %v632 = vsel %vm87, %v620, 0
  %v635 = vsel %vm87, %v621, 0
  %637 = vmatprep.subr.mxu0 %v629
  %638 = vmatpush1.msra.mxu0 %v626
  %639 = vmatprep.subr.mxu0 0.0
  %640 = vmatpush1.msra.mxu0 0.0
  %641 = vmatprep.subr.mxu0 0.0
  %642 = vmatpush1.msra.mxu0 0.0
  %643 = vmatprep.subr.mxu0 0.0
  %644 = vmatpush1.msra.mxu0 0.0
  %645 = vmatprep.subr.mxu0 0.0
  %646 = vmatpush1.msra.mxu0 0.0
  %647 = vmatprep.subr.mxu0 0.0
  %648 = vmatpush1.msra.mxu0 0.0
  %649 = vmatprep.subr.mxu0 0.0
  %650 = vmatpush1.msra.mxu0 0.0
  %651 = vmatprep.subr.mxu0 0.0
  %652 = vmatpush1.msra.mxu0 0.0
  %653 = vmatprep.subr.mxu0 0.0
  %654 = vmatpush1.msra.mxu0 0.0
  %655 = vmatprep.subr.mxu0 0.0
  %656 = vmatpush1.msra.mxu0 0.0
  %657 = vmatprep.subr.mxu0 0.0
  %658 = vmatpush1.msra.mxu0 0.0
  %659 = vmatprep.subr.mxu0 0.0
  %660 = vmatpush1.msra.mxu0 0.0
  %661 = vmatprep.subr.mxu0 0.0
  %662 = vmatpush1.msra.mxu0 0.0
  %663 = vmatprep.subr.mxu0 0.0
  %664 = vmatpush1.msra.mxu0 0.0
  %665 = vmatprep.subr.mxu0 0.0
  %666 = vmatpush1.msra.mxu0 0.0
  %667 = vmatprep.subr.mxu0 0.0
  %668 = vmatpush1.msra.mxu0 0.0
  %669 = vmatprep.subr.mxu0 0.0
  %670 = vmatpush1.msra.mxu0 0.0
  %671 = vmatprep.subr.mxu0 0.0
  %672 = vmatpush1.msra.mxu0 0.0
  %673 = vmatprep.subr.mxu0 0.0
  %674 = vmatpush1.msra.mxu0 0.0
  %675 = vmatprep.subr.mxu0 0.0
  %676 = vmatpush1.msra.mxu0 0.0
  %677 = vmatprep.subr.mxu0 0.0
  %678 = vmatpush1.msra.mxu0 0.0
  %679 = vmatprep.subr.mxu0 0.0
  %680 = vmatpush1.msra.mxu0 0.0
  %681 = vmatprep.subr.mxu0 0.0
  %682 = vmatpush1.msra.mxu0 0.0
  %683 = vmatprep.subr.mxu0 0.0
  %684 = vmatpush1.msra.mxu0 0.0
  %685 = vmatprep.subr.mxu0 0.0
  %686 = vmatpush1.msra.mxu0 0.0
  %687 = vmatprep.subr.mxu0 0.0
  %688 = vmatpush1.msra.mxu0 0.0
  %689 = vmatprep.subr.mxu0 0.0
  %690 = vmatpush1.msra.mxu0 0.0
  %691 = vmatprep.subr.mxu0 0.0
  %692 = vmatpush1.msra.mxu0 0.0
  %693 = vmatprep.subr.mxu0 0.0
  %694 = vmatpush1.msra.mxu0 0.0
  %695 = vmatprep.subr.mxu0 0.0
  %696 = vmatpush1.msra.mxu0 0.0
  %697 = vmatprep.subr.mxu0 0.0
  %698 = vmatpush1.msra.mxu0 0.0
  %699 = vmatprep.subr.mxu0 0.0
  %700 = vmatpush1.msra.mxu0 0.0
  %701 = vmatprep.mubr.f32.mxu0 0.0
  %702 = vmatmul.mubr.f32.gmra.mrb[0].mxu0 %v623
  %v703 = vpop.f32.mrb[0].mxu0
  %v704 = vadd.f32 0.0, %v703
  %v705 = vpop.f32.mrb[0].mxu0
  %v706 = vadd.f32 0.0, %v705
  %707 = vdwg.mxu0
  %708 = vmatprep.subr.mxu0 %v635
  %709 = vmatpush1.msra.mxu0 %v632
  %710 = vmatprep.subr.mxu0 0.0
  %711 = vmatpush1.msra.mxu0 0.0
  %712 = vmatprep.subr.mxu0 0.0
  %713 = vmatpush1.msra.mxu0 0.0
  %714 = vmatprep.subr.mxu0 0.0
  %715 = vmatpush1.msra.mxu0 0.0
  %716 = vmatprep.subr.mxu0 0.0
  %717 = vmatpush1.msra.mxu0 0.0
  %718 = vmatprep.subr.mxu0 0.0
  %719 = vmatpush1.msra.mxu0 0.0
  %720 = vmatprep.subr.mxu0 0.0
  %721 = vmatpush1.msra.mxu0 0.0
  %722 = vmatprep.subr.mxu0 0.0
  %723 = vmatpush1.msra.mxu0 0.0
  %724 = vmatprep.subr.mxu0 0.0
  %725 = vmatpush1.msra.mxu0 0.0
  %726 = vmatprep.subr.mxu0 0.0
  %727 = vmatpush1.msra.mxu0 0.0
  %728 = vmatprep.subr.mxu0 0.0
  %729 = vmatpush1.msra.mxu0 0.0
  %730 = vmatprep.subr.mxu0 0.0
  %731 = vmatpush1.msra.mxu0 0.0
  %732 = vmatprep.subr.mxu0 0.0
  %733 = vmatpush1.msra.mxu0 0.0
  %734 = vmatprep.subr.mxu0 0.0
  %735 = vmatpush1.msra.mxu0 0.0
  %736 = vmatprep.subr.mxu0 0.0
  %737 = vmatpush1.msra.mxu0 0.0
  %738 = vmatprep.subr.mxu0 0.0
  %739 = vmatpush1.msra.mxu0 0.0
  %740 = vmatprep.subr.mxu0 0.0
  %741 = vmatpush1.msra.mxu0 0.0
  %742 = vmatprep.subr.mxu0 0.0
  %743 = vmatpush1.msra.mxu0 0.0
  %744 = vmatprep.subr.mxu0 0.0
  %745 = vmatpush1.msra.mxu0 0.0
  %746 = vmatprep.subr.mxu0 0.0
  %747 = vmatpush1.msra.mxu0 0.0
  %748 = vmatprep.subr.mxu0 0.0
  %749 = vmatpush1.msra.mxu0 0.0
  %750 = vmatprep.subr.mxu0 0.0
  %751 = vmatpush1.msra.mxu0 0.0
  %752 = vmatprep.subr.mxu0 0.0
  %753 = vmatpush1.msra.mxu0 0.0
  %754 = vmatprep.subr.mxu0 0.0
  %755 = vmatpush1.msra.mxu0 0.0
  %756 = vmatprep.subr.mxu0 0.0
  %757 = vmatpush1.msra.mxu0 0.0
  %758 = vmatprep.subr.mxu0 0.0
  %759 = vmatpush1.msra.mxu0 0.0
  %760 = vmatprep.subr.mxu0 0.0
  %761 = vmatpush1.msra.mxu0 0.0
  %762 = vmatprep.subr.mxu0 0.0
  %763 = vmatpush1.msra.mxu0 0.0
  %764 = vmatprep.subr.mxu0 0.0
  %765 = vmatpush1.msra.mxu0 0.0
  %766 = vmatprep.subr.mxu0 0.0
  %767 = vmatpush1.msra.mxu0 0.0
  %768 = vmatprep.subr.mxu0 0.0
  %769 = vmatpush1.msra.mxu0 0.0
  %770 = vmatprep.subr.mxu0 0.0
  %771 = vmatpush1.msra.mxu0 0.0
  %772 = vmatprep.mubr.f32.mxu0 0.0
  %773 = vmatmul.mubr.f32.gmra.mrb[0].mxu0 %v623
  %v774 = vpop.f32.mrb[0].mxu0
  %v775 = vadd.f32 0.0, %v774
  %v776 = vpop.f32.mrb[0].mxu0
  %v777 = vadd.f32 0.0, %v776
  %778 = vdwg.mxu0
  %v779 = vadd.f32 %v585, %v704
  %v780 = vadd.f32 %v586, %v706
  %v781 = vadd.f32 %v587, %v775
  %v782 = vadd.f32 %v588, %v777
  %783 = vrot.lane.b32.xlu0 %v31, 1
  %v784 = vpop.permute.xlu0 %783
  %785 = vrot.lane.b32.xlu0 %v44, 1
  %v786 = vpop.permute.xlu0 %785
  %787 = vrot.lane.b32.xlu0 %v32, 1
  %v788 = vpop.permute.xlu0 %787
  %789 = vrot.lane.b32.xlu0 %v45, 1
  %v790 = vpop.permute.xlu0 %789
  %vm791 = vcmp.lt.s32.totalorder %v57, 1
  %v792 = vsel %vm791, %v788, %v790
  %v793 = vsel %vm791, %v786, %v788
  %v794 = vsel %vm791, %v784, %v786
  %v795 = vsel %vm791, %v790, %v784
  %v796 = vlaneseq
  %v797 = vshrl.u32 %v796, 7
  %v798 = vsub.s32 3, %v797
  %v799 = vrot.slane %v23, %v798
  %v800 = vlaneseq
  %v801 = vshrl.u32 %v800, 7
  %v802 = vsub.s32 3, %v801
  %v803 = vrot.slane %v24, %v802
  %v804 = vlaneseq
  %v805 = vshrl.u32 %v804, 7
  %v806 = vsub.s32 3, %v805
  %v807 = vrot.slane %v25, %v806
  %v808 = vlaneseq
  %v809 = vshrl.u32 %v808, 7
  %v810 = vsub.s32 3, %v809
  %v811 = vrot.slane %v26, %v810
  %v812 = vmul.f32 %v795, %v799
  %v813 = vmul.f32 %v794, %v803
  %v814 = vmul.f32 %v793, %v807
  %v815 = vmul.f32 %v792, %v811
  %v817 = vsel %vm83, %v36, 0
  %v820 = vsel %vm87, %v812, 0
  %v823 = vsel %vm87, %v813, 0
  %v826 = vsel %vm87, %v814, 0
  %v829 = vsel %vm87, %v815, 0
  %831 = vmatprep.subr.mxu0 %v823
  %832 = vmatpush1.msra.mxu0 %v820
  %833 = vmatprep.subr.mxu0 0.0
  %834 = vmatpush1.msra.mxu0 0.0
  %835 = vmatprep.subr.mxu0 0.0
  %836 = vmatpush1.msra.mxu0 0.0
  %837 = vmatprep.subr.mxu0 0.0
  %838 = vmatpush1.msra.mxu0 0.0
  %839 = vmatprep.subr.mxu0 0.0
  %840 = vmatpush1.msra.mxu0 0.0
  %841 = vmatprep.subr.mxu0 0.0
  %842 = vmatpush1.msra.mxu0 0.0
  %843 = vmatprep.subr.mxu0 0.0
  %844 = vmatpush1.msra.mxu0 0.0
  %845 = vmatprep.subr.mxu0 0.0
  %846 = vmatpush1.msra.mxu0 0.0
  %847 = vmatprep.subr.mxu0 0.0
  %848 = vmatpush1.msra.mxu0 0.0
  %849 = vmatprep.subr.mxu0 0.0
  %850 = vmatpush1.msra.mxu0 0.0
  %851 = vmatprep.subr.mxu0 0.0
  %852 = vmatpush1.msra.mxu0 0.0
  %853 = vmatprep.subr.mxu0 0.0
  %854 = vmatpush1.msra.mxu0 0.0
  %855 = vmatprep.subr.mxu0 0.0
  %856 = vmatpush1.msra.mxu0 0.0
  %857 = vmatprep.subr.mxu0 0.0
  %858 = vmatpush1.msra.mxu0 0.0
  %859 = vmatprep.subr.mxu0 0.0
  %860 = vmatpush1.msra.mxu0 0.0
  %861 = vmatprep.subr.mxu0 0.0
  %862 = vmatpush1.msra.mxu0 0.0
  %863 = vmatprep.subr.mxu0 0.0
  %864 = vmatpush1.msra.mxu0 0.0
  %865 = vmatprep.subr.mxu0 0.0
  %866 = vmatpush1.msra.mxu0 0.0
  %867 = vmatprep.subr.mxu0 0.0
  %868 = vmatpush1.msra.mxu0 0.0
  %869 = vmatprep.subr.mxu0 0.0
  %870 = vmatpush1.msra.mxu0 0.0
  %871 = vmatprep.subr.mxu0 0.0
  %872 = vmatpush1.msra.mxu0 0.0
  %873 = vmatprep.subr.mxu0 0.0
  %874 = vmatpush1.msra.mxu0 0.0
  %875 = vmatprep.subr.mxu0 0.0
  %876 = vmatpush1.msra.mxu0 0.0
  %877 = vmatprep.subr.mxu0 0.0
  %878 = vmatpush1.msra.mxu0 0.0
  %879 = vmatprep.subr.mxu0 0.0
  %880 = vmatpush1.msra.mxu0 0.0
  %881 = vmatprep.subr.mxu0 0.0
  %882 = vmatpush1.msra.mxu0 0.0
  %883 = vmatprep.subr.mxu0 0.0
  %884 = vmatpush1.msra.mxu0 0.0
  %885 = vmatprep.subr.mxu0 0.0
  %886 = vmatpush1.msra.mxu0 0.0
  %887 = vmatprep.subr.mxu0 0.0
  %888 = vmatpush1.msra.mxu0 0.0
  %889 = vmatprep.subr.mxu0 0.0
  %890 = vmatpush1.msra.mxu0 0.0
  %891 = vmatprep.subr.mxu0 0.0
  %892 = vmatpush1.msra.mxu0 0.0
  %893 = vmatprep.subr.mxu0 0.0
  %894 = vmatpush1.msra.mxu0 0.0
  %895 = vmatprep.mubr.f32.mxu0 0.0
  %896 = vmatmul.mubr.f32.gmra.mrb[0].mxu0 %v817
  %v897 = vpop.f32.mrb[0].mxu0
  %v898 = vadd.f32 0.0, %v897
  %v899 = vpop.f32.mrb[0].mxu0
  %v900 = vadd.f32 0.0, %v899
  %901 = vdwg.mxu0
  %902 = vmatprep.subr.mxu0 %v829
  %903 = vmatpush1.msra.mxu0 %v826
  %904 = vmatprep.subr.mxu0 0.0
  %905 = vmatpush1.msra.mxu0 0.0
  %906 = vmatprep.subr.mxu0 0.0
  %907 = vmatpush1.msra.mxu0 0.0
  %908 = vmatprep.subr.mxu0 0.0
  %909 = vmatpush1.msra.mxu0 0.0
  %910 = vmatprep.subr.mxu0 0.0
  %911 = vmatpush1.msra.mxu0 0.0
  %912 = vmatprep.subr.mxu0 0.0
  %913 = vmatpush1.msra.mxu0 0.0
  %914 = vmatprep.subr.mxu0 0.0
  %915 = vmatpush1.msra.mxu0 0.0
  %916 = vmatprep.subr.mxu0 0.0
  %917 = vmatpush1.msra.mxu0 0.0
  %918 = vmatprep.subr.mxu0 0.0
  %919 = vmatpush1.msra.mxu0 0.0
  %920 = vmatprep.subr.mxu0 0.0
  %921 = vmatpush1.msra.mxu0 0.0
  %922 = vmatprep.subr.mxu0 0.0
  %923 = vmatpush1.msra.mxu0 0.0
  %924 = vmatprep.subr.mxu0 0.0
  %925 = vmatpush1.msra.mxu0 0.0
  %926 = vmatprep.subr.mxu0 0.0
  %927 = vmatpush1.msra.mxu0 0.0
  %928 = vmatprep.subr.mxu0 0.0
  %929 = vmatpush1.msra.mxu0 0.0
  %930 = vmatprep.subr.mxu0 0.0
  %931 = vmatpush1.msra.mxu0 0.0
  %932 = vmatprep.subr.mxu0 0.0
  %933 = vmatpush1.msra.mxu0 0.0
  %934 = vmatprep.subr.mxu0 0.0
  %935 = vmatpush1.msra.mxu0 0.0
  %936 = vmatprep.subr.mxu0 0.0
  %937 = vmatpush1.msra.mxu0 0.0
  %938 = vmatprep.subr.mxu0 0.0
  %939 = vmatpush1.msra.mxu0 0.0
  %940 = vmatprep.subr.mxu0 0.0
  %941 = vmatpush1.msra.mxu0 0.0
  %942 = vmatprep.subr.mxu0 0.0
  %943 = vmatpush1.msra.mxu0 0.0
  %944 = vmatprep.subr.mxu0 0.0
  %945 = vmatpush1.msra.mxu0 0.0
  %946 = vmatprep.subr.mxu0 0.0
  %947 = vmatpush1.msra.mxu0 0.0
  %948 = vmatprep.subr.mxu0 0.0
  %949 = vmatpush1.msra.mxu0 0.0
  %950 = vmatprep.subr.mxu0 0.0
  %951 = vmatpush1.msra.mxu0 0.0
  %952 = vmatprep.subr.mxu0 0.0
  %953 = vmatpush1.msra.mxu0 0.0
  %954 = vmatprep.subr.mxu0 0.0
  %955 = vmatpush1.msra.mxu0 0.0
  %956 = vmatprep.subr.mxu0 0.0
  %957 = vmatpush1.msra.mxu0 0.0
  %958 = vmatprep.subr.mxu0 0.0
  %959 = vmatpush1.msra.mxu0 0.0
  %960 = vmatprep.subr.mxu0 0.0
  %961 = vmatpush1.msra.mxu0 0.0
  %962 = vmatprep.subr.mxu0 0.0
  %963 = vmatpush1.msra.mxu0 0.0
  %964 = vmatprep.subr.mxu0 0.0
  %965 = vmatpush1.msra.mxu0 0.0
  %966 = vmatprep.mubr.f32.mxu0 0.0
  %967 = vmatmul.mubr.f32.gmra.mrb[0].mxu0 %v817
  %v968 = vpop.f32.mrb[0].mxu0
  %v969 = vadd.f32 0.0, %v968
  %v970 = vpop.f32.mrb[0].mxu0
  %v971 = vadd.f32 0.0, %v970
  %972 = vdwg.mxu0
  %v973 = vadd.f32 %v779, %v898
  %v974 = vadd.f32 %v780, %v900
  %v975 = vadd.f32 %v781, %v969
  %v976 = vadd.f32 %v782, %v971
  %977 = vrot.lane.b32.xlu0 %v31, 127
  %v978 = vpop.permute.xlu0 %977
  %979 = vrot.lane.b32.xlu0 %v44, 127
  %v980 = vpop.permute.xlu0 %979
  %981 = vrot.lane.b32.xlu0 %v32, 127
  %v982 = vpop.permute.xlu0 %981
  %983 = vrot.lane.b32.xlu0 %v45, 127
  %v984 = vpop.permute.xlu0 %983
  %vm985 = vcmp.lt.s32.totalorder %v57, 127
  %v986 = vsel %vm985, %v982, %v984
  %v987 = vsel %vm985, %v980, %v982
  %v988 = vsel %vm985, %v978, %v980
  %v989 = vsel %vm985, %v984, %v978
  %v990 = vlaneseq
  %v991 = vshrl.u32 %v990, 7
  %v992 = vsub.s32 5, %v991
  %v993 = vrot.slane %v23, %v992
  %v994 = vlaneseq
  %v995 = vshrl.u32 %v994, 7
  %v996 = vsub.s32 5, %v995
  %v997 = vrot.slane %v24, %v996
  %v998 = vlaneseq
  %v999 = vshrl.u32 %v998, 7
  %v1000 = vsub.s32 5, %v999
  %v1001 = vrot.slane %v25, %v1000
  %v1002 = vlaneseq
  %v1003 = vshrl.u32 %v1002, 7
  %v1004 = vsub.s32 5, %v1003
  %v1005 = vrot.slane %v26, %v1004
  %v1006 = vmul.f32 %v988, %v993
  %v1007 = vmul.f32 %v987, %v997
  %v1008 = vmul.f32 %v986, %v1001
  %v1009 = vmul.f32 %v989, %v1005
  %v1011 = vsel %vm83, %v38, 0
  %v1014 = vsel %vm87, %v1006, 0
  %v1017 = vsel %vm87, %v1007, 0
  %v1020 = vsel %vm87, %v1008, 0
  %v1023 = vsel %vm87, %v1009, 0
  %1025 = vmatprep.subr.mxu0 %v1017
  %1026 = vmatpush1.msra.mxu0 %v1014
  %1027 = vmatprep.subr.mxu0 0.0
  %1028 = vmatpush1.msra.mxu0 0.0
  %1029 = vmatprep.subr.mxu0 0.0
  %1030 = vmatpush1.msra.mxu0 0.0
  %1031 = vmatprep.subr.mxu0 0.0
  %1032 = vmatpush1.msra.mxu0 0.0
  %1033 = vmatprep.subr.mxu0 0.0
  %1034 = vmatpush1.msra.mxu0 0.0
  %1035 = vmatprep.subr.mxu0 0.0
  %1036 = vmatpush1.msra.mxu0 0.0
  %1037 = vmatprep.subr.mxu0 0.0
  %1038 = vmatpush1.msra.mxu0 0.0
  %1039 = vmatprep.subr.mxu0 0.0
  %1040 = vmatpush1.msra.mxu0 0.0
  %1041 = vmatprep.subr.mxu0 0.0
  %1042 = vmatpush1.msra.mxu0 0.0
  %1043 = vmatprep.subr.mxu0 0.0
  %1044 = vmatpush1.msra.mxu0 0.0
  %1045 = vmatprep.subr.mxu0 0.0
  %1046 = vmatpush1.msra.mxu0 0.0
  %1047 = vmatprep.subr.mxu0 0.0
  %1048 = vmatpush1.msra.mxu0 0.0
  %1049 = vmatprep.subr.mxu0 0.0
  %1050 = vmatpush1.msra.mxu0 0.0
  %1051 = vmatprep.subr.mxu0 0.0
  %1052 = vmatpush1.msra.mxu0 0.0
  %1053 = vmatprep.subr.mxu0 0.0
  %1054 = vmatpush1.msra.mxu0 0.0
  %1055 = vmatprep.subr.mxu0 0.0
  %1056 = vmatpush1.msra.mxu0 0.0
  %1057 = vmatprep.subr.mxu0 0.0
  %1058 = vmatpush1.msra.mxu0 0.0
  %1059 = vmatprep.subr.mxu0 0.0
  %1060 = vmatpush1.msra.mxu0 0.0
  %1061 = vmatprep.subr.mxu0 0.0
  %1062 = vmatpush1.msra.mxu0 0.0
  %1063 = vmatprep.subr.mxu0 0.0
  %1064 = vmatpush1.msra.mxu0 0.0
  %1065 = vmatprep.subr.mxu0 0.0
  %1066 = vmatpush1.msra.mxu0 0.0
  %1067 = vmatprep.subr.mxu0 0.0
  %1068 = vmatpush1.msra.mxu0 0.0
  %1069 = vmatprep.subr.mxu0 0.0
  %1070 = vmatpush1.msra.mxu0 0.0
  %1071 = vmatprep.subr.mxu0 0.0
  %1072 = vmatpush1.msra.mxu0 0.0
  %1073 = vmatprep.subr.mxu0 0.0
  %1074 = vmatpush1.msra.mxu0 0.0
  %1075 = vmatprep.subr.mxu0 0.0
  %1076 = vmatpush1.msra.mxu0 0.0
  %1077 = vmatprep.subr.mxu0 0.0
  %1078 = vmatpush1.msra.mxu0 0.0
  %1079 = vmatprep.subr.mxu0 0.0
  %1080 = vmatpush1.msra.mxu0 0.0
  %1081 = vmatprep.subr.mxu0 0.0
  %1082 = vmatpush1.msra.mxu0 0.0
  %1083 = vmatprep.subr.mxu0 0.0
  %1084 = vmatpush1.msra.mxu0 0.0
  %1085 = vmatprep.subr.mxu0 0.0
  %1086 = vmatpush1.msra.mxu0 0.0
  %1087 = vmatprep.subr.mxu0 0.0
  %1088 = vmatpush1.msra.mxu0 0.0
  %1089 = vmatprep.mubr.f32.mxu0 0.0
  %1090 = vmatmul.mubr.f32.gmra.mrb[0].mxu0 %v1011
  %v1091 = vpop.f32.mrb[0].mxu0
  %v1092 = vadd.f32 0.0, %v1091
  %v1093 = vpop.f32.mrb[0].mxu0
  %v1094 = vadd.f32 0.0, %v1093
  %1095 = vdwg.mxu0
  %1096 = vmatprep.subr.mxu0 %v1023
  %1097 = vmatpush1.msra.mxu0 %v1020
  %1098 = vmatprep.subr.mxu0 0.0
  %1099 = vmatpush1.msra.mxu0 0.0
  %1100 = vmatprep.subr.mxu0 0.0
  %1101 = vmatpush1.msra.mxu0 0.0
  %1102 = vmatprep.subr.mxu0 0.0
  %1103 = vmatpush1.msra.mxu0 0.0
  %1104 = vmatprep.subr.mxu0 0.0
  %1105 = vmatpush1.msra.mxu0 0.0
  %1106 = vmatprep.subr.mxu0 0.0
  %1107 = vmatpush1.msra.mxu0 0.0
  %1108 = vmatprep.subr.mxu0 0.0
  %1109 = vmatpush1.msra.mxu0 0.0
  %1110 = vmatprep.subr.mxu0 0.0
  %1111 = vmatpush1.msra.mxu0 0.0
  %1112 = vmatprep.subr.mxu0 0.0
  %1113 = vmatpush1.msra.mxu0 0.0
  %1114 = vmatprep.subr.mxu0 0.0
  %1115 = vmatpush1.msra.mxu0 0.0
  %1116 = vmatprep.subr.mxu0 0.0
  %1117 = vmatpush1.msra.mxu0 0.0
  %1118 = vmatprep.subr.mxu0 0.0
  %1119 = vmatpush1.msra.mxu0 0.0
  %1120 = vmatprep.subr.mxu0 0.0
  %1121 = vmatpush1.msra.mxu0 0.0
  %1122 = vmatprep.subr.mxu0 0.0
  %1123 = vmatpush1.msra.mxu0 0.0
  %1124 = vmatprep.subr.mxu0 0.0
  %1125 = vmatpush1.msra.mxu0 0.0
  %1126 = vmatprep.subr.mxu0 0.0
  %1127 = vmatpush1.msra.mxu0 0.0
  %1128 = vmatprep.subr.mxu0 0.0
  %1129 = vmatpush1.msra.mxu0 0.0
  %1130 = vmatprep.subr.mxu0 0.0
  %1131 = vmatpush1.msra.mxu0 0.0
  %1132 = vmatprep.subr.mxu0 0.0
  %1133 = vmatpush1.msra.mxu0 0.0
  %1134 = vmatprep.subr.mxu0 0.0
  %1135 = vmatpush1.msra.mxu0 0.0
  %1136 = vmatprep.subr.mxu0 0.0
  %1137 = vmatpush1.msra.mxu0 0.0
  %1138 = vmatprep.subr.mxu0 0.0
  %1139 = vmatpush1.msra.mxu0 0.0
  %1140 = vmatprep.subr.mxu0 0.0
  %1141 = vmatpush1.msra.mxu0 0.0
  %1142 = vmatprep.subr.mxu0 0.0
  %1143 = vmatpush1.msra.mxu0 0.0
  %1144 = vmatprep.subr.mxu0 0.0
  %1145 = vmatpush1.msra.mxu0 0.0
  %1146 = vmatprep.subr.mxu0 0.0
  %1147 = vmatpush1.msra.mxu0 0.0
  %1148 = vmatprep.subr.mxu0 0.0
  %1149 = vmatpush1.msra.mxu0 0.0
  %1150 = vmatprep.subr.mxu0 0.0
  %1151 = vmatpush1.msra.mxu0 0.0
  %1152 = vmatprep.subr.mxu0 0.0
  %1153 = vmatpush1.msra.mxu0 0.0
  %1154 = vmatprep.subr.mxu0 0.0
  %1155 = vmatpush1.msra.mxu0 0.0
  %1156 = vmatprep.subr.mxu0 0.0
  %1157 = vmatpush1.msra.mxu0 0.0
  %1158 = vmatprep.subr.mxu0 0.0
  %1159 = vmatpush1.msra.mxu0 0.0
  %1160 = vmatprep.mubr.f32.mxu0 0.0
  %1161 = vmatmul.mubr.f32.gmra.mrb[0].mxu0 %v1011
  %v1162 = vpop.f32.mrb[0].mxu0
  %v1163 = vadd.f32 0.0, %v1162
  %v1164 = vpop.f32.mrb[0].mxu0
  %v1165 = vadd.f32 0.0, %v1164
  %1166 = vdwg.mxu0
  %v1167 = vadd.f32 %v973, %v1092
  %v1168 = vadd.f32 %v974, %v1094
  %v1169 = vadd.f32 %v975, %v1163
  %v1170 = vadd.f32 %v976, %v1165
  %1171 = vrot.lane.b32.xlu0 %v31, 113
  %v1172 = vpop.permute.xlu0 %1171
  %1173 = vrot.lane.b32.xlu0 %v44, 113
  %v1174 = vpop.permute.xlu0 %1173
  %1175 = vrot.lane.b32.xlu0 %v32, 113
  %v1176 = vpop.permute.xlu0 %1175
  %1177 = vrot.lane.b32.xlu0 %v45, 113
  %v1178 = vpop.permute.xlu0 %1177
  %vm1179 = vcmp.lt.s32.totalorder %v57, 113
  %v1180 = vsel %vm1179, %v1176, %v1178
  %v1181 = vsel %vm1179, %v1174, %v1176
  %v1182 = vsel %vm1179, %v1172, %v1174
  %v1183 = vsel %vm1179, %v1178, %v1172
  %v1184 = vlaneseq
  %v1185 = vshrl.u32 %v1184, 7
  %v1186 = vsub.s32 6, %v1185
  %v1187 = vrot.slane %v23, %v1186
  %v1188 = vlaneseq
  %v1189 = vshrl.u32 %v1188, 7
  %v1190 = vsub.s32 6, %v1189
  %v1191 = vrot.slane %v24, %v1190
  %v1192 = vlaneseq
  %v1193 = vshrl.u32 %v1192, 7
  %v1194 = vsub.s32 6, %v1193
  %v1195 = vrot.slane %v25, %v1194
  %v1196 = vlaneseq
  %v1197 = vshrl.u32 %v1196, 7
  %v1198 = vsub.s32 6, %v1197
  %v1199 = vrot.slane %v26, %v1198
  %v1200 = vmul.f32 %v1182, %v1187
  %v1201 = vmul.f32 %v1181, %v1191
  %v1202 = vmul.f32 %v1180, %v1195
  %v1203 = vmul.f32 %v1183, %v1199
  %v1205 = vsel %vm83, %v39, 0
  %v1208 = vsel %vm87, %v1200, 0
  %v1211 = vsel %vm87, %v1201, 0
  %v1214 = vsel %vm87, %v1202, 0
  %v1217 = vsel %vm87, %v1203, 0
  %1219 = vmatprep.subr.mxu0 %v1211
  %1220 = vmatpush1.msra.mxu0 %v1208
  %1221 = vmatprep.subr.mxu0 0.0
  %1222 = vmatpush1.msra.mxu0 0.0
  %1223 = vmatprep.subr.mxu0 0.0
  %1224 = vmatpush1.msra.mxu0 0.0
  %1225 = vmatprep.subr.mxu0 0.0
  %1226 = vmatpush1.msra.mxu0 0.0
  %1227 = vmatprep.subr.mxu0 0.0
  %1228 = vmatpush1.msra.mxu0 0.0
  %1229 = vmatprep.subr.mxu0 0.0
  %1230 = vmatpush1.msra.mxu0 0.0
  %1231 = vmatprep.subr.mxu0 0.0
  %1232 = vmatpush1.msra.mxu0 0.0
  %1233 = vmatprep.subr.mxu0 0.0
  %1234 = vmatpush1.msra.mxu0 0.0
  %1235 = vmatprep.subr.mxu0 0.0
  %1236 = vmatpush1.msra.mxu0 0.0
  %1237 = vmatprep.subr.mxu0 0.0
  %1238 = vmatpush1.msra.mxu0 0.0
  %1239 = vmatprep.subr.mxu0 0.0
  %1240 = vmatpush1.msra.mxu0 0.0
  %1241 = vmatprep.subr.mxu0 0.0
  %1242 = vmatpush1.msra.mxu0 0.0
  %1243 = vmatprep.subr.mxu0 0.0
  %1244 = vmatpush1.msra.mxu0 0.0
  %1245 = vmatprep.subr.mxu0 0.0
  %1246 = vmatpush1.msra.mxu0 0.0
  %1247 = vmatprep.subr.mxu0 0.0
  %1248 = vmatpush1.msra.mxu0 0.0
  %1249 = vmatprep.subr.mxu0 0.0
  %1250 = vmatpush1.msra.mxu0 0.0
  %1251 = vmatprep.subr.mxu0 0.0
  %1252 = vmatpush1.msra.mxu0 0.0
  %1253 = vmatprep.subr.mxu0 0.0
  %1254 = vmatpush1.msra.mxu0 0.0
  %1255 = vmatprep.subr.mxu0 0.0
  %1256 = vmatpush1.msra.mxu0 0.0
  %1257 = vmatprep.subr.mxu0 0.0
  %1258 = vmatpush1.msra.mxu0 0.0
  %1259 = vmatprep.subr.mxu0 0.0
  %1260 = vmatpush1.msra.mxu0 0.0
  %1261 = vmatprep.subr.mxu0 0.0
  %1262 = vmatpush1.msra.mxu0 0.0
  %1263 = vmatprep.subr.mxu0 0.0
  %1264 = vmatpush1.msra.mxu0 0.0
  %1265 = vmatprep.subr.mxu0 0.0
  %1266 = vmatpush1.msra.mxu0 0.0
  %1267 = vmatprep.subr.mxu0 0.0
  %1268 = vmatpush1.msra.mxu0 0.0
  %1269 = vmatprep.subr.mxu0 0.0
  %1270 = vmatpush1.msra.mxu0 0.0
  %1271 = vmatprep.subr.mxu0 0.0
  %1272 = vmatpush1.msra.mxu0 0.0
  %1273 = vmatprep.subr.mxu0 0.0
  %1274 = vmatpush1.msra.mxu0 0.0
  %1275 = vmatprep.subr.mxu0 0.0
  %1276 = vmatpush1.msra.mxu0 0.0
  %1277 = vmatprep.subr.mxu0 0.0
  %1278 = vmatpush1.msra.mxu0 0.0
  %1279 = vmatprep.subr.mxu0 0.0
  %1280 = vmatpush1.msra.mxu0 0.0
  %1281 = vmatprep.subr.mxu0 0.0
  %1282 = vmatpush1.msra.mxu0 0.0
  %1283 = vmatprep.mubr.f32.mxu0 0.0
  %1284 = vmatmul.mubr.f32.gmra.mrb[0].mxu0 %v1205
  %v1285 = vpop.f32.mrb[0].mxu0
  %v1286 = vadd.f32 0.0, %v1285
  %v1287 = vpop.f32.mrb[0].mxu0
  %v1288 = vadd.f32 0.0, %v1287
  %1289 = vdwg.mxu0
  %1290 = vmatprep.subr.mxu0 %v1217
  %1291 = vmatpush1.msra.mxu0 %v1214
  %1292 = vmatprep.subr.mxu0 0.0
  %1293 = vmatpush1.msra.mxu0 0.0
  %1294 = vmatprep.subr.mxu0 0.0
  %1295 = vmatpush1.msra.mxu0 0.0
  %1296 = vmatprep.subr.mxu0 0.0
  %1297 = vmatpush1.msra.mxu0 0.0
  %1298 = vmatprep.subr.mxu0 0.0
  %1299 = vmatpush1.msra.mxu0 0.0
  %1300 = vmatprep.subr.mxu0 0.0
  %1301 = vmatpush1.msra.mxu0 0.0
  %1302 = vmatprep.subr.mxu0 0.0
  %1303 = vmatpush1.msra.mxu0 0.0
  %1304 = vmatprep.subr.mxu0 0.0
  %1305 = vmatpush1.msra.mxu0 0.0
  %1306 = vmatprep.subr.mxu0 0.0
  %1307 = vmatpush1.msra.mxu0 0.0
  %1308 = vmatprep.subr.mxu0 0.0
  %1309 = vmatpush1.msra.mxu0 0.0
  %1310 = vmatprep.subr.mxu0 0.0
  %1311 = vmatpush1.msra.mxu0 0.0
  %1312 = vmatprep.subr.mxu0 0.0
  %1313 = vmatpush1.msra.mxu0 0.0
  %1314 = vmatprep.subr.mxu0 0.0
  %1315 = vmatpush1.msra.mxu0 0.0
  %1316 = vmatprep.subr.mxu0 0.0
  %1317 = vmatpush1.msra.mxu0 0.0
  %1318 = vmatprep.subr.mxu0 0.0
  %1319 = vmatpush1.msra.mxu0 0.0
  %1320 = vmatprep.subr.mxu0 0.0
  %1321 = vmatpush1.msra.mxu0 0.0
  %1322 = vmatprep.subr.mxu0 0.0
  %1323 = vmatpush1.msra.mxu0 0.0
  %1324 = vmatprep.subr.mxu0 0.0
  %1325 = vmatpush1.msra.mxu0 0.0
  %1326 = vmatprep.subr.mxu0 0.0
  %1327 = vmatpush1.msra.mxu0 0.0
  %1328 = vmatprep.subr.mxu0 0.0
  %1329 = vmatpush1.msra.mxu0 0.0
  %1330 = vmatprep.subr.mxu0 0.0
  %1331 = vmatpush1.msra.mxu0 0.0
  %1332 = vmatprep.subr.mxu0 0.0
  %1333 = vmatpush1.msra.mxu0 0.0
  %1334 = vmatprep.subr.mxu0 0.0
  %1335 = vmatpush1.msra.mxu0 0.0
  %1336 = vmatprep.subr.mxu0 0.0
  %1337 = vmatpush1.msra.mxu0 0.0
  %1338 = vmatprep.subr.mxu0 0.0
  %1339 = vmatpush1.msra.mxu0 0.0
  %1340 = vmatprep.subr.mxu0 0.0
  %1341 = vmatpush1.msra.mxu0 0.0
  %1342 = vmatprep.subr.mxu0 0.0
  %1343 = vmatpush1.msra.mxu0 0.0
  %1344 = vmatprep.subr.mxu0 0.0
  %1345 = vmatpush1.msra.mxu0 0.0
  %1346 = vmatprep.subr.mxu0 0.0
  %1347 = vmatpush1.msra.mxu0 0.0
  %1348 = vmatprep.subr.mxu0 0.0
  %1349 = vmatpush1.msra.mxu0 0.0
  %1350 = vmatprep.subr.mxu0 0.0
  %1351 = vmatpush1.msra.mxu0 0.0
  %1352 = vmatprep.subr.mxu0 0.0
  %1353 = vmatpush1.msra.mxu0 0.0
  %1354 = vmatprep.mubr.f32.mxu0 0.0
  %1355 = vmatmul.mubr.f32.gmra.mrb[0].mxu0 %v1205
  %v1356 = vpop.f32.mrb[0].mxu0
  %v1357 = vadd.f32 0.0, %v1356
  %v1358 = vpop.f32.mrb[0].mxu0
  %v1359 = vadd.f32 0.0, %v1358
  %1360 = vdwg.mxu0
  %v1361 = vadd.f32 %v1167, %v1286
  %v1362 = vadd.f32 %v1168, %v1288
  %v1363 = vadd.f32 %v1169, %v1357
  %v1364 = vadd.f32 %v1170, %v1359
  %1365 = vrot.lane.b32.xlu0 %v31, 112
  %v1366 = vpop.permute.xlu0 %1365
  %1367 = vrot.lane.b32.xlu0 %v44, 112
  %v1368 = vpop.permute.xlu0 %1367
  %1369 = vrot.lane.b32.xlu0 %v32, 112
  %v1370 = vpop.permute.xlu0 %1369
  %1371 = vrot.lane.b32.xlu0 %v45, 112
  %v1372 = vpop.permute.xlu0 %1371
  %vm1373 = vcmp.lt.s32.totalorder %v57, 112
  %v1374 = vsel %vm1373, %v1370, %v1372
  %v1375 = vsel %vm1373, %v1368, %v1370
  %v1376 = vsel %vm1373, %v1366, %v1368
  %v1377 = vsel %vm1373, %v1372, %v1366
  %v1378 = vlaneseq
  %v1379 = vshrl.u32 %v1378, 7
  %v1380 = vsub.s32 7, %v1379
  %v1381 = vrot.slane %v23, %v1380
  %v1382 = vlaneseq
  %v1383 = vshrl.u32 %v1382, 7
  %v1384 = vsub.s32 7, %v1383
  %v1385 = vrot.slane %v24, %v1384
  %v1386 = vlaneseq
  %v1387 = vshrl.u32 %v1386, 7
  %v1388 = vsub.s32 7, %v1387
  %v1389 = vrot.slane %v25, %v1388
  %v1390 = vlaneseq
  %v1391 = vshrl.u32 %v1390, 7
  %v1392 = vsub.s32 7, %v1391
  %v1393 = vrot.slane %v26, %v1392
  %v1394 = vmul.f32 %v1376, %v1381
  %v1395 = vmul.f32 %v1375, %v1385
  %v1396 = vmul.f32 %v1374, %v1389
  %v1397 = vmul.f32 %v1377, %v1393
  %v1399 = vsel %vm83, %v40, 0
  %v1402 = vsel %vm87, %v1394, 0
  %v1405 = vsel %vm87, %v1395, 0
  %v1408 = vsel %vm87, %v1396, 0
  %v1411 = vsel %vm87, %v1397, 0
  %1413 = vmatprep.subr.mxu0 %v1405
  %1414 = vmatpush1.msra.mxu0 %v1402
  %1415 = vmatprep.subr.mxu0 0.0
  %1416 = vmatpush1.msra.mxu0 0.0
  %1417 = vmatprep.subr.mxu0 0.0
  %1418 = vmatpush1.msra.mxu0 0.0
  %1419 = vmatprep.subr.mxu0 0.0
  %1420 = vmatpush1.msra.mxu0 0.0
  %1421 = vmatprep.subr.mxu0 0.0
  %1422 = vmatpush1.msra.mxu0 0.0
  %1423 = vmatprep.subr.mxu0 0.0
  %1424 = vmatpush1.msra.mxu0 0.0
  %1425 = vmatprep.subr.mxu0 0.0
  %1426 = vmatpush1.msra.mxu0 0.0
  %1427 = vmatprep.subr.mxu0 0.0
  %1428 = vmatpush1.msra.mxu0 0.0
  %1429 = vmatprep.subr.mxu0 0.0
  %1430 = vmatpush1.msra.mxu0 0.0
  %1431 = vmatprep.subr.mxu0 0.0
  %1432 = vmatpush1.msra.mxu0 0.0
  %1433 = vmatprep.subr.mxu0 0.0
  %1434 = vmatpush1.msra.mxu0 0.0
  %1435 = vmatprep.subr.mxu0 0.0
  %1436 = vmatpush1.msra.mxu0 0.0
  %1437 = vmatprep.subr.mxu0 0.0
  %1438 = vmatpush1.msra.mxu0 0.0
  %1439 = vmatprep.subr.mxu0 0.0
  %1440 = vmatpush1.msra.mxu0 0.0
  %1441 = vmatprep.subr.mxu0 0.0
  %1442 = vmatpush1.msra.mxu0 0.0
  %1443 = vmatprep.subr.mxu0 0.0
  %1444 = vmatpush1.msra.mxu0 0.0
  %1445 = vmatprep.subr.mxu0 0.0
  %1446 = vmatpush1.msra.mxu0 0.0
  %1447 = vmatprep.subr.mxu0 0.0
  %1448 = vmatpush1.msra.mxu0 0.0
  %1449 = vmatprep.subr.mxu0 0.0
  %1450 = vmatpush1.msra.mxu0 0.0
  %1451 = vmatprep.subr.mxu0 0.0
  %1452 = vmatpush1.msra.mxu0 0.0
  %1453 = vmatprep.subr.mxu0 0.0
  %1454 = vmatpush1.msra.mxu0 0.0
  %1455 = vmatprep.subr.mxu0 0.0
  %1456 = vmatpush1.msra.mxu0 0.0
  %1457 = vmatprep.subr.mxu0 0.0
  %1458 = vmatpush1.msra.mxu0 0.0
  %1459 = vmatprep.subr.mxu0 0.0
  %1460 = vmatpush1.msra.mxu0 0.0
  %1461 = vmatprep.subr.mxu0 0.0
  %1462 = vmatpush1.msra.mxu0 0.0
  %1463 = vmatprep.subr.mxu0 0.0
  %1464 = vmatpush1.msra.mxu0 0.0
  %1465 = vmatprep.subr.mxu0 0.0
  %1466 = vmatpush1.msra.mxu0 0.0
  %1467 = vmatprep.subr.mxu0 0.0
  %1468 = vmatpush1.msra.mxu0 0.0
  %1469 = vmatprep.subr.mxu0 0.0
  %1470 = vmatpush1.msra.mxu0 0.0
  %1471 = vmatprep.subr.mxu0 0.0
  %1472 = vmatpush1.msra.mxu0 0.0
  %1473 = vmatprep.subr.mxu0 0.0
  %1474 = vmatpush1.msra.mxu0 0.0
  %1475 = vmatprep.subr.mxu0 0.0
  %1476 = vmatpush1.msra.mxu0 0.0
  %1477 = vmatprep.mubr.f32.mxu0 0.0
  %1478 = vmatmul.mubr.f32.gmra.mrb[0].mxu0 %v1399
  %v1479 = vpop.f32.mrb[0].mxu0
  %v1480 = vadd.f32 0.0, %v1479
  %v1481 = vpop.f32.mrb[0].mxu0
  %v1482 = vadd.f32 0.0, %v1481
  %1483 = vdwg.mxu0
  %1484 = vmatprep.subr.mxu0 %v1411
  %1485 = vmatpush1.msra.mxu0 %v1408
  %1486 = vmatprep.subr.mxu0 0.0
  %1487 = vmatpush1.msra.mxu0 0.0
  %1488 = vmatprep.subr.mxu0 0.0
  %1489 = vmatpush1.msra.mxu0 0.0
  %1490 = vmatprep.subr.mxu0 0.0
  %1491 = vmatpush1.msra.mxu0 0.0
  %1492 = vmatprep.subr.mxu0 0.0
  %1493 = vmatpush1.msra.mxu0 0.0
  %1494 = vmatprep.subr.mxu0 0.0
  %1495 = vmatpush1.msra.mxu0 0.0
  %1496 = vmatprep.subr.mxu0 0.0
  %1497 = vmatpush1.msra.mxu0 0.0
  %1498 = vmatprep.subr.mxu0 0.0
  %1499 = vmatpush1.msra.mxu0 0.0
  %1500 = vmatprep.subr.mxu0 0.0
  %1501 = vmatpush1.msra.mxu0 0.0
  %1502 = vmatprep.subr.mxu0 0.0
  %1503 = vmatpush1.msra.mxu0 0.0
  %1504 = vmatprep.subr.mxu0 0.0
  %1505 = vmatpush1.msra.mxu0 0.0
  %1506 = vmatprep.subr.mxu0 0.0
  %1507 = vmatpush1.msra.mxu0 0.0
  %1508 = vmatprep.subr.mxu0 0.0
  %1509 = vmatpush1.msra.mxu0 0.0
  %1510 = vmatprep.subr.mxu0 0.0
  %1511 = vmatpush1.msra.mxu0 0.0
  %1512 = vmatprep.subr.mxu0 0.0
  %1513 = vmatpush1.msra.mxu0 0.0
  %1514 = vmatprep.subr.mxu0 0.0
  %1515 = vmatpush1.msra.mxu0 0.0
  %1516 = vmatprep.subr.mxu0 0.0
  %1517 = vmatpush1.msra.mxu0 0.0
  %1518 = vmatprep.subr.mxu0 0.0
  %1519 = vmatpush1.msra.mxu0 0.0
  %1520 = vmatprep.subr.mxu0 0.0
  %1521 = vmatpush1.msra.mxu0 0.0
  %1522 = vmatprep.subr.mxu0 0.0
  %1523 = vmatpush1.msra.mxu0 0.0
  %1524 = vmatprep.subr.mxu0 0.0
  %1525 = vmatpush1.msra.mxu0 0.0
  %1526 = vmatprep.subr.mxu0 0.0
  %1527 = vmatpush1.msra.mxu0 0.0
  %1528 = vmatprep.subr.mxu0 0.0
  %1529 = vmatpush1.msra.mxu0 0.0
  %1530 = vmatprep.subr.mxu0 0.0
  %1531 = vmatpush1.msra.mxu0 0.0
  %1532 = vmatprep.subr.mxu0 0.0
  %1533 = vmatpush1.msra.mxu0 0.0
  %1534 = vmatprep.subr.mxu0 0.0
  %1535 = vmatpush1.msra.mxu0 0.0
  %1536 = vmatprep.subr.mxu0 0.0
  %1537 = vmatpush1.msra.mxu0 0.0
  %1538 = vmatprep.subr.mxu0 0.0
  %1539 = vmatpush1.msra.mxu0 0.0
  %1540 = vmatprep.subr.mxu0 0.0
  %1541 = vmatpush1.msra.mxu0 0.0
  %1542 = vmatprep.subr.mxu0 0.0
  %1543 = vmatpush1.msra.mxu0 0.0
  %1544 = vmatprep.subr.mxu0 0.0
  %1545 = vmatpush1.msra.mxu0 0.0
  %1546 = vmatprep.subr.mxu0 0.0
  %1547 = vmatpush1.msra.mxu0 0.0
  %1548 = vmatprep.mubr.f32.mxu0 0.0
  %1549 = vmatmul.mubr.f32.gmra.mrb[0].mxu0 %v1399
  %v1550 = vpop.f32.mrb[0].mxu0
  %v1551 = vadd.f32 0.0, %v1550
  %v1552 = vpop.f32.mrb[0].mxu0
  %v1553 = vadd.f32 0.0, %v1552
  %1554 = vdwg.mxu0
  %v1555 = vadd.f32 %v1361, %v1480
  %v1556 = vadd.f32 %v1362, %v1482
  %v1557 = vadd.f32 %v1363, %v1551
  %v1558 = vadd.f32 %v1364, %v1553
  %1559 = vrot.lane.b32.xlu0 %v31, 111
  %v1560 = vpop.permute.xlu0 %1559
  %1561 = vrot.lane.b32.xlu0 %v44, 111
  %v1562 = vpop.permute.xlu0 %1561
  %1563 = vrot.lane.b32.xlu0 %v32, 111
  %v1564 = vpop.permute.xlu0 %1563
  %1565 = vrot.lane.b32.xlu0 %v45, 111
  %v1566 = vpop.permute.xlu0 %1565
  %vm1567 = vcmp.lt.s32.totalorder %v57, 111
  %v1568 = vsel %vm1567, %v1564, %v1566
  %v1569 = vsel %vm1567, %v1562, %v1564
  %v1570 = vsel %vm1567, %v1560, %v1562
  %v1571 = vsel %vm1567, %v1566, %v1560
  %v1572 = vlaneseq
  %v1573 = vshrl.u32 %v1572, 7
  %v1574 = vsub.s32 0, %v1573
  %v1575 = vrot.slane %v27, %v1574
  %v1576 = vlaneseq
  %v1577 = vshrl.u32 %v1576, 7
  %v1578 = vsub.s32 0, %v1577
  %v1579 = vrot.slane %v28, %v1578
  %v1580 = vlaneseq
  %v1581 = vshrl.u32 %v1580, 7
  %v1582 = vsub.s32 0, %v1581
  %v1583 = vrot.slane %v29, %v1582
  %v1584 = vlaneseq
  %v1585 = vshrl.u32 %v1584, 7
  %v1586 = vsub.s32 0, %v1585
  %v1587 = vrot.slane %v30, %v1586
  %v1588 = vmul.f32 %v1570, %v1575
  %v1589 = vmul.f32 %v1569, %v1579
  %v1590 = vmul.f32 %v1568, %v1583
  %v1591 = vmul.f32 %v1571, %v1587
  %v1593 = vsel %vm83, %v41, 0
  %v1596 = vsel %vm87, %v1588, 0
  %v1599 = vsel %vm87, %v1589, 0
  %v1602 = vsel %vm87, %v1590, 0
  %v1605 = vsel %vm87, %v1591, 0
  %1607 = vmatprep.subr.mxu0 %v1599
  %1608 = vmatpush1.msra.mxu0 %v1596
  %1609 = vmatprep.subr.mxu0 0.0
  %1610 = vmatpush1.msra.mxu0 0.0
  %1611 = vmatprep.subr.mxu0 0.0
  %1612 = vmatpush1.msra.mxu0 0.0
  %1613 = vmatprep.subr.mxu0 0.0
  %1614 = vmatpush1.msra.mxu0 0.0
  %1615 = vmatprep.subr.mxu0 0.0
  %1616 = vmatpush1.msra.mxu0 0.0
  %1617 = vmatprep.subr.mxu0 0.0
  %1618 = vmatpush1.msra.mxu0 0.0
  %1619 = vmatprep.subr.mxu0 0.0
  %1620 = vmatpush1.msra.mxu0 0.0
  %1621 = vmatprep.subr.mxu0 0.0
  %1622 = vmatpush1.msra.mxu0 0.0
  %1623 = vmatprep.subr.mxu0 0.0
  %1624 = vmatpush1.msra.mxu0 0.0
  %1625 = vmatprep.subr.mxu0 0.0
  %1626 = vmatpush1.msra.mxu0 0.0
  %1627 = vmatprep.subr.mxu0 0.0
  %1628 = vmatpush1.msra.mxu0 0.0
  %1629 = vmatprep.subr.mxu0 0.0
  %1630 = vmatpush1.msra.mxu0 0.0
  %1631 = vmatprep.subr.mxu0 0.0
  %1632 = vmatpush1.msra.mxu0 0.0
  %1633 = vmatprep.subr.mxu0 0.0
  %1634 = vmatpush1.msra.mxu0 0.0
  %1635 = vmatprep.subr.mxu0 0.0
  %1636 = vmatpush1.msra.mxu0 0.0
  %1637 = vmatprep.subr.mxu0 0.0
  %1638 = vmatpush1.msra.mxu0 0.0
  %1639 = vmatprep.subr.mxu0 0.0
  %1640 = vmatpush1.msra.mxu0 0.0
  %1641 = vmatprep.subr.mxu0 0.0
  %1642 = vmatpush1.msra.mxu0 0.0
  %1643 = vmatprep.subr.mxu0 0.0
  %1644 = vmatpush1.msra.mxu0 0.0
  %1645 = vmatprep.subr.mxu0 0.0
  %1646 = vmatpush1.msra.mxu0 0.0
  %1647 = vmatprep.subr.mxu0 0.0
  %1648 = vmatpush1.msra.mxu0 0.0
  %1649 = vmatprep.subr.mxu0 0.0
  %1650 = vmatpush1.msra.mxu0 0.0
  %1651 = vmatprep.subr.mxu0 0.0
  %1652 = vmatpush1.msra.mxu0 0.0
  %1653 = vmatprep.subr.mxu0 0.0
  %1654 = vmatpush1.msra.mxu0 0.0
  %1655 = vmatprep.subr.mxu0 0.0
  %1656 = vmatpush1.msra.mxu0 0.0
  %1657 = vmatprep.subr.mxu0 0.0
  %1658 = vmatpush1.msra.mxu0 0.0
  %1659 = vmatprep.subr.mxu0 0.0
  %1660 = vmatpush1.msra.mxu0 0.0
  %1661 = vmatprep.subr.mxu0 0.0
  %1662 = vmatpush1.msra.mxu0 0.0
  %1663 = vmatprep.subr.mxu0 0.0
  %1664 = vmatpush1.msra.mxu0 0.0
  %1665 = vmatprep.subr.mxu0 0.0
  %1666 = vmatpush1.msra.mxu0 0.0
  %1667 = vmatprep.subr.mxu0 0.0
  %1668 = vmatpush1.msra.mxu0 0.0
  %1669 = vmatprep.subr.mxu0 0.0
  %1670 = vmatpush1.msra.mxu0 0.0
  %1671 = vmatprep.mubr.f32.mxu0 0.0
  %1672 = vmatmul.mubr.f32.gmra.mrb[0].mxu0 %v1593
  %v1673 = vpop.f32.mrb[0].mxu0
  %v1674 = vadd.f32 0.0, %v1673
  %v1675 = vpop.f32.mrb[0].mxu0
  %v1676 = vadd.f32 0.0, %v1675
  %1677 = vdwg.mxu0
  %1678 = vmatprep.subr.mxu0 %v1605
  %1679 = vmatpush1.msra.mxu0 %v1602
  %1680 = vmatprep.subr.mxu0 0.0
  %1681 = vmatpush1.msra.mxu0 0.0
  %1682 = vmatprep.subr.mxu0 0.0
  %1683 = vmatpush1.msra.mxu0 0.0
  %1684 = vmatprep.subr.mxu0 0.0
  %1685 = vmatpush1.msra.mxu0 0.0
  %1686 = vmatprep.subr.mxu0 0.0
  %1687 = vmatpush1.msra.mxu0 0.0
  %1688 = vmatprep.subr.mxu0 0.0
  %1689 = vmatpush1.msra.mxu0 0.0
  %1690 = vmatprep.subr.mxu0 0.0
  %1691 = vmatpush1.msra.mxu0 0.0
  %1692 = vmatprep.subr.mxu0 0.0
  %1693 = vmatpush1.msra.mxu0 0.0
  %1694 = vmatprep.subr.mxu0 0.0
  %1695 = vmatpush1.msra.mxu0 0.0
  %1696 = vmatprep.subr.mxu0 0.0
  %1697 = vmatpush1.msra.mxu0 0.0
  %1698 = vmatprep.subr.mxu0 0.0
  %1699 = vmatpush1.msra.mxu0 0.0
  %1700 = vmatprep.subr.mxu0 0.0
  %1701 = vmatpush1.msra.mxu0 0.0
  %1702 = vmatprep.subr.mxu0 0.0
  %1703 = vmatpush1.msra.mxu0 0.0
  %1704 = vmatprep.subr.mxu0 0.0
  %1705 = vmatpush1.msra.mxu0 0.0
  %1706 = vmatprep.subr.mxu0 0.0
  %1707 = vmatpush1.msra.mxu0 0.0
  %1708 = vmatprep.subr.mxu0 0.0
  %1709 = vmatpush1.msra.mxu0 0.0
  %1710 = vmatprep.subr.mxu0 0.0
  %1711 = vmatpush1.msra.mxu0 0.0
  %1712 = vmatprep.subr.mxu0 0.0
  %1713 = vmatpush1.msra.mxu0 0.0
  %1714 = vmatprep.subr.mxu0 0.0
  %1715 = vmatpush1.msra.mxu0 0.0
  %1716 = vmatprep.subr.mxu0 0.0
  %1717 = vmatpush1.msra.mxu0 0.0
  %1718 = vmatprep.subr.mxu0 0.0
  %1719 = vmatpush1.msra.mxu0 0.0
  %1720 = vmatprep.subr.mxu0 0.0
  %1721 = vmatpush1.msra.mxu0 0.0
  %1722 = vmatprep.subr.mxu0 0.0
  %1723 = vmatpush1.msra.mxu0 0.0
  %1724 = vmatprep.subr.mxu0 0.0
  %1725 = vmatpush1.msra.mxu0 0.0
  %1726 = vmatprep.subr.mxu0 0.0
  %1727 = vmatpush1.msra.mxu0 0.0
  %1728 = vmatprep.subr.mxu0 0.0
  %1729 = vmatpush1.msra.mxu0 0.0
  %1730 = vmatprep.subr.mxu0 0.0
  %1731 = vmatpush1.msra.mxu0 0.0
  %1732 = vmatprep.subr.mxu0 0.0
  %1733 = vmatpush1.msra.mxu0 0.0
  %1734 = vmatprep.subr.mxu0 0.0
  %1735 = vmatpush1.msra.mxu0 0.0
  %1736 = vmatprep.subr.mxu0 0.0
  %1737 = vmatpush1.msra.mxu0 0.0
  %1738 = vmatprep.subr.mxu0 0.0
  %1739 = vmatpush1.msra.mxu0 0.0
  %1740 = vmatprep.subr.mxu0 0.0
  %1741 = vmatpush1.msra.mxu0 0.0
  %1742 = vmatprep.mubr.f32.mxu0 0.0
  %1743 = vmatmul.mubr.f32.gmra.mrb[0].mxu0 %v1593
  %v1744 = vpop.f32.mrb[0].mxu0
  %v1745 = vadd.f32 0.0, %v1744
  %v1746 = vpop.f32.mrb[0].mxu0
  %v1747 = vadd.f32 0.0, %v1746
  %1748 = vdwg.mxu0
  %v1749 = vadd.f32 %v1555, %v1674
  %v1750 = vadd.f32 %v1556, %v1676
  %v1751 = vadd.f32 %v1557, %v1745
  %v1752 = vadd.f32 %v1558, %v1747
  %v1753 = vld [vmem:[%s3] sm:$0xff]
  %1755 = vset.pattern.permute.xlu0 0
  %1756 = vperm.xlu0 %1755, %v1753
  %v1757 = vpop.permute.xlu0 %1756
  %v1759 = vadd.f32 %v1749, %v1757
  %v1760 = vadd.f32 %v1750, %v1757
  %v1761 = vadd.f32 %v1751, %v1757
  %v1762 = vadd.f32 %v1752, %v1757
  %v1763 = vmax.f32 %v1759, 0.0
  %v1764 = vmax.f32 %v1760, 0.0
  %v1765 = vmax.f32 %v1761, 0.0
  %v1766 = vmax.f32 %v1762, 0.0
  %v1767 = vld [vmem:[%s4] sm:$0xff]
  %v1768 = vld [vmem:[%s4 + $0x8] sm:$0xff]
  %v1769 = vld [vmem:[%s4 + $0x10] sm:$0xff]
  %v1770 = vld [vmem:[%s4 + $0x18] sm:$0xff]
  %v1771 = vld [vmem:[%s4 + $0x20] sm:$0xff]
  %v1772 = vld [vmem:[%s4 + $0x28] sm:$0xff]
  %v1773 = vld [vmem:[%s4 + $0x30] sm:$0xff]
  %v1774 = vld [vmem:[%s4 + $0x38] sm:$0xff]
  %v1775 = vld [vmem:[%s4 + $0x40] sm:$0xff]
  %1776 = vrot.lane.b32.xlu0 %v1763, 17
  %v1777 = vpop.permute.xlu0 %1776
  %1778 = vrot.lane.b32.xlu0 %v1764, 17
  %v1779 = vpop.permute.xlu0 %1778
  %1780 = vrot.lane.b32.xlu0 %v1765, 17
  %v1781 = vpop.permute.xlu0 %1780
  %1782 = vrot.lane.b32.xlu0 %v1766, 17
  %v1783 = vpop.permute.xlu0 %1782
  %v1784 = vsel %vm58, %v1781, %v1783
  %v1785 = vsel %vm58, %v1779, %v1781
  %v1786 = vsel %vm58, %v1777, %v1779
  %v1787 = vsel %vm58, %v1783, %v1777
  %v1788 = vmul.f32 %v1787, %v66
  %v1789 = vmul.f32 %v1786, %v70
  %v1790 = vmul.f32 %v1785, %v74
  %v1791 = vmul.f32 %v1784, %v78
  %vm1792 = vcmask 64512
  %v1794 = vsel %vm1792, %v1767, 0
  %1796 = vmatprep.subr.mxu0 %v1789
  %1797 = vmatpush1.msra.mxu0 %v1788
  %1798 = vmatprep.subr.mxu0 0.0
  %1799 = vmatpush1.msra.mxu0 0.0
  %1800 = vmatprep.subr.mxu0 0.0
  %1801 = vmatpush1.msra.mxu0 0.0
  %1802 = vmatprep.subr.mxu0 0.0
  %1803 = vmatpush1.msra.mxu0 0.0
  %1804 = vmatprep.subr.mxu0 0.0
  %1805 = vmatpush1.msra.mxu0 0.0
  %1806 = vmatprep.subr.mxu0 0.0
  %1807 = vmatpush1.msra.mxu0 0.0
  %1808 = vmatprep.subr.mxu0 0.0
  %1809 = vmatpush1.msra.mxu0 0.0
  %1810 = vmatprep.subr.mxu0 0.0
  %1811 = vmatpush1.msra.mxu0 0.0
  %1812 = vmatprep.subr.mxu0 0.0
  %1813 = vmatpush1.msra.mxu0 0.0
  %1814 = vmatprep.subr.mxu0 0.0
  %1815 = vmatpush1.msra.mxu0 0.0
  %1816 = vmatprep.subr.mxu0 0.0
  %1817 = vmatpush1.msra.mxu0 0.0
  %1818 = vmatprep.subr.mxu0 0.0
  %1819 = vmatpush1.msra.mxu0 0.0
  %1820 = vmatprep.subr.mxu0 0.0
  %1821 = vmatpush1.msra.mxu0 0.0
  %1822 = vmatprep.subr.mxu0 0.0
  %1823 = vmatpush1.msra.mxu0 0.0
  %1824 = vmatprep.subr.mxu0 0.0
  %1825 = vmatpush1.msra.mxu0 0.0
  %1826 = vmatprep.subr.mxu0 0.0
  %1827 = vmatpush1.msra.mxu0 0.0
  %1828 = vmatprep.subr.mxu0 0.0
  %1829 = vmatpush1.msra.mxu0 0.0
  %1830 = vmatprep.subr.mxu0 0.0
  %1831 = vmatpush1.msra.mxu0 0.0
  %1832 = vmatprep.subr.mxu0 0.0
  %1833 = vmatpush1.msra.mxu0 0.0
  %1834 = vmatprep.subr.mxu0 0.0
  %1835 = vmatpush1.msra.mxu0 0.0
  %1836 = vmatprep.subr.mxu0 0.0
  %1837 = vmatpush1.msra.mxu0 0.0
  %1838 = vmatprep.subr.mxu0 0.0
  %1839 = vmatpush1.msra.mxu0 0.0
  %1840 = vmatprep.subr.mxu0 0.0
  %1841 = vmatpush1.msra.mxu0 0.0
  %1842 = vmatprep.subr.mxu0 0.0
  %1843 = vmatpush1.msra.mxu0 0.0
  %1844 = vmatprep.subr.mxu0 0.0
  %1845 = vmatpush1.msra.mxu0 0.0
  %1846 = vmatprep.subr.mxu0 0.0
  %1847 = vmatpush1.msra.mxu0 0.0
  %1848 = vmatprep.subr.mxu0 0.0
  %1849 = vmatpush1.msra.mxu0 0.0
  %1850 = vmatprep.subr.mxu0 0.0
  %1851 = vmatpush1.msra.mxu0 0.0
  %1852 = vmatprep.subr.mxu0 0.0
  %1853 = vmatpush1.msra.mxu0 0.0
  %1854 = vmatprep.subr.mxu0 0.0
  %1855 = vmatpush1.msra.mxu0 0.0
  %1856 = vmatprep.subr.mxu0 0.0
  %1857 = vmatpush1.msra.mxu0 0.0
  %1858 = vmatprep.subr.mxu0 0.0
  %1859 = vmatpush1.msra.mxu0 0.0
  %1860 = vmatprep.mubr.f32.mxu0 0.0
  %1861 = vmatmul.mubr.f32.gmra.mrb[0].mxu0 %v1794
  %v1862 = vpop.f32.mrb[0].mxu0
  %v1863 = vadd.f32 0.0, %v1862
  %v1864 = vpop.f32.mrb[0].mxu0
  %v1865 = vadd.f32 0.0, %v1864
  %1866 = vdwg.mxu0
  %1867 = vmatprep.subr.mxu0 %v1791
  %1868 = vmatpush1.msra.mxu0 %v1790
  %1869 = vmatprep.subr.mxu0 0.0
  %1870 = vmatpush1.msra.mxu0 0.0
  %1871 = vmatprep.subr.mxu0 0.0
  %1872 = vmatpush1.msra.mxu0 0.0
  %1873 = vmatprep.subr.mxu0 0.0
  %1874 = vmatpush1.msra.mxu0 0.0
  %1875 = vmatprep.subr.mxu0 0.0
  %1876 = vmatpush1.msra.mxu0 0.0
  %1877 = vmatprep.subr.mxu0 0.0
  %1878 = vmatpush1.msra.mxu0 0.0
  %1879 = vmatprep.subr.mxu0 0.0
  %1880 = vmatpush1.msra.mxu0 0.0
  %1881 = vmatprep.subr.mxu0 0.0
  %1882 = vmatpush1.msra.mxu0 0.0
  %1883 = vmatprep.subr.mxu0 0.0
  %1884 = vmatpush1.msra.mxu0 0.0
  %1885 = vmatprep.subr.mxu0 0.0
  %1886 = vmatpush1.msra.mxu0 0.0
  %1887 = vmatprep.subr.mxu0 0.0
  %1888 = vmatpush1.msra.mxu0 0.0
  %1889 = vmatprep.subr.mxu0 0.0
  %1890 = vmatpush1.msra.mxu0 0.0
  %1891 = vmatprep.subr.mxu0 0.0
  %1892 = vmatpush1.msra.mxu0 0.0
  %1893 = vmatprep.subr.mxu0 0.0
  %1894 = vmatpush1.msra.mxu0 0.0
  %1895 = vmatprep.subr.mxu0 0.0
  %1896 = vmatpush1.msra.mxu0 0.0
  %1897 = vmatprep.subr.mxu0 0.0
  %1898 = vmatpush1.msra.mxu0 0.0
  %1899 = vmatprep.subr.mxu0 0.0
  %1900 = vmatpush1.msra.mxu0 0.0
  %1901 = vmatprep.subr.mxu0 0.0
  %1902 = vmatpush1.msra.mxu0 0.0
  %1903 = vmatprep.subr.mxu0 0.0
  %1904 = vmatpush1.msra.mxu0 0.0
  %1905 = vmatprep.subr.mxu0 0.0
  %1906 = vmatpush1.msra.mxu0 0.0
  %1907 = vmatprep.subr.mxu0 0.0
  %1908 = vmatpush1.msra.mxu0 0.0
  %1909 = vmatprep.subr.mxu0 0.0
  %1910 = vmatpush1.msra.mxu0 0.0
  %1911 = vmatprep.subr.mxu0 0.0
  %1912 = vmatpush1.msra.mxu0 0.0
  %1913 = vmatprep.subr.mxu0 0.0
  %1914 = vmatpush1.msra.mxu0 0.0
  %1915 = vmatprep.subr.mxu0 0.0
  %1916 = vmatpush1.msra.mxu0 0.0
  %1917 = vmatprep.subr.mxu0 0.0
  %1918 = vmatpush1.msra.mxu0 0.0
  %1919 = vmatprep.subr.mxu0 0.0
  %1920 = vmatpush1.msra.mxu0 0.0
  %1921 = vmatprep.subr.mxu0 0.0
  %1922 = vmatpush1.msra.mxu0 0.0
  %1923 = vmatprep.subr.mxu0 0.0
  %1924 = vmatpush1.msra.mxu0 0.0
  %1925 = vmatprep.subr.mxu0 0.0
  %1926 = vmatpush1.msra.mxu0 0.0
  %1927 = vmatprep.subr.mxu0 0.0
  %1928 = vmatpush1.msra.mxu0 0.0
  %1929 = vmatprep.subr.mxu0 0.0
  %1930 = vmatpush1.msra.mxu0 0.0
  %1931 = vmatprep.mubr.f32.mxu0 0.0
  %1932 = vmatmul.mubr.f32.gmra.mrb[0].mxu0 %v1794
  %v1933 = vpop.f32.mrb[0].mxu0
  %v1934 = vadd.f32 0.0, %v1933
  %v1935 = vpop.f32.mrb[0].mxu0
  %v1936 = vadd.f32 0.0, %v1935
  %1937 = vdwg.mxu0
  %v1939 = vsel %vm1792, %v1771, 0
  %1941 = vmatprep.subr.mxu0 %v1764
  %1942 = vmatpush1.msra.mxu0 %v1763
  %1943 = vmatprep.subr.mxu0 0.0
  %1944 = vmatpush1.msra.mxu0 0.0
  %1945 = vmatprep.subr.mxu0 0.0
  %1946 = vmatpush1.msra.mxu0 0.0
  %1947 = vmatprep.subr.mxu0 0.0
  %1948 = vmatpush1.msra.mxu0 0.0
  %1949 = vmatprep.subr.mxu0 0.0
  %1950 = vmatpush1.msra.mxu0 0.0
  %1951 = vmatprep.subr.mxu0 0.0
  %1952 = vmatpush1.msra.mxu0 0.0
  %1953 = vmatprep.subr.mxu0 0.0
  %1954 = vmatpush1.msra.mxu0 0.0
  %1955 = vmatprep.subr.mxu0 0.0
  %1956 = vmatpush1.msra.mxu0 0.0
  %1957 = vmatprep.subr.mxu0 0.0
  %1958 = vmatpush1.msra.mxu0 0.0
  %1959 = vmatprep.subr.mxu0 0.0
  %1960 = vmatpush1.msra.mxu0 0.0
  %1961 = vmatprep.subr.mxu0 0.0
  %1962 = vmatpush1.msra.mxu0 0.0
  %1963 = vmatprep.subr.mxu0 0.0
  %1964 = vmatpush1.msra.mxu0 0.0
  %1965 = vmatprep.subr.mxu0 0.0
  %1966 = vmatpush1.msra.mxu0 0.0
  %1967 = vmatprep.subr.mxu0 0.0
  %1968 = vmatpush1.msra.mxu0 0.0
  %1969 = vmatprep.subr.mxu0 0.0
  %1970 = vmatpush1.msra.mxu0 0.0
  %1971 = vmatprep.subr.mxu0 0.0
  %1972 = vmatpush1.msra.mxu0 0.0
  %1973 = vmatprep.subr.mxu0 0.0
  %1974 = vmatpush1.msra.mxu0 0.0
  %1975 = vmatprep.subr.mxu0 0.0
  %1976 = vmatpush1.msra.mxu0 0.0
  %1977 = vmatprep.subr.mxu0 0.0
  %1978 = vmatpush1.msra.mxu0 0.0
  %1979 = vmatprep.subr.mxu0 0.0
  %1980 = vmatpush1.msra.mxu0 0.0
  %1981 = vmatprep.subr.mxu0 0.0
  %1982 = vmatpush1.msra.mxu0 0.0
  %1983 = vmatprep.subr.mxu0 0.0
  %1984 = vmatpush1.msra.mxu0 0.0
  %1985 = vmatprep.subr.mxu0 0.0
  %1986 = vmatpush1.msra.mxu0 0.0
  %1987 = vmatprep.subr.mxu0 0.0
  %1988 = vmatpush1.msra.mxu0 0.0
  %1989 = vmatprep.subr.mxu0 0.0
  %1990 = vmatpush1.msra.mxu0 0.0
  %1991 = vmatprep.subr.mxu0 0.0
  %1992 = vmatpush1.msra.mxu0 0.0
  %1993 = vmatprep.subr.mxu0 0.0
  %1994 = vmatpush1.msra.mxu0 0.0
  %1995 = vmatprep.subr.mxu0 0.0
  %1996 = vmatpush1.msra.mxu0 0.0
  %1997 = vmatprep.subr.mxu0 0.0
  %1998 = vmatpush1.msra.mxu0 0.0
  %1999 = vmatprep.subr.mxu0 0.0
  %2000 = vmatpush1.msra.mxu0 0.0
  %2001 = vmatprep.subr.mxu0 0.0
  %2002 = vmatpush1.msra.mxu0 0.0
  %2003 = vmatprep.subr.mxu0 0.0
  %2004 = vmatpush1.msra.mxu0 0.0
  %2005 = vmatprep.mubr.f32.mxu0 0.0
  %2006 = vmatmul.mubr.f32.gmra.mrb[0].mxu0 %v1939
  %v2007 = vpop.f32.mrb[0].mxu0
  %v2008 = vadd.f32 %v1863, %v2007
  %v2009 = vpop.f32.mrb[0].mxu0
  %v2010 = vadd.f32 %v1865, %v2009
  %2011 = vdwg.mxu0
  %2012 = vmatprep.subr.mxu0 %v1766
  %2013 = vmatpush1.msra.mxu0 %v1765
  %2014 = vmatprep.subr.mxu0 0.0
  %2015 = vmatpush1.msra.mxu0 0.0
  %2016 = vmatprep.subr.mxu0 0.0
  %2017 = vmatpush1.msra.mxu0 0.0
  %2018 = vmatprep.subr.mxu0 0.0
  %2019 = vmatpush1.msra.mxu0 0.0
  %2020 = vmatprep.subr.mxu0 0.0
  %2021 = vmatpush1.msra.mxu0 0.0
  %2022 = vmatprep.subr.mxu0 0.0
  %2023 = vmatpush1.msra.mxu0 0.0
  %2024 = vmatprep.subr.mxu0 0.0
  %2025 = vmatpush1.msra.mxu0 0.0
  %2026 = vmatprep.subr.mxu0 0.0
  %2027 = vmatpush1.msra.mxu0 0.0
  %2028 = vmatprep.subr.mxu0 0.0
  %2029 = vmatpush1.msra.mxu0 0.0
  %2030 = vmatprep.subr.mxu0 0.0
  %2031 = vmatpush1.msra.mxu0 0.0
  %2032 = vmatprep.subr.mxu0 0.0
  %2033 = vmatpush1.msra.mxu0 0.0
  %2034 = vmatprep.subr.mxu0 0.0
  %2035 = vmatpush1.msra.mxu0 0.0
  %2036 = vmatprep.subr.mxu0 0.0
  %2037 = vmatpush1.msra.mxu0 0.0
  %2038 = vmatprep.subr.mxu0 0.0
  %2039 = vmatpush1.msra.mxu0 0.0
  %2040 = vmatprep.subr.mxu0 0.0
  %2041 = vmatpush1.msra.mxu0 0.0
  %2042 = vmatprep.subr.mxu0 0.0
  %2043 = vmatpush1.msra.mxu0 0.0
  %2044 = vmatprep.subr.mxu0 0.0
  %2045 = vmatpush1.msra.mxu0 0.0
  %2046 = vmatprep.subr.mxu0 0.0
  %2047 = vmatpush1.msra.mxu0 0.0
  %2048 = vmatprep.subr.mxu0 0.0
  %2049 = vmatpush1.msra.mxu0 0.0
  %2050 = vmatprep.subr.mxu0 0.0
  %2051 = vmatpush1.msra.mxu0 0.0
  %2052 = vmatprep.subr.mxu0 0.0
  %2053 = vmatpush1.msra.mxu0 0.0
  %2054 = vmatprep.subr.mxu0 0.0
  %2055 = vmatpush1.msra.mxu0 0.0
  %2056 = vmatprep.subr.mxu0 0.0
  %2057 = vmatpush1.msra.mxu0 0.0
  %2058 = vmatprep.subr.mxu0 0.0
  %2059 = vmatpush1.msra.mxu0 0.0
  %2060 = vmatprep.subr.mxu0 0.0
  %2061 = vmatpush1.msra.mxu0 0.0
  %2062 = vmatprep.subr.mxu0 0.0
  %2063 = vmatpush1.msra.mxu0 0.0
  %2064 = vmatprep.subr.mxu0 0.0
  %2065 = vmatpush1.msra.mxu0 0.0
  %2066 = vmatprep.subr.mxu0 0.0
  %2067 = vmatpush1.msra.mxu0 0.0
  %2068 = vmatprep.subr.mxu0 0.0
  %2069 = vmatpush1.msra.mxu0 0.0
  %2070 = vmatprep.subr.mxu0 0.0
  %2071 = vmatpush1.msra.mxu0 0.0
  %2072 = vmatprep.subr.mxu0 0.0
  %2073 = vmatpush1.msra.mxu0 0.0
  %2074 = vmatprep.subr.mxu0 0.0
  %2075 = vmatpush1.msra.mxu0 0.0
  %2076 = vmatprep.mubr.f32.mxu0 0.0
  %2077 = vmatmul.mubr.f32.gmra.mrb[0].mxu0 %v1939
  %v2078 = vpop.f32.mrb[0].mxu0
  %v2079 = vadd.f32 %v1934, %v2078
  %v2080 = vpop.f32.mrb[0].mxu0
  %v2081 = vadd.f32 %v1936, %v2080
  %2082 = vdwg.mxu0
  %2083 = vrot.lane.b32.xlu0 %v1763, 16
  %v2084 = vpop.permute.xlu0 %2083
  %2085 = vrot.lane.b32.xlu0 %v1764, 16
  %v2086 = vpop.permute.xlu0 %2085
  %2087 = vrot.lane.b32.xlu0 %v1765, 16
  %v2088 = vpop.permute.xlu0 %2087
  %2089 = vrot.lane.b32.xlu0 %v1766, 16
  %v2090 = vpop.permute.xlu0 %2089
  %v2091 = vsel %vm403, %v2088, %v2090
  %v2092 = vsel %vm403, %v2086, %v2088
  %v2093 = vsel %vm403, %v2084, %v2086
  %v2094 = vsel %vm403, %v2090, %v2084
  %v2095 = vmul.f32 %v2094, %v411
  %v2096 = vmul.f32 %v2093, %v415
  %v2097 = vmul.f32 %v2092, %v419
  %v2098 = vmul.f32 %v2091, %v423
  %v2100 = vsel %vm1792, %v1768, 0
  %2102 = vmatprep.subr.mxu0 %v2096
  %2103 = vmatpush1.msra.mxu0 %v2095
  %2104 = vmatprep.subr.mxu0 0.0
  %2105 = vmatpush1.msra.mxu0 0.0
  %2106 = vmatprep.subr.mxu0 0.0
  %2107 = vmatpush1.msra.mxu0 0.0
  %2108 = vmatprep.subr.mxu0 0.0
  %2109 = vmatpush1.msra.mxu0 0.0
  %2110 = vmatprep.subr.mxu0 0.0
  %2111 = vmatpush1.msra.mxu0 0.0
  %2112 = vmatprep.subr.mxu0 0.0
  %2113 = vmatpush1.msra.mxu0 0.0
  %2114 = vmatprep.subr.mxu0 0.0
  %2115 = vmatpush1.msra.mxu0 0.0
  %2116 = vmatprep.subr.mxu0 0.0
  %2117 = vmatpush1.msra.mxu0 0.0
  %2118 = vmatprep.subr.mxu0 0.0
  %2119 = vmatpush1.msra.mxu0 0.0
  %2120 = vmatprep.subr.mxu0 0.0
  %2121 = vmatpush1.msra.mxu0 0.0
  %2122 = vmatprep.subr.mxu0 0.0
  %2123 = vmatpush1.msra.mxu0 0.0
  %2124 = vmatprep.subr.mxu0 0.0
  %2125 = vmatpush1.msra.mxu0 0.0
  %2126 = vmatprep.subr.mxu0 0.0
  %2127 = vmatpush1.msra.mxu0 0.0
  %2128 = vmatprep.subr.mxu0 0.0
  %2129 = vmatpush1.msra.mxu0 0.0
  %2130 = vmatprep.subr.mxu0 0.0
  %2131 = vmatpush1.msra.mxu0 0.0
  %2132 = vmatprep.subr.mxu0 0.0
  %2133 = vmatpush1.msra.mxu0 0.0
  %2134 = vmatprep.subr.mxu0 0.0
  %2135 = vmatpush1.msra.mxu0 0.0
  %2136 = vmatprep.subr.mxu0 0.0
  %2137 = vmatpush1.msra.mxu0 0.0
  %2138 = vmatprep.subr.mxu0 0.0
  %2139 = vmatpush1.msra.mxu0 0.0
  %2140 = vmatprep.subr.mxu0 0.0
  %2141 = vmatpush1.msra.mxu0 0.0
  %2142 = vmatprep.subr.mxu0 0.0
  %2143 = vmatpush1.msra.mxu0 0.0
  %2144 = vmatprep.subr.mxu0 0.0
  %2145 = vmatpush1.msra.mxu0 0.0
  %2146 = vmatprep.subr.mxu0 0.0
  %2147 = vmatpush1.msra.mxu0 0.0
  %2148 = vmatprep.subr.mxu0 0.0
  %2149 = vmatpush1.msra.mxu0 0.0
  %2150 = vmatprep.subr.mxu0 0.0
  %2151 = vmatpush1.msra.mxu0 0.0
  %2152 = vmatprep.subr.mxu0 0.0
  %2153 = vmatpush1.msra.mxu0 0.0
  %2154 = vmatprep.subr.mxu0 0.0
  %2155 = vmatpush1.msra.mxu0 0.0
  %2156 = vmatprep.subr.mxu0 0.0
  %2157 = vmatpush1.msra.mxu0 0.0
  %2158 = vmatprep.subr.mxu0 0.0
  %2159 = vmatpush1.msra.mxu0 0.0
  %2160 = vmatprep.subr.mxu0 0.0
  %2161 = vmatpush1.msra.mxu0 0.0
  %2162 = vmatprep.subr.mxu0 0.0
  %2163 = vmatpush1.msra.mxu0 0.0
  %2164 = vmatprep.subr.mxu0 0.0
  %2165 = vmatpush1.msra.mxu0 0.0
  %2166 = vmatprep.mubr.f32.mxu0 0.0
  %2167 = vmatmul.mubr.f32.gmra.mrb[0].mxu0 %v2100
  %v2168 = vpop.f32.mrb[0].mxu0
  %v2169 = vadd.f32 0.0, %v2168
  %v2170 = vpop.f32.mrb[0].mxu0
  %v2171 = vadd.f32 0.0, %v2170
  %2172 = vdwg.mxu0
  %2173 = vmatprep.subr.mxu0 %v2098
  %2174 = vmatpush1.msra.mxu0 %v2097
  %2175 = vmatprep.subr.mxu0 0.0
  %2176 = vmatpush1.msra.mxu0 0.0
  %2177 = vmatprep.subr.mxu0 0.0
  %2178 = vmatpush1.msra.mxu0 0.0
  %2179 = vmatprep.subr.mxu0 0.0
  %2180 = vmatpush1.msra.mxu0 0.0
  %2181 = vmatprep.subr.mxu0 0.0
  %2182 = vmatpush1.msra.mxu0 0.0
  %2183 = vmatprep.subr.mxu0 0.0
  %2184 = vmatpush1.msra.mxu0 0.0
  %2185 = vmatprep.subr.mxu0 0.0
  %2186 = vmatpush1.msra.mxu0 0.0
  %2187 = vmatprep.subr.mxu0 0.0
  %2188 = vmatpush1.msra.mxu0 0.0
  %2189 = vmatprep.subr.mxu0 0.0
  %2190 = vmatpush1.msra.mxu0 0.0
  %2191 = vmatprep.subr.mxu0 0.0
  %2192 = vmatpush1.msra.mxu0 0.0
  %2193 = vmatprep.subr.mxu0 0.0
  %2194 = vmatpush1.msra.mxu0 0.0
  %2195 = vmatprep.subr.mxu0 0.0
  %2196 = vmatpush1.msra.mxu0 0.0
  %2197 = vmatprep.subr.mxu0 0.0
  %2198 = vmatpush1.msra.mxu0 0.0
  %2199 = vmatprep.subr.mxu0 0.0
  %2200 = vmatpush1.msra.mxu0 0.0
  %2201 = vmatprep.subr.mxu0 0.0
  %2202 = vmatpush1.msra.mxu0 0.0
  %2203 = vmatprep.subr.mxu0 0.0
  %2204 = vmatpush1.msra.mxu0 0.0
  %2205 = vmatprep.subr.mxu0 0.0
  %2206 = vmatpush1.msra.mxu0 0.0
  %2207 = vmatprep.subr.mxu0 0.0
  %2208 = vmatpush1.msra.mxu0 0.0
  %2209 = vmatprep.subr.mxu0 0.0
  %2210 = vmatpush1.msra.mxu0 0.0
  %2211 = vmatprep.subr.mxu0 0.0
  %2212 = vmatpush1.msra.mxu0 0.0
  %2213 = vmatprep.subr.mxu0 0.0
  %2214 = vmatpush1.msra.mxu0 0.0
  %2215 = vmatprep.subr.mxu0 0.0
  %2216 = vmatpush1.msra.mxu0 0.0
  %2217 = vmatprep.subr.mxu0 0.0
  %2218 = vmatpush1.msra.mxu0 0.0
  %2219 = vmatprep.subr.mxu0 0.0
  %2220 = vmatpush1.msra.mxu0 0.0
  %2221 = vmatprep.subr.mxu0 0.0
  %2222 = vmatpush1.msra.mxu0 0.0
  %2223 = vmatprep.subr.mxu0 0.0
  %2224 = vmatpush1.msra.mxu0 0.0
  %2225 = vmatprep.subr.mxu0 0.0
  %2226 = vmatpush1.msra.mxu0 0.0
  %2227 = vmatprep.subr.mxu0 0.0
  %2228 = vmatpush1.msra.mxu0 0.0
  %2229 = vmatprep.subr.mxu0 0.0
  %2230 = vmatpush1.msra.mxu0 0.0
  %2231 = vmatprep.subr.mxu0 0.0
  %2232 = vmatpush1.msra.mxu0 0.0
  %2233 = vmatprep.subr.mxu0 0.0
  %2234 = vmatpush1.msra.mxu0 0.0
  %2235 = vmatprep.subr.mxu0 0.0
  %2236 = vmatpush1.msra.mxu0 0.0
  %2237 = vmatprep.mubr.f32.mxu0 0.0
  %2238 = vmatmul.mubr.f32.gmra.mrb[0].mxu0 %v2100
  %v2239 = vpop.f32.mrb[0].mxu0
  %v2240 = vadd.f32 0.0, %v2239
  %v2241 = vpop.f32.mrb[0].mxu0
  %v2242 = vadd.f32 0.0, %v2241
  %2243 = vdwg.mxu0
  %v2244 = vadd.f32 %v2008, %v2169
  %v2245 = vadd.f32 %v2010, %v2171
  %v2246 = vadd.f32 %v2079, %v2240
  %v2247 = vadd.f32 %v2081, %v2242
  %2248 = vrot.lane.b32.xlu0 %v1763, 15
  %v2249 = vpop.permute.xlu0 %2248
  %2250 = vrot.lane.b32.xlu0 %v1764, 15
  %v2251 = vpop.permute.xlu0 %2250
  %2252 = vrot.lane.b32.xlu0 %v1765, 15
  %v2253 = vpop.permute.xlu0 %2252
  %2254 = vrot.lane.b32.xlu0 %v1766, 15
  %v2255 = vpop.permute.xlu0 %2254
  %v2256 = vsel %vm597, %v2253, %v2255
  %v2257 = vsel %vm597, %v2251, %v2253
  %v2258 = vsel %vm597, %v2249, %v2251
  %v2259 = vsel %vm597, %v2255, %v2249
  %v2260 = vmul.f32 %v2259, %v605
  %v2261 = vmul.f32 %v2258, %v609
  %v2262 = vmul.f32 %v2257, %v613
  %v2263 = vmul.f32 %v2256, %v617
  %v2265 = vsel %vm1792, %v1769, 0
  %2267 = vmatprep.subr.mxu0 %v2261
  %2268 = vmatpush1.msra.mxu0 %v2260
  %2269 = vmatprep.subr.mxu0 0.0
  %2270 = vmatpush1.msra.mxu0 0.0
  %2271 = vmatprep.subr.mxu0 0.0
  %2272 = vmatpush1.msra.mxu0 0.0
  %2273 = vmatprep.subr.mxu0 0.0
  %2274 = vmatpush1.msra.mxu0 0.0
  %2275 = vmatprep.subr.mxu0 0.0
  %2276 = vmatpush1.msra.mxu0 0.0
  %2277 = vmatprep.subr.mxu0 0.0
  %2278 = vmatpush1.msra.mxu0 0.0
  %2279 = vmatprep.subr.mxu0 0.0
  %2280 = vmatpush1.msra.mxu0 0.0
  %2281 = vmatprep.subr.mxu0 0.0
  %2282 = vmatpush1.msra.mxu0 0.0
  %2283 = vmatprep.subr.mxu0 0.0
  %2284 = vmatpush1.msra.mxu0 0.0
  %2285 = vmatprep.subr.mxu0 0.0
  %2286 = vmatpush1.msra.mxu0 0.0
  %2287 = vmatprep.subr.mxu0 0.0
  %2288 = vmatpush1.msra.mxu0 0.0
  %2289 = vmatprep.subr.mxu0 0.0
  %2290 = vmatpush1.msra.mxu0 0.0
  %2291 = vmatprep.subr.mxu0 0.0
  %2292 = vmatpush1.msra.mxu0 0.0
  %2293 = vmatprep.subr.mxu0 0.0
  %2294 = vmatpush1.msra.mxu0 0.0
  %2295 = vmatprep.subr.mxu0 0.0
  %2296 = vmatpush1.msra.mxu0 0.0
  %2297 = vmatprep.subr.mxu0 0.0
  %2298 = vmatpush1.msra.mxu0 0.0
  %2299 = vmatprep.subr.mxu0 0.0
  %2300 = vmatpush1.msra.mxu0 0.0
  %2301 = vmatprep.subr.mxu0 0.0
  %2302 = vmatpush1.msra.mxu0 0.0
  %2303 = vmatprep.subr.mxu0 0.0
  %2304 = vmatpush1.msra.mxu0 0.0
  %2305 = vmatprep.subr.mxu0 0.0
  %2306 = vmatpush1.msra.mxu0 0.0
  %2307 = vmatprep.subr.mxu0 0.0
  %2308 = vmatpush1.msra.mxu0 0.0
  %2309 = vmatprep.subr.mxu0 0.0
  %2310 = vmatpush1.msra.mxu0 0.0
  %2311 = vmatprep.subr.mxu0 0.0
  %2312 = vmatpush1.msra.mxu0 0.0
  %2313 = vmatprep.subr.mxu0 0.0
  %2314 = vmatpush1.msra.mxu0 0.0
  %2315 = vmatprep.subr.mxu0 0.0
  %2316 = vmatpush1.msra.mxu0 0.0
  %2317 = vmatprep.subr.mxu0 0.0
  %2318 = vmatpush1.msra.mxu0 0.0
  %2319 = vmatprep.subr.mxu0 0.0
  %2320 = vmatpush1.msra.mxu0 0.0
  %2321 = vmatprep.subr.mxu0 0.0
  %2322 = vmatpush1.msra.mxu0 0.0
  %2323 = vmatprep.subr.mxu0 0.0
  %2324 = vmatpush1.msra.mxu0 0.0
  %2325 = vmatprep.subr.mxu0 0.0
  %2326 = vmatpush1.msra.mxu0 0.0
  %2327 = vmatprep.subr.mxu0 0.0
  %2328 = vmatpush1.msra.mxu0 0.0
  %2329 = vmatprep.subr.mxu0 0.0
  %2330 = vmatpush1.msra.mxu0 0.0
  %2331 = vmatprep.mubr.f32.mxu0 0.0
  %2332 = vmatmul.mubr.f32.gmra.mrb[0].mxu0 %v2265
  %v2333 = vpop.f32.mrb[0].mxu0
  %v2334 = vadd.f32 0.0, %v2333
  %v2335 = vpop.f32.mrb[0].mxu0
  %v2336 = vadd.f32 0.0, %v2335
  %2337 = vdwg.mxu0
  %2338 = vmatprep.subr.mxu0 %v2263
  %2339 = vmatpush1.msra.mxu0 %v2262
  %2340 = vmatprep.subr.mxu0 0.0
  %2341 = vmatpush1.msra.mxu0 0.0
  %2342 = vmatprep.subr.mxu0 0.0
  %2343 = vmatpush1.msra.mxu0 0.0
  %2344 = vmatprep.subr.mxu0 0.0
  %2345 = vmatpush1.msra.mxu0 0.0
  %2346 = vmatprep.subr.mxu0 0.0
  %2347 = vmatpush1.msra.mxu0 0.0
  %2348 = vmatprep.subr.mxu0 0.0
  %2349 = vmatpush1.msra.mxu0 0.0
  %2350 = vmatprep.subr.mxu0 0.0
  %2351 = vmatpush1.msra.mxu0 0.0
  %2352 = vmatprep.subr.mxu0 0.0
  %2353 = vmatpush1.msra.mxu0 0.0
  %2354 = vmatprep.subr.mxu0 0.0
  %2355 = vmatpush1.msra.mxu0 0.0
  %2356 = vmatprep.subr.mxu0 0.0
  %2357 = vmatpush1.msra.mxu0 0.0
  %2358 = vmatprep.subr.mxu0 0.0
  %2359 = vmatpush1.msra.mxu0 0.0
  %2360 = vmatprep.subr.mxu0 0.0
  %2361 = vmatpush1.msra.mxu0 0.0
  %2362 = vmatprep.subr.mxu0 0.0
  %2363 = vmatpush1.msra.mxu0 0.0
  %2364 = vmatprep.subr.mxu0 0.0
  %2365 = vmatpush1.msra.mxu0 0.0
  %2366 = vmatprep.subr.mxu0 0.0
  %2367 = vmatpush1.msra.mxu0 0.0
  %2368 = vmatprep.subr.mxu0 0.0
  %2369 = vmatpush1.msra.mxu0 0.0
  %2370 = vmatprep.subr.mxu0 0.0
  %2371 = vmatpush1.msra.mxu0 0.0
  %2372 = vmatprep.subr.mxu0 0.0
  %2373 = vmatpush1.msra.mxu0 0.0
  %2374 = vmatprep.subr.mxu0 0.0
  %2375 = vmatpush1.msra.mxu0 0.0
  %2376 = vmatprep.subr.mxu0 0.0
  %2377 = vmatpush1.msra.mxu0 0.0
  %2378 = vmatprep.subr.mxu0 0.0
  %2379 = vmatpush1.msra.mxu0 0.0
  %2380 = vmatprep.subr.mxu0 0.0
  %2381 = vmatpush1.msra.mxu0 0.0
  %2382 = vmatprep.subr.mxu0 0.0
  %2383 = vmatpush1.msra.mxu0 0.0
  %2384 = vmatprep.subr.mxu0 0.0
  %2385 = vmatpush1.msra.mxu0 0.0
  %2386 = vmatprep.subr.mxu0 0.0
  %2387 = vmatpush1.msra.mxu0 0.0
  %2388 = vmatprep.subr.mxu0 0.0
  %2389 = vmatpush1.msra.mxu0 0.0
  %2390 = vmatprep.subr.mxu0 0.0
  %2391 = vmatpush1.msra.mxu0 0.0
  %2392 = vmatprep.subr.mxu0 0.0
  %2393 = vmatpush1.msra.mxu0 0.0
  %2394 = vmatprep.subr.mxu0 0.0
  %2395 = vmatpush1.msra.mxu0 0.0
  %2396 = vmatprep.subr.mxu0 0.0
  %2397 = vmatpush1.msra.mxu0 0.0
  %2398 = vmatprep.subr.mxu0 0.0
  %2399 = vmatpush1.msra.mxu0 0.0
  %2400 = vmatprep.subr.mxu0 0.0
  %2401 = vmatpush1.msra.mxu0 0.0
  %2402 = vmatprep.mubr.f32.mxu0 0.0
  %2403 = vmatmul.mubr.f32.gmra.mrb[0].mxu0 %v2265
  %v2404 = vpop.f32.mrb[0].mxu0
  %v2405 = vadd.f32 0.0, %v2404
  %v2406 = vpop.f32.mrb[0].mxu0
  %v2407 = vadd.f32 0.0, %v2406
  %2408 = vdwg.mxu0
  %v2409 = vadd.f32 %v2244, %v2334
  %v2410 = vadd.f32 %v2245, %v2336
  %v2411 = vadd.f32 %v2246, %v2405
  %v2412 = vadd.f32 %v2247, %v2407
  %2413 = vrot.lane.b32.xlu0 %v1763, 1
  %v2414 = vpop.permute.xlu0 %2413
  %2415 = vrot.lane.b32.xlu0 %v1764, 1
  %v2416 = vpop.permute.xlu0 %2415
  %2417 = vrot.lane.b32.xlu0 %v1765, 1
  %v2418 = vpop.permute.xlu0 %2417
  %2419 = vrot.lane.b32.xlu0 %v1766, 1
  %v2420 = vpop.permute.xlu0 %2419
  %v2421 = vsel %vm791, %v2418, %v2420
  %v2422 = vsel %vm791, %v2416, %v2418
  %v2423 = vsel %vm791, %v2414, %v2416
  %v2424 = vsel %vm791, %v2420, %v2414
  %v2425 = vmul.f32 %v2424, %v799
  %v2426 = vmul.f32 %v2423, %v803
  %v2427 = vmul.f32 %v2422, %v807
  %v2428 = vmul.f32 %v2421, %v811
  %v2430 = vsel %vm1792, %v1770, 0
  %2432 = vmatprep.subr.mxu0 %v2426
  %2433 = vmatpush1.msra.mxu0 %v2425
  %2434 = vmatprep.subr.mxu0 0.0
  %2435 = vmatpush1.msra.mxu0 0.0
  %2436 = vmatprep.subr.mxu0 0.0
  %2437 = vmatpush1.msra.mxu0 0.0
  %2438 = vmatprep.subr.mxu0 0.0
  %2439 = vmatpush1.msra.mxu0 0.0
  %2440 = vmatprep.subr.mxu0 0.0
  %2441 = vmatpush1.msra.mxu0 0.0
  %2442 = vmatprep.subr.mxu0 0.0
  %2443 = vmatpush1.msra.mxu0 0.0
  %2444 = vmatprep.subr.mxu0 0.0
  %2445 = vmatpush1.msra.mxu0 0.0
  %2446 = vmatprep.subr.mxu0 0.0
  %2447 = vmatpush1.msra.mxu0 0.0
  %2448 = vmatprep.subr.mxu0 0.0
  %2449 = vmatpush1.msra.mxu0 0.0
  %2450 = vmatprep.subr.mxu0 0.0
  %2451 = vmatpush1.msra.mxu0 0.0
  %2452 = vmatprep.subr.mxu0 0.0
  %2453 = vmatpush1.msra.mxu0 0.0
  %2454 = vmatprep.subr.mxu0 0.0
  %2455 = vmatpush1.msra.mxu0 0.0
  %2456 = vmatprep.subr.mxu0 0.0
  %2457 = vmatpush1.msra.mxu0 0.0
  %2458 = vmatprep.subr.mxu0 0.0
  %2459 = vmatpush1.msra.mxu0 0.0
  %2460 = vmatprep.subr.mxu0 0.0
  %2461 = vmatpush1.msra.mxu0 0.0
  %2462 = vmatprep.subr.mxu0 0.0
  %2463 = vmatpush1.msra.mxu0 0.0
  %2464 = vmatprep.subr.mxu0 0.0
  %2465 = vmatpush1.msra.mxu0 0.0
  %2466 = vmatprep.subr.mxu0 0.0
  %2467 = vmatpush1.msra.mxu0 0.0
  %2468 = vmatprep.subr.mxu0 0.0
  %2469 = vmatpush1.msra.mxu0 0.0
  %2470 = vmatprep.subr.mxu0 0.0
  %2471 = vmatpush1.msra.mxu0 0.0
  %2472 = vmatprep.subr.mxu0 0.0
  %2473 = vmatpush1.msra.mxu0 0.0
  %2474 = vmatprep.subr.mxu0 0.0
  %2475 = vmatpush1.msra.mxu0 0.0
  %2476 = vmatprep.subr.mxu0 0.0
  %2477 = vmatpush1.msra.mxu0 0.0
  %2478 = vmatprep.subr.mxu0 0.0
  %2479 = vmatpush1.msra.mxu0 0.0
  %2480 = vmatprep.subr.mxu0 0.0
  %2481 = vmatpush1.msra.mxu0 0.0
  %2482 = vmatprep.subr.mxu0 0.0
  %2483 = vmatpush1.msra.mxu0 0.0
  %2484 = vmatprep.subr.mxu0 0.0
  %2485 = vmatpush1.msra.mxu0 0.0
  %2486 = vmatprep.subr.mxu0 0.0
  %2487 = vmatpush1.msra.mxu0 0.0
  %2488 = vmatprep.subr.mxu0 0.0
  %2489 = vmatpush1.msra.mxu0 0.0
  %2490 = vmatprep.subr.mxu0 0.0
  %2491 = vmatpush1.msra.mxu0 0.0
  %2492 = vmatprep.subr.mxu0 0.0
  %2493 = vmatpush1.msra.mxu0 0.0
  %2494 = vmatprep.subr.mxu0 0.0
  %2495 = vmatpush1.msra.mxu0 0.0
  %2496 = vmatprep.mubr.f32.mxu0 0.0
  %2497 = vmatmul.mubr.f32.gmra.mrb[0].mxu0 %v2430
  %v2498 = vpop.f32.mrb[0].mxu0
  %v2499 = vadd.f32 0.0, %v2498
  %v2500 = vpop.f32.mrb[0].mxu0
  %v2501 = vadd.f32 0.0, %v2500
  %2502 = vdwg.mxu0
  %2503 = vmatprep.subr.mxu0 %v2428
  %2504 = vmatpush1.msra.mxu0 %v2427
  %2505 = vmatprep.subr.mxu0 0.0
  %2506 = vmatpush1.msra.mxu0 0.0
  %2507 = vmatprep.subr.mxu0 0.0
  %2508 = vmatpush1.msra.mxu0 0.0
  %2509 = vmatprep.subr.mxu0 0.0
  %2510 = vmatpush1.msra.mxu0 0.0
  %2511 = vmatprep.subr.mxu0 0.0
  %2512 = vmatpush1.msra.mxu0 0.0
  %2513 = vmatprep.subr.mxu0 0.0
  %2514 = vmatpush1.msra.mxu0 0.0
  %2515 = vmatprep.subr.mxu0 0.0
  %2516 = vmatpush1.msra.mxu0 0.0
  %2517 = vmatprep.subr.mxu0 0.0
  %2518 = vmatpush1.msra.mxu0 0.0
  %2519 = vmatprep.subr.mxu0 0.0
  %2520 = vmatpush1.msra.mxu0 0.0
  %2521 = vmatprep.subr.mxu0 0.0
  %2522 = vmatpush1.msra.mxu0 0.0
  %2523 = vmatprep.subr.mxu0 0.0
  %2524 = vmatpush1.msra.mxu0 0.0
  %2525 = vmatprep.subr.mxu0 0.0
  %2526 = vmatpush1.msra.mxu0 0.0
  %2527 = vmatprep.subr.mxu0 0.0
  %2528 = vmatpush1.msra.mxu0 0.0
  %2529 = vmatprep.subr.mxu0 0.0
  %2530 = vmatpush1.msra.mxu0 0.0
  %2531 = vmatprep.subr.mxu0 0.0
  %2532 = vmatpush1.msra.mxu0 0.0
  %2533 = vmatprep.subr.mxu0 0.0
  %2534 = vmatpush1.msra.mxu0 0.0
  %2535 = vmatprep.subr.mxu0 0.0
  %2536 = vmatpush1.msra.mxu0 0.0
  %2537 = vmatprep.subr.mxu0 0.0
  %2538 = vmatpush1.msra.mxu0 0.0
  %2539 = vmatprep.subr.mxu0 0.0
  %2540 = vmatpush1.msra.mxu0 0.0
  %2541 = vmatprep.subr.mxu0 0.0
  %2542 = vmatpush1.msra.mxu0 0.0
  %2543 = vmatprep.subr.mxu0 0.0
  %2544 = vmatpush1.msra.mxu0 0.0
  %2545 = vmatprep.subr.mxu0 0.0
  %2546 = vmatpush1.msra.mxu0 0.0
  %2547 = vmatprep.subr.mxu0 0.0
  %2548 = vmatpush1.msra.mxu0 0.0
  %2549 = vmatprep.subr.mxu0 0.0
  %2550 = vmatpush1.msra.mxu0 0.0
  %2551 = vmatprep.subr.mxu0 0.0
  %2552 = vmatpush1.msra.mxu0 0.0
  %2553 = vmatprep.subr.mxu0 0.0
  %2554 = vmatpush1.msra.mxu0 0.0
  %2555 = vmatprep.subr.mxu0 0.0
  %2556 = vmatpush1.msra.mxu0 0.0
  %2557 = vmatprep.subr.mxu0 0.0
  %2558 = vmatpush1.msra.mxu0 0.0
  %2559 = vmatprep.subr.mxu0 0.0
  %2560 = vmatpush1.msra.mxu0 0.0
  %2561 = vmatprep.subr.mxu0 0.0
  %2562 = vmatpush1.msra.mxu0 0.0
  %2563 = vmatprep.subr.mxu0 0.0
  %2564 = vmatpush1.msra.mxu0 0.0
  %2565 = vmatprep.subr.mxu0 0.0
  %2566 = vmatpush1.msra.mxu0 0.0
  %2567 = vmatprep.mubr.f32.mxu0 0.0
  %2568 = vmatmul.mubr.f32.gmra.mrb[0].mxu0 %v2430
  %v2569 = vpop.f32.mrb[0].mxu0
  %v2570 = vadd.f32 0.0, %v2569
  %v2571 = vpop.f32.mrb[0].mxu0
  %v2572 = vadd.f32 0.0, %v2571
  %2573 = vdwg.mxu0
  %v2574 = vadd.f32 %v2409, %v2499
  %v2575 = vadd.f32 %v2410, %v2501
  %v2576 = vadd.f32 %v2411, %v2570
  %v2577 = vadd.f32 %v2412, %v2572
  %2578 = vrot.lane.b32.xlu0 %v1763, 127
  %v2579 = vpop.permute.xlu0 %2578
  %2580 = vrot.lane.b32.xlu0 %v1764, 127
  %v2581 = vpop.permute.xlu0 %2580
  %2582 = vrot.lane.b32.xlu0 %v1765, 127
  %v2583 = vpop.permute.xlu0 %2582
  %2584 = vrot.lane.b32.xlu0 %v1766, 127
  %v2585 = vpop.permute.xlu0 %2584
  %v2586 = vsel %vm985, %v2583, %v2585
  %v2587 = vsel %vm985, %v2581, %v2583
  %v2588 = vsel %vm985, %v2579, %v2581
  %v2589 = vsel %vm985, %v2585, %v2579
  %v2590 = vmul.f32 %v2588, %v993
  %v2591 = vmul.f32 %v2587, %v997
  %v2592 = vmul.f32 %v2586, %v1001
  %v2593 = vmul.f32 %v2589, %v1005
  %v2595 = vsel %vm1792, %v1772, 0
  %2597 = vmatprep.subr.mxu0 %v2591
  %2598 = vmatpush1.msra.mxu0 %v2590
  %2599 = vmatprep.subr.mxu0 0.0
  %2600 = vmatpush1.msra.mxu0 0.0
  %2601 = vmatprep.subr.mxu0 0.0
  %2602 = vmatpush1.msra.mxu0 0.0
  %2603 = vmatprep.subr.mxu0 0.0
  %2604 = vmatpush1.msra.mxu0 0.0
  %2605 = vmatprep.subr.mxu0 0.0
  %2606 = vmatpush1.msra.mxu0 0.0
  %2607 = vmatprep.subr.mxu0 0.0
  %2608 = vmatpush1.msra.mxu0 0.0
  %2609 = vmatprep.subr.mxu0 0.0
  %2610 = vmatpush1.msra.mxu0 0.0
  %2611 = vmatprep.subr.mxu0 0.0
  %2612 = vmatpush1.msra.mxu0 0.0
  %2613 = vmatprep.subr.mxu0 0.0
  %2614 = vmatpush1.msra.mxu0 0.0
  %2615 = vmatprep.subr.mxu0 0.0
  %2616 = vmatpush1.msra.mxu0 0.0
  %2617 = vmatprep.subr.mxu0 0.0
  %2618 = vmatpush1.msra.mxu0 0.0
  %2619 = vmatprep.subr.mxu0 0.0
  %2620 = vmatpush1.msra.mxu0 0.0
  %2621 = vmatprep.subr.mxu0 0.0
  %2622 = vmatpush1.msra.mxu0 0.0
  %2623 = vmatprep.subr.mxu0 0.0
  %2624 = vmatpush1.msra.mxu0 0.0
  %2625 = vmatprep.subr.mxu0 0.0
  %2626 = vmatpush1.msra.mxu0 0.0
  %2627 = vmatprep.subr.mxu0 0.0
  %2628 = vmatpush1.msra.mxu0 0.0
  %2629 = vmatprep.subr.mxu0 0.0
  %2630 = vmatpush1.msra.mxu0 0.0
  %2631 = vmatprep.subr.mxu0 0.0
  %2632 = vmatpush1.msra.mxu0 0.0
  %2633 = vmatprep.subr.mxu0 0.0
  %2634 = vmatpush1.msra.mxu0 0.0
  %2635 = vmatprep.subr.mxu0 0.0
  %2636 = vmatpush1.msra.mxu0 0.0
  %2637 = vmatprep.subr.mxu0 0.0
  %2638 = vmatpush1.msra.mxu0 0.0
  %2639 = vmatprep.subr.mxu0 0.0
  %2640 = vmatpush1.msra.mxu0 0.0
  %2641 = vmatprep.subr.mxu0 0.0
  %2642 = vmatpush1.msra.mxu0 0.0
  %2643 = vmatprep.subr.mxu0 0.0
  %2644 = vmatpush1.msra.mxu0 0.0
  %2645 = vmatprep.subr.mxu0 0.0
  %2646 = vmatpush1.msra.mxu0 0.0
  %2647 = vmatprep.subr.mxu0 0.0
  %2648 = vmatpush1.msra.mxu0 0.0
  %2649 = vmatprep.subr.mxu0 0.0
  %2650 = vmatpush1.msra.mxu0 0.0
  %2651 = vmatprep.subr.mxu0 0.0
  %2652 = vmatpush1.msra.mxu0 0.0
  %2653 = vmatprep.subr.mxu0 0.0
  %2654 = vmatpush1.msra.mxu0 0.0
  %2655 = vmatprep.subr.mxu0 0.0
  %2656 = vmatpush1.msra.mxu0 0.0
  %2657 = vmatprep.subr.mxu0 0.0
  %2658 = vmatpush1.msra.mxu0 0.0
  %2659 = vmatprep.subr.mxu0 0.0
  %2660 = vmatpush1.msra.mxu0 0.0
  %2661 = vmatprep.mubr.f32.mxu0 0.0
  %2662 = vmatmul.mubr.f32.gmra.mrb[0].mxu0 %v2595
  %v2663 = vpop.f32.mrb[0].mxu0
  %v2664 = vadd.f32 0.0, %v2663
  %v2665 = vpop.f32.mrb[0].mxu0
  %v2666 = vadd.f32 0.0, %v2665
  %2667 = vdwg.mxu0
  %2668 = vmatprep.subr.mxu0 %v2593
  %2669 = vmatpush1.msra.mxu0 %v2592
  %2670 = vmatprep.subr.mxu0 0.0
  %2671 = vmatpush1.msra.mxu0 0.0
  %2672 = vmatprep.subr.mxu0 0.0
  %2673 = vmatpush1.msra.mxu0 0.0
  %2674 = vmatprep.subr.mxu0 0.0
  %2675 = vmatpush1.msra.mxu0 0.0
  %2676 = vmatprep.subr.mxu0 0.0
  %2677 = vmatpush1.msra.mxu0 0.0
  %2678 = vmatprep.subr.mxu0 0.0
  %2679 = vmatpush1.msra.mxu0 0.0
  %2680 = vmatprep.subr.mxu0 0.0
  %2681 = vmatpush1.msra.mxu0 0.0
  %2682 = vmatprep.subr.mxu0 0.0
  %2683 = vmatpush1.msra.mxu0 0.0
  %2684 = vmatprep.subr.mxu0 0.0
  %2685 = vmatpush1.msra.mxu0 0.0
  %2686 = vmatprep.subr.mxu0 0.0
  %2687 = vmatpush1.msra.mxu0 0.0
  %2688 = vmatprep.subr.mxu0 0.0
  %2689 = vmatpush1.msra.mxu0 0.0
  %2690 = vmatprep.subr.mxu0 0.0
  %2691 = vmatpush1.msra.mxu0 0.0
  %2692 = vmatprep.subr.mxu0 0.0
  %2693 = vmatpush1.msra.mxu0 0.0
  %2694 = vmatprep.subr.mxu0 0.0
  %2695 = vmatpush1.msra.mxu0 0.0
  %2696 = vmatprep.subr.mxu0 0.0
  %2697 = vmatpush1.msra.mxu0 0.0
  %2698 = vmatprep.subr.mxu0 0.0
  %2699 = vmatpush1.msra.mxu0 0.0
  %2700 = vmatprep.subr.mxu0 0.0
  %2701 = vmatpush1.msra.mxu0 0.0
  %2702 = vmatprep.subr.mxu0 0.0
  %2703 = vmatpush1.msra.mxu0 0.0
  %2704 = vmatprep.subr.mxu0 0.0
  %2705 = vmatpush1.msra.mxu0 0.0
  %2706 = vmatprep.subr.mxu0 0.0
  %2707 = vmatpush1.msra.mxu0 0.0
  %2708 = vmatprep.subr.mxu0 0.0
  %2709 = vmatpush1.msra.mxu0 0.0
  %2710 = vmatprep.subr.mxu0 0.0
  %2711 = vmatpush1.msra.mxu0 0.0
  %2712 = vmatprep.subr.mxu0 0.0
  %2713 = vmatpush1.msra.mxu0 0.0
  %2714 = vmatprep.subr.mxu0 0.0
  %2715 = vmatpush1.msra.mxu0 0.0
  %2716 = vmatprep.subr.mxu0 0.0
  %2717 = vmatpush1.msra.mxu0 0.0
  %2718 = vmatprep.subr.mxu0 0.0
  %2719 = vmatpush1.msra.mxu0 0.0
  %2720 = vmatprep.subr.mxu0 0.0
  %2721 = vmatpush1.msra.mxu0 0.0
  %2722 = vmatprep.subr.mxu0 0.0
  %2723 = vmatpush1.msra.mxu0 0.0
  %2724 = vmatprep.subr.mxu0 0.0
  %2725 = vmatpush1.msra.mxu0 0.0
  %2726 = vmatprep.subr.mxu0 0.0
  %2727 = vmatpush1.msra.mxu0 0.0
  %2728 = vmatprep.subr.mxu0 0.0
  %2729 = vmatpush1.msra.mxu0 0.0
  %2730 = vmatprep.subr.mxu0 0.0
  %2731 = vmatpush1.msra.mxu0 0.0
  %2732 = vmatprep.mubr.f32.mxu0 0.0
  %2733 = vmatmul.mubr.f32.gmra.mrb[0].mxu0 %v2595
  %v2734 = vpop.f32.mrb[0].mxu0
  %v2735 = vadd.f32 0.0, %v2734
  %v2736 = vpop.f32.mrb[0].mxu0
  %v2737 = vadd.f32 0.0, %v2736
  %2738 = vdwg.mxu0
  %v2739 = vadd.f32 %v2574, %v2664
  %v2740 = vadd.f32 %v2575, %v2666
  %v2741 = vadd.f32 %v2576, %v2735
  %v2742 = vadd.f32 %v2577, %v2737
  %2743 = vrot.lane.b32.xlu0 %v1763, 113
  %v2744 = vpop.permute.xlu0 %2743
  %2745 = vrot.lane.b32.xlu0 %v1764, 113
  %v2746 = vpop.permute.xlu0 %2745
  %2747 = vrot.lane.b32.xlu0 %v1765, 113
  %v2748 = vpop.permute.xlu0 %2747
  %2749 = vrot.lane.b32.xlu0 %v1766, 113
  %v2750 = vpop.permute.xlu0 %2749
  %v2751 = vsel %vm1179, %v2748, %v2750
  %v2752 = vsel %vm1179, %v2746, %v2748
  %v2753 = vsel %vm1179, %v2744, %v2746
  %v2754 = vsel %vm1179, %v2750, %v2744
  %v2755 = vmul.f32 %v2753, %v1187
  %v2756 = vmul.f32 %v2752, %v1191
  %v2757 = vmul.f32 %v2751, %v1195
  %v2758 = vmul.f32 %v2754, %v1199
  %v2760 = vsel %vm1792, %v1773, 0
  %2762 = vmatprep.subr.mxu0 %v2756
  %2763 = vmatpush1.msra.mxu0 %v2755
  %2764 = vmatprep.subr.mxu0 0.0
  %2765 = vmatpush1.msra.mxu0 0.0
  %2766 = vmatprep.subr.mxu0 0.0
  %2767 = vmatpush1.msra.mxu0 0.0
  %2768 = vmatprep.subr.mxu0 0.0
  %2769 = vmatpush1.msra.mxu0 0.0
  %2770 = vmatprep.subr.mxu0 0.0
  %2771 = vmatpush1.msra.mxu0 0.0
  %2772 = vmatprep.subr.mxu0 0.0
  %2773 = vmatpush1.msra.mxu0 0.0
  %2774 = vmatprep.subr.mxu0 0.0
  %2775 = vmatpush1.msra.mxu0 0.0
  %2776 = vmatprep.subr.mxu0 0.0
  %2777 = vmatpush1.msra.mxu0 0.0
  %2778 = vmatprep.subr.mxu0 0.0
  %2779 = vmatpush1.msra.mxu0 0.0
  %2780 = vmatprep.subr.mxu0 0.0
  %2781 = vmatpush1.msra.mxu0 0.0
  %2782 = vmatprep.subr.mxu0 0.0
  %2783 = vmatpush1.msra.mxu0 0.0
  %2784 = vmatprep.subr.mxu0 0.0
  %2785 = vmatpush1.msra.mxu0 0.0
  %2786 = vmatprep.subr.mxu0 0.0
  %2787 = vmatpush1.msra.mxu0 0.0
  %2788 = vmatprep.subr.mxu0 0.0
  %2789 = vmatpush1.msra.mxu0 0.0
  %2790 = vmatprep.subr.mxu0 0.0
  %2791 = vmatpush1.msra.mxu0 0.0
  %2792 = vmatprep.subr.mxu0 0.0
  %2793 = vmatpush1.msra.mxu0 0.0
  %2794 = vmatprep.subr.mxu0 0.0
  %2795 = vmatpush1.msra.mxu0 0.0
  %2796 = vmatprep.subr.mxu0 0.0
  %2797 = vmatpush1.msra.mxu0 0.0
  %2798 = vmatprep.subr.mxu0 0.0
  %2799 = vmatpush1.msra.mxu0 0.0
  %2800 = vmatprep.subr.mxu0 0.0
  %2801 = vmatpush1.msra.mxu0 0.0
  %2802 = vmatprep.subr.mxu0 0.0
  %2803 = vmatpush1.msra.mxu0 0.0
  %2804 = vmatprep.subr.mxu0 0.0
  %2805 = vmatpush1.msra.mxu0 0.0
  %2806 = vmatprep.subr.mxu0 0.0
  %2807 = vmatpush1.msra.mxu0 0.0
  %2808 = vmatprep.subr.mxu0 0.0
  %2809 = vmatpush1.msra.mxu0 0.0
  %2810 = vmatprep.subr.mxu0 0.0
  %2811 = vmatpush1.msra.mxu0 0.0
  %2812 = vmatprep.subr.mxu0 0.0
  %2813 = vmatpush1.msra.mxu0 0.0
  %2814 = vmatprep.subr.mxu0 0.0
  %2815 = vmatpush1.msra.mxu0 0.0
  %2816 = vmatprep.subr.mxu0 0.0
  %2817 = vmatpush1.msra.mxu0 0.0
  %2818 = vmatprep.subr.mxu0 0.0
  %2819 = vmatpush1.msra.mxu0 0.0
  %2820 = vmatprep.subr.mxu0 0.0
  %2821 = vmatpush1.msra.mxu0 0.0
  %2822 = vmatprep.subr.mxu0 0.0
  %2823 = vmatpush1.msra.mxu0 0.0
  %2824 = vmatprep.subr.mxu0 0.0
  %2825 = vmatpush1.msra.mxu0 0.0
  %2826 = vmatprep.mubr.f32.mxu0 0.0
  %2827 = vmatmul.mubr.f32.gmra.mrb[0].mxu0 %v2760
  %v2828 = vpop.f32.mrb[0].mxu0
  %v2829 = vadd.f32 0.0, %v2828
  %v2830 = vpop.f32.mrb[0].mxu0
  %v2831 = vadd.f32 0.0, %v2830
  %2832 = vdwg.mxu0
  %2833 = vmatprep.subr.mxu0 %v2758
  %2834 = vmatpush1.msra.mxu0 %v2757
  %2835 = vmatprep.subr.mxu0 0.0
  %2836 = vmatpush1.msra.mxu0 0.0
  %2837 = vmatprep.subr.mxu0 0.0
  %2838 = vmatpush1.msra.mxu0 0.0
  %2839 = vmatprep.subr.mxu0 0.0
  %2840 = vmatpush1.msra.mxu0 0.0
  %2841 = vmatprep.subr.mxu0 0.0
  %2842 = vmatpush1.msra.mxu0 0.0
  %2843 = vmatprep.subr.mxu0 0.0
  %2844 = vmatpush1.msra.mxu0 0.0
  %2845 = vmatprep.subr.mxu0 0.0
  %2846 = vmatpush1.msra.mxu0 0.0
  %2847 = vmatprep.subr.mxu0 0.0
  %2848 = vmatpush1.msra.mxu0 0.0
  %2849 = vmatprep.subr.mxu0 0.0
  %2850 = vmatpush1.msra.mxu0 0.0
  %2851 = vmatprep.subr.mxu0 0.0
  %2852 = vmatpush1.msra.mxu0 0.0
  %2853 = vmatprep.subr.mxu0 0.0
  %2854 = vmatpush1.msra.mxu0 0.0
  %2855 = vmatprep.subr.mxu0 0.0
  %2856 = vmatpush1.msra.mxu0 0.0
  %2857 = vmatprep.subr.mxu0 0.0
  %2858 = vmatpush1.msra.mxu0 0.0
  %2859 = vmatprep.subr.mxu0 0.0
  %2860 = vmatpush1.msra.mxu0 0.0
  %2861 = vmatprep.subr.mxu0 0.0
  %2862 = vmatpush1.msra.mxu0 0.0
  %2863 = vmatprep.subr.mxu0 0.0
  %2864 = vmatpush1.msra.mxu0 0.0
  %2865 = vmatprep.subr.mxu0 0.0
  %2866 = vmatpush1.msra.mxu0 0.0
  %2867 = vmatprep.subr.mxu0 0.0
  %2868 = vmatpush1.msra.mxu0 0.0
  %2869 = vmatprep.subr.mxu0 0.0
  %2870 = vmatpush1.msra.mxu0 0.0
  %2871 = vmatprep.subr.mxu0 0.0
  %2872 = vmatpush1.msra.mxu0 0.0
  %2873 = vmatprep.subr.mxu0 0.0
  %2874 = vmatpush1.msra.mxu0 0.0
  %2875 = vmatprep.subr.mxu0 0.0
  %2876 = vmatpush1.msra.mxu0 0.0
  %2877 = vmatprep.subr.mxu0 0.0
  %2878 = vmatpush1.msra.mxu0 0.0
  %2879 = vmatprep.subr.mxu0 0.0
  %2880 = vmatpush1.msra.mxu0 0.0
  %2881 = vmatprep.subr.mxu0 0.0
  %2882 = vmatpush1.msra.mxu0 0.0
  %2883 = vmatprep.subr.mxu0 0.0
  %2884 = vmatpush1.msra.mxu0 0.0
  %2885 = vmatprep.subr.mxu0 0.0
  %2886 = vmatpush1.msra.mxu0 0.0
  %2887 = vmatprep.subr.mxu0 0.0
  %2888 = vmatpush1.msra.mxu0 0.0
  %2889 = vmatprep.subr.mxu0 0.0
  %2890 = vmatpush1.msra.mxu0 0.0
  %2891 = vmatprep.subr.mxu0 0.0
  %2892 = vmatpush1.msra.mxu0 0.0
  %2893 = vmatprep.subr.mxu0 0.0
  %2894 = vmatpush1.msra.mxu0 0.0
  %2895 = vmatprep.subr.mxu0 0.0
  %2896 = vmatpush1.msra.mxu0 0.0
  %2897 = vmatprep.mubr.f32.mxu0 0.0
  %2898 = vmatmul.mubr.f32.gmra.mrb[0].mxu0 %v2760
  %v2899 = vpop.f32.mrb[0].mxu0
  %v2900 = vadd.f32 0.0, %v2899
  %v2901 = vpop.f32.mrb[0].mxu0
  %v2902 = vadd.f32 0.0, %v2901
  %2903 = vdwg.mxu0
  %v2904 = vadd.f32 %v2739, %v2829
  %v2905 = vadd.f32 %v2740, %v2831
  %v2906 = vadd.f32 %v2741, %v2900
  %v2907 = vadd.f32 %v2742, %v2902
  %2908 = vrot.lane.b32.xlu0 %v1763, 112
  %v2909 = vpop.permute.xlu0 %2908
  %2910 = vrot.lane.b32.xlu0 %v1764, 112
  %v2911 = vpop.permute.xlu0 %2910
  %2912 = vrot.lane.b32.xlu0 %v1765, 112
  %v2913 = vpop.permute.xlu0 %2912
  %2914 = vrot.lane.b32.xlu0 %v1766, 112
  %v2915 = vpop.permute.xlu0 %2914
  %v2916 = vsel %vm1373, %v2913, %v2915
  %v2917 = vsel %vm1373, %v2911, %v2913
  %v2918 = vsel %vm1373, %v2909, %v2911
  %v2919 = vsel %vm1373, %v2915, %v2909
  %v2920 = vmul.f32 %v2918, %v1381
  %v2921 = vmul.f32 %v2917, %v1385
  %v2922 = vmul.f32 %v2916, %v1389
  %v2923 = vmul.f32 %v2919, %v1393
  %v2925 = vsel %vm1792, %v1774, 0
  %2927 = vmatprep.subr.mxu0 %v2921
  %2928 = vmatpush1.msra.mxu0 %v2920
  %2929 = vmatprep.subr.mxu0 0.0
  %2930 = vmatpush1.msra.mxu0 0.0
  %2931 = vmatprep.subr.mxu0 0.0
  %2932 = vmatpush1.msra.mxu0 0.0
  %2933 = vmatprep.subr.mxu0 0.0
  %2934 = vmatpush1.msra.mxu0 0.0
  %2935 = vmatprep.subr.mxu0 0.0
  %2936 = vmatpush1.msra.mxu0 0.0
  %2937 = vmatprep.subr.mxu0 0.0
  %2938 = vmatpush1.msra.mxu0 0.0
  %2939 = vmatprep.subr.mxu0 0.0
  %2940 = vmatpush1.msra.mxu0 0.0
  %2941 = vmatprep.subr.mxu0 0.0
  %2942 = vmatpush1.msra.mxu0 0.0
  %2943 = vmatprep.subr.mxu0 0.0
  %2944 = vmatpush1.msra.mxu0 0.0
  %2945 = vmatprep.subr.mxu0 0.0
  %2946 = vmatpush1.msra.mxu0 0.0
  %2947 = vmatprep.subr.mxu0 0.0
  %2948 = vmatpush1.msra.mxu0 0.0
  %2949 = vmatprep.subr.mxu0 0.0
  %2950 = vmatpush1.msra.mxu0 0.0
  %2951 = vmatprep.subr.mxu0 0.0
  %2952 = vmatpush1.msra.mxu0 0.0
  %2953 = vmatprep.subr.mxu0 0.0
  %2954 = vmatpush1.msra.mxu0 0.0
  %2955 = vmatprep.subr.mxu0 0.0
  %2956 = vmatpush1.msra.mxu0 0.0
  %2957 = vmatprep.subr.mxu0 0.0
  %2958 = vmatpush1.msra.mxu0 0.0
  %2959 = vmatprep.subr.mxu0 0.0
  %2960 = vmatpush1.msra.mxu0 0.0
  %2961 = vmatprep.subr.mxu0 0.0
  %2962 = vmatpush1.msra.mxu0 0.0
  %2963 = vmatprep.subr.mxu0 0.0
  %2964 = vmatpush1.msra.mxu0 0.0
  %2965 = vmatprep.subr.mxu0 0.0
  %2966 = vmatpush1.msra.mxu0 0.0
  %2967 = vmatprep.subr.mxu0 0.0
  %2968 = vmatpush1.msra.mxu0 0.0
  %2969 = vmatprep.subr.mxu0 0.0
  %2970 = vmatpush1.msra.mxu0 0.0
  %2971 = vmatprep.subr.mxu0 0.0
  %2972 = vmatpush1.msra.mxu0 0.0
  %2973 = vmatprep.subr.mxu0 0.0
  %2974 = vmatpush1.msra.mxu0 0.0
  %2975 = vmatprep.subr.mxu0 0.0
  %2976 = vmatpush1.msra.mxu0 0.0
  %2977 = vmatprep.subr.mxu0 0.0
  %2978 = vmatpush1.msra.mxu0 0.0
  %2979 = vmatprep.subr.mxu0 0.0
  %2980 = vmatpush1.msra.mxu0 0.0
  %2981 = vmatprep.subr.mxu0 0.0
  %2982 = vmatpush1.msra.mxu0 0.0
  %2983 = vmatprep.subr.mxu0 0.0
  %2984 = vmatpush1.msra.mxu0 0.0
  %2985 = vmatprep.subr.mxu0 0.0
  %2986 = vmatpush1.msra.mxu0 0.0
  %2987 = vmatprep.subr.mxu0 0.0
  %2988 = vmatpush1.msra.mxu0 0.0
  %2989 = vmatprep.subr.mxu0 0.0
  %2990 = vmatpush1.msra.mxu0 0.0
  %2991 = vmatprep.mubr.f32.mxu0 0.0
  %2992 = vmatmul.mubr.f32.gmra.mrb[0].mxu0 %v2925
  %v2993 = vpop.f32.mrb[0].mxu0
  %v2994 = vadd.f32 0.0, %v2993
  %v2995 = vpop.f32.mrb[0].mxu0
  %v2996 = vadd.f32 0.0, %v2995
  %2997 = vdwg.mxu0
  %2998 = vmatprep.subr.mxu0 %v2923
  %2999 = vmatpush1.msra.mxu0 %v2922
  %3000 = vmatprep.subr.mxu0 0.0
  %3001 = vmatpush1.msra.mxu0 0.0
  %3002 = vmatprep.subr.mxu0 0.0
  %3003 = vmatpush1.msra.mxu0 0.0
  %3004 = vmatprep.subr.mxu0 0.0
  %3005 = vmatpush1.msra.mxu0 0.0
  %3006 = vmatprep.subr.mxu0 0.0
  %3007 = vmatpush1.msra.mxu0 0.0
  %3008 = vmatprep.subr.mxu0 0.0
  %3009 = vmatpush1.msra.mxu0 0.0
  %3010 = vmatprep.subr.mxu0 0.0
  %3011 = vmatpush1.msra.mxu0 0.0
  %3012 = vmatprep.subr.mxu0 0.0
  %3013 = vmatpush1.msra.mxu0 0.0
  %3014 = vmatprep.subr.mxu0 0.0
  %3015 = vmatpush1.msra.mxu0 0.0
  %3016 = vmatprep.subr.mxu0 0.0
  %3017 = vmatpush1.msra.mxu0 0.0
  %3018 = vmatprep.subr.mxu0 0.0
  %3019 = vmatpush1.msra.mxu0 0.0
  %3020 = vmatprep.subr.mxu0 0.0
  %3021 = vmatpush1.msra.mxu0 0.0
  %3022 = vmatprep.subr.mxu0 0.0
  %3023 = vmatpush1.msra.mxu0 0.0
  %3024 = vmatprep.subr.mxu0 0.0
  %3025 = vmatpush1.msra.mxu0 0.0
  %3026 = vmatprep.subr.mxu0 0.0
  %3027 = vmatpush1.msra.mxu0 0.0
  %3028 = vmatprep.subr.mxu0 0.0
  %3029 = vmatpush1.msra.mxu0 0.0
  %3030 = vmatprep.subr.mxu0 0.0
  %3031 = vmatpush1.msra.mxu0 0.0
  %3032 = vmatprep.subr.mxu0 0.0
  %3033 = vmatpush1.msra.mxu0 0.0
  %3034 = vmatprep.subr.mxu0 0.0
  %3035 = vmatpush1.msra.mxu0 0.0
  %3036 = vmatprep.subr.mxu0 0.0
  %3037 = vmatpush1.msra.mxu0 0.0
  %3038 = vmatprep.subr.mxu0 0.0
  %3039 = vmatpush1.msra.mxu0 0.0
  %3040 = vmatprep.subr.mxu0 0.0
  %3041 = vmatpush1.msra.mxu0 0.0
  %3042 = vmatprep.subr.mxu0 0.0
  %3043 = vmatpush1.msra.mxu0 0.0
  %3044 = vmatprep.subr.mxu0 0.0
  %3045 = vmatpush1.msra.mxu0 0.0
  %3046 = vmatprep.subr.mxu0 0.0
  %3047 = vmatpush1.msra.mxu0 0.0
  %3048 = vmatprep.subr.mxu0 0.0
  %3049 = vmatpush1.msra.mxu0 0.0
  %3050 = vmatprep.subr.mxu0 0.0
  %3051 = vmatpush1.msra.mxu0 0.0
  %3052 = vmatprep.subr.mxu0 0.0
  %3053 = vmatpush1.msra.mxu0 0.0
  %3054 = vmatprep.subr.mxu0 0.0
  %3055 = vmatpush1.msra.mxu0 0.0
  %3056 = vmatprep.subr.mxu0 0.0
  %3057 = vmatpush1.msra.mxu0 0.0
  %3058 = vmatprep.subr.mxu0 0.0
  %3059 = vmatpush1.msra.mxu0 0.0
  %3060 = vmatprep.subr.mxu0 0.0
  %3061 = vmatpush1.msra.mxu0 0.0
  %3062 = vmatprep.mubr.f32.mxu0 0.0
  %3063 = vmatmul.mubr.f32.gmra.mrb[0].mxu0 %v2925
  %v3064 = vpop.f32.mrb[0].mxu0
  %v3065 = vadd.f32 0.0, %v3064
  %v3066 = vpop.f32.mrb[0].mxu0
  %v3067 = vadd.f32 0.0, %v3066
  %3068 = vdwg.mxu0
  %v3069 = vadd.f32 %v2904, %v2994
  %v3070 = vadd.f32 %v2905, %v2996
  %v3071 = vadd.f32 %v2906, %v3065
  %v3072 = vadd.f32 %v2907, %v3067
  %3073 = vrot.lane.b32.xlu0 %v1763, 111
  %v3074 = vpop.permute.xlu0 %3073
  %3075 = vrot.lane.b32.xlu0 %v1764, 111
  %v3076 = vpop.permute.xlu0 %3075
  %3077 = vrot.lane.b32.xlu0 %v1765, 111
  %v3078 = vpop.permute.xlu0 %3077
  %3079 = vrot.lane.b32.xlu0 %v1766, 111
  %v3080 = vpop.permute.xlu0 %3079
  %v3081 = vsel %vm1567, %v3078, %v3080
  %v3082 = vsel %vm1567, %v3076, %v3078
  %v3083 = vsel %vm1567, %v3074, %v3076
  %v3084 = vsel %vm1567, %v3080, %v3074
  %v3085 = vmul.f32 %v3083, %v1575
  %v3086 = vmul.f32 %v3082, %v1579
  %v3087 = vmul.f32 %v3081, %v1583
  %v3088 = vmul.f32 %v3084, %v1587
  %v3090 = vsel %vm1792, %v1775, 0
  %3092 = vmatprep.subr.mxu0 %v3086
  %3093 = vmatpush1.msra.mxu0 %v3085
  %3094 = vmatprep.subr.mxu0 0.0
  %3095 = vmatpush1.msra.mxu0 0.0
  %3096 = vmatprep.subr.mxu0 0.0
  %3097 = vmatpush1.msra.mxu0 0.0
  %3098 = vmatprep.subr.mxu0 0.0
  %3099 = vmatpush1.msra.mxu0 0.0
  %3100 = vmatprep.subr.mxu0 0.0
  %3101 = vmatpush1.msra.mxu0 0.0
  %3102 = vmatprep.subr.mxu0 0.0
  %3103 = vmatpush1.msra.mxu0 0.0
  %3104 = vmatprep.subr.mxu0 0.0
  %3105 = vmatpush1.msra.mxu0 0.0
  %3106 = vmatprep.subr.mxu0 0.0
  %3107 = vmatpush1.msra.mxu0 0.0
  %3108 = vmatprep.subr.mxu0 0.0
  %3109 = vmatpush1.msra.mxu0 0.0
  %3110 = vmatprep.subr.mxu0 0.0
  %3111 = vmatpush1.msra.mxu0 0.0
  %3112 = vmatprep.subr.mxu0 0.0
  %3113 = vmatpush1.msra.mxu0 0.0
  %3114 = vmatprep.subr.mxu0 0.0
  %3115 = vmatpush1.msra.mxu0 0.0
  %3116 = vmatprep.subr.mxu0 0.0
  %3117 = vmatpush1.msra.mxu0 0.0
  %3118 = vmatprep.subr.mxu0 0.0
  %3119 = vmatpush1.msra.mxu0 0.0
  %3120 = vmatprep.subr.mxu0 0.0
  %3121 = vmatpush1.msra.mxu0 0.0
  %3122 = vmatprep.subr.mxu0 0.0
  %3123 = vmatpush1.msra.mxu0 0.0
  %3124 = vmatprep.subr.mxu0 0.0
  %3125 = vmatpush1.msra.mxu0 0.0
  %3126 = vmatprep.subr.mxu0 0.0
  %3127 = vmatpush1.msra.mxu0 0.0
  %3128 = vmatprep.subr.mxu0 0.0
  %3129 = vmatpush1.msra.mxu0 0.0
  %3130 = vmatprep.subr.mxu0 0.0
  %3131 = vmatpush1.msra.mxu0 0.0
  %3132 = vmatprep.subr.mxu0 0.0
  %3133 = vmatpush1.msra.mxu0 0.0
  %3134 = vmatprep.subr.mxu0 0.0
  %3135 = vmatpush1.msra.mxu0 0.0
  %3136 = vmatprep.subr.mxu0 0.0
  %3137 = vmatpush1.msra.mxu0 0.0
  %3138 = vmatprep.subr.mxu0 0.0
  %3139 = vmatpush1.msra.mxu0 0.0
  %3140 = vmatprep.subr.mxu0 0.0
  %3141 = vmatpush1.msra.mxu0 0.0
  %3142 = vmatprep.subr.mxu0 0.0
  %3143 = vmatpush1.msra.mxu0 0.0
  %3144 = vmatprep.subr.mxu0 0.0
  %3145 = vmatpush1.msra.mxu0 0.0
  %3146 = vmatprep.subr.mxu0 0.0
  %3147 = vmatpush1.msra.mxu0 0.0
  %3148 = vmatprep.subr.mxu0 0.0
  %3149 = vmatpush1.msra.mxu0 0.0
  %3150 = vmatprep.subr.mxu0 0.0
  %3151 = vmatpush1.msra.mxu0 0.0
  %3152 = vmatprep.subr.mxu0 0.0
  %3153 = vmatpush1.msra.mxu0 0.0
  %3154 = vmatprep.subr.mxu0 0.0
  %3155 = vmatpush1.msra.mxu0 0.0
  %3156 = vmatprep.mubr.f32.mxu0 0.0
  %3157 = vmatmul.mubr.f32.gmra.mrb[0].mxu0 %v3090
  %v3158 = vpop.f32.mrb[0].mxu0
  %v3159 = vadd.f32 0.0, %v3158
  %v3160 = vpop.f32.mrb[0].mxu0
  %v3161 = vadd.f32 0.0, %v3160
  %3162 = vdwg.mxu0
  %3163 = vmatprep.subr.mxu0 %v3088
  %3164 = vmatpush1.msra.mxu0 %v3087
  %3165 = vmatprep.subr.mxu0 0.0
  %3166 = vmatpush1.msra.mxu0 0.0
  %3167 = vmatprep.subr.mxu0 0.0
  %3168 = vmatpush1.msra.mxu0 0.0
  %3169 = vmatprep.subr.mxu0 0.0
  %3170 = vmatpush1.msra.mxu0 0.0
  %3171 = vmatprep.subr.mxu0 0.0
  %3172 = vmatpush1.msra.mxu0 0.0
  %3173 = vmatprep.subr.mxu0 0.0
  %3174 = vmatpush1.msra.mxu0 0.0
  %3175 = vmatprep.subr.mxu0 0.0
  %3176 = vmatpush1.msra.mxu0 0.0
  %3177 = vmatprep.subr.mxu0 0.0
  %3178 = vmatpush1.msra.mxu0 0.0
  %3179 = vmatprep.subr.mxu0 0.0
  %3180 = vmatpush1.msra.mxu0 0.0
  %3181 = vmatprep.subr.mxu0 0.0
  %3182 = vmatpush1.msra.mxu0 0.0
  %3183 = vmatprep.subr.mxu0 0.0
  %3184 = vmatpush1.msra.mxu0 0.0
  %3185 = vmatprep.subr.mxu0 0.0
  %3186 = vmatpush1.msra.mxu0 0.0
  %3187 = vmatprep.subr.mxu0 0.0
  %3188 = vmatpush1.msra.mxu0 0.0
  %3189 = vmatprep.subr.mxu0 0.0
  %3190 = vmatpush1.msra.mxu0 0.0
  %3191 = vmatprep.subr.mxu0 0.0
  %3192 = vmatpush1.msra.mxu0 0.0
  %3193 = vmatprep.subr.mxu0 0.0
  %3194 = vmatpush1.msra.mxu0 0.0
  %3195 = vmatprep.subr.mxu0 0.0
  %3196 = vmatpush1.msra.mxu0 0.0
  %3197 = vmatprep.subr.mxu0 0.0
  %3198 = vmatpush1.msra.mxu0 0.0
  %3199 = vmatprep.subr.mxu0 0.0
  %3200 = vmatpush1.msra.mxu0 0.0
  %3201 = vmatprep.subr.mxu0 0.0
  %3202 = vmatpush1.msra.mxu0 0.0
  %3203 = vmatprep.subr.mxu0 0.0
  %3204 = vmatpush1.msra.mxu0 0.0
  %3205 = vmatprep.subr.mxu0 0.0
  %3206 = vmatpush1.msra.mxu0 0.0
  %3207 = vmatprep.subr.mxu0 0.0
  %3208 = vmatpush1.msra.mxu0 0.0
  %3209 = vmatprep.subr.mxu0 0.0
  %3210 = vmatpush1.msra.mxu0 0.0
  %3211 = vmatprep.subr.mxu0 0.0
  %3212 = vmatpush1.msra.mxu0 0.0
  %3213 = vmatprep.subr.mxu0 0.0
  %3214 = vmatpush1.msra.mxu0 0.0
  %3215 = vmatprep.subr.mxu0 0.0
  %3216 = vmatpush1.msra.mxu0 0.0
  %3217 = vmatprep.subr.mxu0 0.0
  %3218 = vmatpush1.msra.mxu0 0.0
  %3219 = vmatprep.subr.mxu0 0.0
  %3220 = vmatpush1.msra.mxu0 0.0
  %3221 = vmatprep.subr.mxu0 0.0
  %3222 = vmatpush1.msra.mxu0 0.0
  %3223 = vmatprep.subr.mxu0 0.0
  %3224 = vmatpush1.msra.mxu0 0.0
  %3225 = vmatprep.subr.mxu0 0.0
  %3226 = vmatpush1.msra.mxu0 0.0
  %3227 = vmatprep.mubr.f32.mxu0 0.0
  %3228 = vmatmul.mubr.f32.gmra.mrb[0].mxu0 %v3090
  %v3229 = vpop.f32.mrb[0].mxu0
  %v3230 = vadd.f32 0.0, %v3229
  %v3231 = vpop.f32.mrb[0].mxu0
  %v3232 = vadd.f32 0.0, %v3231
  %3233 = vdwg.mxu0
  %v3234 = vadd.f32 %v3069, %v3159
  %v3235 = vadd.f32 %v3070, %v3161
  %v3236 = vadd.f32 %v3071, %v3230
  %v3237 = vadd.f32 %v3072, %v3232
  %v3238 = vld [vmem:[%s5] sm:$0xff]
  %3240 = vset.pattern.permute.xlu0 0
  %3241 = vperm.xlu0 %3240, %v3238
  %v3242 = vpop.permute.xlu0 %3241
  %v3244 = vadd.f32 %v3234, %v3242
  %v3245 = vadd.f32 %v3235, %v3242
  %v3246 = vadd.f32 %v3236, %v3242
  %v3247 = vadd.f32 %v3237, %v3242
  %v3248 = vmax.f32 %v3244, 0.0
  %v3249 = vmax.f32 %v3245, 0.0
  %v3250 = vmax.f32 %v3246, 0.0
  %v3251 = vmax.f32 %v3247, 0.0
  %3252 = vst [vmem:[%s6] sm:$0xff] %v3248
  %3253 = vst [vmem:[%s6 + $0x8] sm:$0xff] %v3249
  %3254 = vst [vmem:[%s6 + $0x10] sm:$0xff] %v3250
  %3255 = vst [vmem:[%s6 + $0x18] sm:$0xff] %v3251
  // Predicated region
  $region26: #{conv_block_forward.1} parent=0 // pred_check
    _
  $region27: #{conv_block_forward.1} parent=0 // pred_check_branch
    %3257 = sbr.rel (0) target = $region29
  $region28: #{conv_block_forward.1} parent=0 // pred_region
    _
  $region29: #{conv_block_forward.1} parent=0 // pred_fallthru
    _
  // Predicated region
  $region30: #{conv_block_forward.1} parent=0 // pred_check
    _
  $region31: #{conv_block_forward.1} parent=0 // pred_check_branch
    %3259 = sbr.rel (0) target = $region33
  $region32: #{conv_block_forward.1} parent=0 // pred_region
    _
  $region33: #{conv_block_forward.1} parent=0 // pred_fallthru
    _

</llo_original>
